<compile_context>
chip_gen: v7x
topology: tpu7x:2x2x1
jax: 0.10.0
libtpu: 0.0.40
codegen_flags: <defaults>
</compile_context>

<pallas_src>
import jax
import jax.numpy as jnp
from jax import lax
from jax.experimental import pallas as pl
from jax.experimental.pallas import tpu as pltpu

SOS_token = 1


def _gru_gates(gx, gh, h, H):
    """PyTorch nn.GRU cell gate math (gate order r, z, n); all f32."""
    r = jax.nn.sigmoid(gx[:, 0:H] + gh[:, 0:H])
    z = jax.nn.sigmoid(gx[:, H:2 * H] + gh[:, H:2 * H])
    n = jnp.tanh(gx[:, 2 * H:3 * H] + r * gh[:, 2 * H:3 * H])
    return (1.0 - z) * n + z * h


def make_greedy_kernel(T, H, V, max_len):
    def kernel(emb_in_ref, emb_ref,
               wih_fb_ref, bih_fb_ref,
               whh_f_ref, bhh_f_ref, whh_b_ref, bhh_b_ref,
               wdec_ref, bdec_ref, wc_ref, bc_ref, wo_ref, bo_ref,
               tokens_ref, scores_ref,
               enc_f_ref, enc_b_ref):
        f32 = jnp.float32
        bf16 = jnp.bfloat16

        # ----------------- Encoder: 1-layer bidirectional GRU -----------------
        # Hoist the input projection of BOTH directions out of the recurrence:
        # one (T, H) @ (H, 6H) matmul instead of 2T tiny matvecs.
        gx_all = jnp.dot(emb_in_ref[...], wih_fb_ref[...],
                         preferred_element_type=f32) + bih_fb_ref[...]      # (T, 6H)

        whh_f, bhh_f = whh_f_ref[...], bhh_f_ref[...]
        whh_b, bhh_b = whh_b_ref[...], bhh_b_ref[...]

        h_f = jnp.zeros((1, H), f32)
        h_b = jnp.zeros((1, H), f32)
        # Interleave the two independent recurrences (T is a small static bound).
        for t in range(T):
            tb = T - 1 - t
            gh_f = jnp.dot(h_f.astype(bf16), whh_f,
                           preferred_element_type=f32) + bhh_f
            gh_b = jnp.dot(h_b.astype(bf16), whh_b,
                           preferred_element_type=f32) + bhh_b
            h_f = _gru_gates(gx_all[t:t + 1, 0:3 * H], gh_f, h_f, H)
            h_b = _gru_gates(gx_all[tb:tb + 1, 3 * H:6 * H], gh_b, h_b, H)
            enc_f_ref[t:t + 1, :] = h_f          # direct row stores (vst slot)
            enc_b_ref[tb:tb + 1, :] = h_b

        # EncoderRNN sums the two directions: outputs[:,:,:H] + outputs[:,:,H:]
        enc = enc_f_ref[...] + enc_b_ref[...]                               # (T, H)

        # decoder_hidden = encoder_hidden[:n_layers] -> forward final hidden.
        h0 = h_f

        # Loop-invariant iota (hoisted: JAX does not CSE broadcast_in_dim).
        ids = lax.broadcasted_iota(jnp.int32, (1, V), 1)

        # ----------------- Greedy decode loop (fully in-kernel) ---------------
        def step(i, carry):
            h, tok = carry

            # Embedding gather of the previous token via one-hot matmul (MXU).
            onehot = (ids == tok).astype(bf16)                              # (1, V)
            x = jnp.dot(onehot, emb_ref[...], preferred_element_type=f32)   # (1, H)

            # Decoder GRU: single MXU matmul with block-diagonal [wih; whh],
            # producing [gx | gh] so the PyTorch n-gate semantics are exact.
            xh = jnp.concatenate([x, h], axis=1).astype(bf16)               # (1, 2H)
            g = jnp.dot(xh, wdec_ref[...],
                        preferred_element_type=f32) + bdec_ref[...]         # (1, 6H)
            h_new = _gru_gates(g[:, 0:3 * H], g[:, 3 * H:6 * H], h, H)       # (1, H)

            # Luong "dot" attention, lane-major on the MXU.
            energies = lax.dot_general(h_new, enc, (((1,), (1,)), ((), ())),
                                       preferred_element_type=f32)          # (1, T)
            e_max = jnp.max(energies, axis=-1, keepdims=True)
            e_exp = jnp.exp(energies - e_max)
            attn = e_exp / jnp.sum(e_exp, axis=-1, keepdims=True)            # (1, T)
            context = jnp.dot(attn, enc, preferred_element_type=f32)         # (1, H)

            # concat -> tanh -> output projection.
            cat = jnp.concatenate([h_new, context], axis=1).astype(bf16)     # (1, 2H)
            concat_out = jnp.tanh(
                jnp.dot(cat, wc_ref[...], preferred_element_type=f32)
                + bc_ref[...])                                               # (1, H)
            logits = jnp.dot(concat_out.astype(bf16), wo_ref[...],
                             preferred_element_type=f32) + bo_ref[...]       # (1, V)

            # Greedy max of softmax(logits) without normalizing the full vector:
            # argmax(softmax) == argmax(logits); max prob = 1 / sum(exp(l-lmax)).
            l_max = jnp.max(logits)
            new_tok = jnp.min(jnp.where(logits == l_max, ids, V)).astype(jnp.int32)
            denom = jnp.sum(jnp.exp(logits - l_max), axis=-1, keepdims=True)  # (1,1)
            score = jnp.max(pl.reciprocal(denom, approx=True))

            tokens_ref[i] = new_tok
            scores_ref[i] = score
            return h_new, new_tok

        tok0 = jnp.array(SOS_token, dtype=jnp.int32)
        lax.fori_loop(0, max_len, step, (h0, tok0))

    return kernel


def greedy_search_decode(input_seq, input_length, max_length, p):
    """Mirrors GreedySearchDecoder.forward(input_seq, input_length, max_length)."""
    # input_length unused: batch=1 with no padding -> pack_padded_sequence is id.
    del input_length
    T = input_seq.shape[0]
    V, H = p['embedding'].shape

    # One-time host-side gather of the encoder inputs (outside the hot loop).
    emb_in = jnp.take(p['embedding'], input_seq, axis=0)                    # (T, H)

    vmem = pl.BlockSpec(memory_space=pltpu.MemorySpace.VMEM)
    smem = pl.BlockSpec(memory_space=pltpu.MemorySpace.SMEM)

    tokens, scores = pl.pallas_call(
        make_greedy_kernel(T, H, V, max_length),
        out_shape=(jax.ShapeDtypeStruct((max_length,), jnp.int32),
                   jax.ShapeDtypeStruct((max_length,), jnp.float32)),
        in_specs=[vmem] * 14,
        out_specs=(smem, smem),
        scratch_shapes=[pltpu.VMEM((T, H), jnp.float32),   # fwd encoder outputs
                        pltpu.VMEM((T, H), jnp.float32)],  # bwd encoder outputs
    )(emb_in, p['embedding'],
      p['enc_wih_fb'], p['enc_bih_fb'],
      p['enc_whh_f'], p['enc_bhh_f'], p['enc_whh_b'], p['enc_bhh_b'],
      p['dec_w'], p['dec_b'],
      p['concat_w'], p['concat_b'], p['out_w'], p['out_b'])
    return tokens, scores


def init_params(key, V, H):
    ks = jax.random.split(key, 17)

    def w(k, shape, scale=0.1):
        return (scale * jax.random.normal(k, shape)).astype(jnp.float32)

    # Weights stored transposed as (in_features, out_features).
    emb = w(ks[0], (V, H))
    enc_wih_f, enc_whh_f = w(ks[1], (H, 3 * H)), w(ks[2], (H, 3 * H))
    enc_bih_f, enc_bhh_f = w(ks[3], (1, 3 * H)), w(ks[4], (1, 3 * H))
    enc_wih_b, enc_whh_b = w(ks[5], (H, 3 * H)), w(ks[6], (H, 3 * H))
    enc_bih_b, enc_bhh_b = w(ks[7], (1, 3 * H)), w(ks[8], (1, 3 * H))
    dec_wih, dec_whh = w(ks[9], (H, 3 * H)), w(ks[10], (H, 3 * H))
    dec_bih, dec_bhh = w(ks[11], (1, 3 * H)), w(ks[12], (1, 3 * H))
    concat_w, concat_b = w(ks[13], (2 * H, H)), w(ks[14], (1, H))
    out_w, out_b = w(ks[15], (H, V)), w(ks[16], (1, V))

    # Pre-stacked / fused layouts consumed by the kernel.
    wih_fb = jnp.concatenate([enc_wih_f, enc_wih_b], axis=1)                # (H, 6H)
    bih_fb = jnp.concatenate([enc_bih_f, enc_bih_b], axis=1)                # (1, 6H)
    dec_w = jnp.zeros((2 * H, 6 * H), jnp.float32)
    dec_w = dec_w.at[0:H, 0:3 * H].set(dec_wih)                             # block-
    dec_w = dec_w.at[H:2 * H, 3 * H:6 * H].set(dec_whh)                     # diagonal
    dec_b = jnp.concatenate([dec_bih, dec_bhh], axis=1)                     # (1, 6H)

    bf16 = jnp.bfloat16
    return {
        # bf16 matmul weights (f32 accumulation in-kernel)
        'embedding': emb.astype(bf16),
        'enc_wih_fb': wih_fb.astype(bf16),
        'enc_whh_f': enc_whh_f.astype(bf16),
        'enc_whh_b': enc_whh_b.astype(bf16),
        'dec_w': dec_w.astype(bf16),
        'concat_w': concat_w.astype(bf16),
        'out_w': out_w.astype(bf16),
        # f32 biases (added post-accumulation)
        'enc_bih_fb': bih_fb,
        'enc_bhh_f': enc_bhh_f,
        'enc_bhh_b': enc_bhh_b,
        'dec_b': dec_b,
        'concat_b': concat_b,
        'out_b': out_b,
    }


if __name__ == "__main__":
    # Small, lane-aligned sizes: H and V multiples of 128 so each GRU gate is a
    # whole number of vregs and no padding/masking is needed.
    V, H, T, MAX_LEN = 128, 128, 7, 10
    key = jax.random.PRNGKey(0)
    k_p, k_seq = jax.random.split(key)
    params = init_params(k_p, V, H)

    input_seq = jax.random.randint(k_seq, (T,), 0, V, dtype=jnp.int32)      # (7,)
    input_length = jnp.array([T], dtype=jnp.int32)                          # [7]

    tokens, scores = greedy_search_decode(input_seq, input_length, MAX_LEN, params)
    tokens, scores = jax.block_until_ready((tokens, scores))

    assert tokens.shape == (MAX_LEN,) and tokens.dtype == jnp.int32
    assert scores.shape == (MAX_LEN,) and scores.dtype == jnp.float32
    assert bool(jnp.all(tokens >= 0)) and bool(jnp.all(tokens < V))
    assert bool(jnp.all(scores > 0.0)) and bool(jnp.all(scores <= 1.0 + 1e-3))
    print("KERNEL_OK")
</pallas_src>

<mosaic_0001>
module attributes {stable_mosaic.version = 11 : i64} {
  func.func @kernel(%arg0: memref<7x128xbf16, #tpu.memory_space<vmem>>, %arg1: memref<128x128xbf16, #tpu.memory_space<vmem>>, %arg2: memref<128x768xbf16, #tpu.memory_space<vmem>>, %arg3: memref<1x768xf32, #tpu.memory_space<vmem>>, %arg4: memref<128x384xbf16, #tpu.memory_space<vmem>>, %arg5: memref<1x384xf32, #tpu.memory_space<vmem>>, %arg6: memref<128x384xbf16, #tpu.memory_space<vmem>>, %arg7: memref<1x384xf32, #tpu.memory_space<vmem>>, %arg8: memref<256x768xbf16, #tpu.memory_space<vmem>>, %arg9: memref<1x768xf32, #tpu.memory_space<vmem>>, %arg10: memref<256x128xbf16, #tpu.memory_space<vmem>>, %arg11: memref<1x128xf32, #tpu.memory_space<vmem>>, %arg12: memref<128x128xbf16, #tpu.memory_space<vmem>>, %arg13: memref<1x128xf32, #tpu.memory_space<vmem>>, %arg14: memref<10xi32, #tpu.memory_space<smem>>, %arg15: memref<10xf32, #tpu.memory_space<smem>>, %arg16: memref<7x128xf32, #tpu.memory_space<vmem>>, %arg17: memref<7x128xf32, #tpu.memory_space<vmem>>) attributes {dimension_semantics = [], scalar_prefetch = 0 : i64, scratch_operands = 2 : i64, tpu.core_type = #tpu.core_type<tc>} {
    %c0 = arith.constant 0 : index
    %c0_0 = arith.constant 0 : index
    %0 = vector.load %arg0[%c0, %c0_0] : memref<7x128xbf16, #tpu.memory_space<vmem>>, vector<7x128xbf16>
    %c0_1 = arith.constant 0 : index
    %c0_2 = arith.constant 0 : index
    %1 = vector.load %arg2[%c0_1, %c0_2] : memref<128x768xbf16, #tpu.memory_space<vmem>>, vector<128x768xbf16>
    %cst = arith.constant dense<0.000000e+00> : vector<7x768xf32>
    %2 = tpu.matmul %0, %1, %cst {dimension_numbers = #tpu.dot_dimension_numbers<[1], [0], [0], [1], [0, 0, 1, 1], [], []>} : vector<7x128xbf16>, vector<128x768xbf16>, vector<7x768xf32> -> vector<7x768xf32>
    %c0_3 = arith.constant 0 : index
    %c0_4 = arith.constant 0 : index
    %3 = vector.load %arg3[%c0_3, %c0_4] : memref<1x768xf32, #tpu.memory_space<vmem>>, vector<1x768xf32>
    %4 = vector.broadcast %3 : vector<1x768xf32> to vector<7x768xf32>
    %5 = arith.addf %2, %4 : vector<7x768xf32>
    %c0_5 = arith.constant 0 : index
    %c0_6 = arith.constant 0 : index
    %6 = vector.load %arg4[%c0_5, %c0_6] : memref<128x384xbf16, #tpu.memory_space<vmem>>, vector<128x384xbf16>
    %c0_7 = arith.constant 0 : index
    %c0_8 = arith.constant 0 : index
    %7 = vector.load %arg5[%c0_7, %c0_8] : memref<1x384xf32, #tpu.memory_space<vmem>>, vector<1x384xf32>
    %c0_9 = arith.constant 0 : index
    %c0_10 = arith.constant 0 : index
    %8 = vector.load %arg6[%c0_9, %c0_10] : memref<128x384xbf16, #tpu.memory_space<vmem>>, vector<128x384xbf16>
    %c0_11 = arith.constant 0 : index
    %c0_12 = arith.constant 0 : index
    %9 = vector.load %arg7[%c0_11, %c0_12] : memref<1x384xf32, #tpu.memory_space<vmem>>, vector<1x384xf32>
    %cst_13 = arith.constant 0.000000e+00 : f32
    %10 = vector.broadcast %cst_13 : f32 to vector<1x128xf32>
    %cst_14 = arith.constant 0.000000e+00 : f32
    %11 = vector.broadcast %cst_14 : f32 to vector<1x128xf32>
    %12 = arith.truncf %10 : vector<1x128xf32> to vector<1x128xbf16>
    %cst_15 = arith.constant dense<0.000000e+00> : vector<1x384xf32>
    %13 = tpu.matmul %12, %6, %cst_15 {dimension_numbers = #tpu.dot_dimension_numbers<[1], [0], [0], [1], [0, 0, 1, 1], [], []>} : vector<1x128xbf16>, vector<128x384xbf16>, vector<1x384xf32> -> vector<1x384xf32>
    %14 = arith.addf %13, %7 : vector<1x384xf32>
    %15 = arith.truncf %11 : vector<1x128xf32> to vector<1x128xbf16>
    %cst_16 = arith.constant dense<0.000000e+00> : vector<1x384xf32>
    %16 = tpu.matmul %15, %8, %cst_16 {dimension_numbers = #tpu.dot_dimension_numbers<[1], [0], [0], [1], [0, 0, 1, 1], [], []>} : vector<1x128xbf16>, vector<128x384xbf16>, vector<1x384xf32> -> vector<1x384xf32>
    %17 = arith.addf %16, %9 : vector<1x384xf32>
    %18 = vector.extract_strided_slice %5 {offsets = [0, 0], sizes = [1, 384], strides = [1, 1]} : vector<7x768xf32> to vector<1x384xf32>
    %19 = vector.extract_strided_slice %18 {offsets = [0, 0], sizes = [1, 128], strides = [1, 1]} : vector<1x384xf32> to vector<1x128xf32>
    %20 = vector.extract_strided_slice %14 {offsets = [0, 0], sizes = [1, 128], strides = [1, 1]} : vector<1x384xf32> to vector<1x128xf32>
    %21 = arith.addf %19, %20 : vector<1x128xf32>
    %22 = arith.negf %21 : vector<1x128xf32>
    %23 = math.exp %22 : vector<1x128xf32>
    %cst_17 = arith.constant 1.000000e+00 : f32
    %24 = vector.broadcast %cst_17 : f32 to vector<1x128xf32>
    %25 = arith.addf %24, %23 : vector<1x128xf32>
    %26 = arith.divf %24, %25 : vector<1x128xf32>
    %27 = vector.extract_strided_slice %18 {offsets = [0, 128], sizes = [1, 128], strides = [1, 1]} : vector<1x384xf32> to vector<1x128xf32>
    %28 = vector.extract_strided_slice %14 {offsets = [0, 128], sizes = [1, 128], strides = [1, 1]} : vector<1x384xf32> to vector<1x128xf32>
    %29 = arith.addf %27, %28 : vector<1x128xf32>
    %30 = arith.negf %29 : vector<1x128xf32>
    %31 = math.exp %30 : vector<1x128xf32>
    %cst_18 = arith.constant 1.000000e+00 : f32
    %32 = vector.broadcast %cst_18 : f32 to vector<1x128xf32>
    %33 = arith.addf %32, %31 : vector<1x128xf32>
    %34 = arith.divf %32, %33 : vector<1x128xf32>
    %35 = vector.extract_strided_slice %18 {offsets = [0, 256], sizes = [1, 128], strides = [1, 1]} : vector<1x384xf32> to vector<1x128xf32>
    %36 = vector.extract_strided_slice %14 {offsets = [0, 256], sizes = [1, 128], strides = [1, 1]} : vector<1x384xf32> to vector<1x128xf32>
    %37 = arith.mulf %26, %36 : vector<1x128xf32>
    %38 = arith.addf %35, %37 : vector<1x128xf32>
    %39 = math.tanh %38 : vector<1x128xf32>
    %cst_19 = arith.constant 1.000000e+00 : f32
    %40 = vector.broadcast %cst_19 : f32 to vector<1x128xf32>
    %41 = arith.subf %40, %34 : vector<1x128xf32>
    %42 = arith.mulf %41, %39 : vector<1x128xf32>
    %43 = arith.mulf %34, %10 : vector<1x128xf32>
    %44 = arith.addf %42, %43 : vector<1x128xf32>
    %45 = vector.extract_strided_slice %5 {offsets = [6, 384], sizes = [1, 384], strides = [1, 1]} : vector<7x768xf32> to vector<1x384xf32>
    %46 = vector.extract_strided_slice %45 {offsets = [0, 0], sizes = [1, 128], strides = [1, 1]} : vector<1x384xf32> to vector<1x128xf32>
    %47 = vector.extract_strided_slice %17 {offsets = [0, 0], sizes = [1, 128], strides = [1, 1]} : vector<1x384xf32> to vector<1x128xf32>
    %48 = arith.addf %46, %47 : vector<1x128xf32>
    %49 = arith.negf %48 : vector<1x128xf32>
    %50 = math.exp %49 : vector<1x128xf32>
    %cst_20 = arith.constant 1.000000e+00 : f32
    %51 = vector.broadcast %cst_20 : f32 to vector<1x128xf32>
    %52 = arith.addf %51, %50 : vector<1x128xf32>
    %53 = arith.divf %51, %52 : vector<1x128xf32>
    %54 = vector.extract_strided_slice %45 {offsets = [0, 128], sizes = [1, 128], strides = [1, 1]} : vector<1x384xf32> to vector<1x128xf32>
    %55 = vector.extract_strided_slice %17 {offsets = [0, 128], sizes = [1, 128], strides = [1, 1]} : vector<1x384xf32> to vector<1x128xf32>
    %56 = arith.addf %54, %55 : vector<1x128xf32>
    %57 = arith.negf %56 : vector<1x128xf32>
    %58 = math.exp %57 : vector<1x128xf32>
    %cst_21 = arith.constant 1.000000e+00 : f32
    %59 = vector.broadcast %cst_21 : f32 to vector<1x128xf32>
    %60 = arith.addf %59, %58 : vector<1x128xf32>
    %61 = arith.divf %59, %60 : vector<1x128xf32>
    %62 = vector.extract_strided_slice %45 {offsets = [0, 256], sizes = [1, 128], strides = [1, 1]} : vector<1x384xf32> to vector<1x128xf32>
    %63 = vector.extract_strided_slice %17 {offsets = [0, 256], sizes = [1, 128], strides = [1, 1]} : vector<1x384xf32> to vector<1x128xf32>
    %64 = arith.mulf %53, %63 : vector<1x128xf32>
    %65 = arith.addf %62, %64 : vector<1x128xf32>
    %66 = math.tanh %65 : vector<1x128xf32>
    %cst_22 = arith.constant 1.000000e+00 : f32
    %67 = vector.broadcast %cst_22 : f32 to vector<1x128xf32>
    %68 = arith.subf %67, %61 : vector<1x128xf32>
    %69 = arith.mulf %68, %66 : vector<1x128xf32>
    %70 = arith.mulf %61, %11 : vector<1x128xf32>
    %71 = arith.addf %69, %70 : vector<1x128xf32>
    %c0_23 = arith.constant 0 : index
    %c0_24 = arith.constant 0 : index
    %72 = vector.load %arg16[%c0_23, %c0_24] : memref<7x128xf32, #tpu.memory_space<vmem>>, vector<1x128xf32>
    tpu.vector_store %arg16[%c0_23, %c0_24], %44 {strides = array<i32>} : memref<7x128xf32, #tpu.memory_space<vmem>>, vector<1x128xf32>,
    %c6 = arith.constant 6 : index
    %c0_25 = arith.constant 0 : index
    %73 = vector.load %arg17[%c6, %c0_25] : memref<7x128xf32, #tpu.memory_space<vmem>>, vector<1x128xf32>
    tpu.vector_store %arg17[%c6, %c0_25], %71 {strides = array<i32>} : memref<7x128xf32, #tpu.memory_space<vmem>>, vector<1x128xf32>,
    %74 = arith.truncf %44 : vector<1x128xf32> to vector<1x128xbf16>
    %cst_26 = arith.constant dense<0.000000e+00> : vector<1x384xf32>
    %75 = tpu.matmul %74, %6, %cst_26 {dimension_numbers = #tpu.dot_dimension_numbers<[1], [0], [0], [1], [0, 0, 1, 1], [], []>} : vector<1x128xbf16>, vector<128x384xbf16>, vector<1x384xf32> -> vector<1x384xf32>
    %76 = arith.addf %75, %7 : vector<1x384xf32>
    %77 = arith.truncf %71 : vector<1x128xf32> to vector<1x128xbf16>
    %cst_27 = arith.constant dense<0.000000e+00> : vector<1x384xf32>
    %78 = tpu.matmul %77, %8, %cst_27 {dimension_numbers = #tpu.dot_dimension_numbers<[1], [0], [0], [1], [0, 0, 1, 1], [], []>} : vector<1x128xbf16>, vector<128x384xbf16>, vector<1x384xf32> -> vector<1x384xf32>
    %79 = arith.addf %78, %9 : vector<1x384xf32>
    %80 = vector.extract_strided_slice %5 {offsets = [1, 0], sizes = [1, 384], strides = [1, 1]} : vector<7x768xf32> to vector<1x384xf32>
    %81 = vector.extract_strided_slice %80 {offsets = [0, 0], sizes = [1, 128], strides = [1, 1]} : vector<1x384xf32> to vector<1x128xf32>
    %82 = vector.extract_strided_slice %76 {offsets = [0, 0], sizes = [1, 128], strides = [1, 1]} : vector<1x384xf32> to vector<1x128xf32>
    %83 = arith.addf %81, %82 : vector<1x128xf32>
    %84 = arith.negf %83 : vector<1x128xf32>
    %85 = math.exp %84 : vector<1x128xf32>
    %cst_28 = arith.constant 1.000000e+00 : f32
    %86 = vector.broadcast %cst_28 : f32 to vector<1x128xf32>
    %87 = arith.addf %86, %85 : vector<1x128xf32>
    %88 = arith.divf %86, %87 : vector<1x128xf32>
    %89 = vector.extract_strided_slice %80 {offsets = [0, 128], sizes = [1, 128], strides = [1, 1]} : vector<1x384xf32> to vector<1x128xf32>
    %90 = vector.extract_strided_slice %76 {offsets = [0, 128], sizes = [1, 128], strides = [1, 1]} : vector<1x384xf32> to vector<1x128xf32>
    %91 = arith.addf %89, %90 : vector<1x128xf32>
    %92 = arith.negf %91 : vector<1x128xf32>
    %93 = math.exp %92 : vector<1x128xf32>
    %cst_29 = arith.constant 1.000000e+00 : f32
    %94 = vector.broadcast %cst_29 : f32 to vector<1x128xf32>
    %95 = arith.addf %94, %93 : vector<1x128xf32>
    %96 = arith.divf %94, %95 : vector<1x128xf32>
    %97 = vector.extract_strided_slice %80 {offsets = [0, 256], sizes = [1, 128], strides = [1, 1]} : vector<1x384xf32> to vector<1x128xf32>
    %98 = vector.extract_strided_slice %76 {offsets = [0, 256], sizes = [1, 128], strides = [1, 1]} : vector<1x384xf32> to vector<1x128xf32>
    %99 = arith.mulf %88, %98 : vector<1x128xf32>
    %100 = arith.addf %97, %99 : vector<1x128xf32>
    %101 = math.tanh %100 : vector<1x128xf32>
    %cst_30 = arith.constant 1.000000e+00 : f32
    %102 = vector.broadcast %cst_30 : f32 to vector<1x128xf32>
    %103 = arith.subf %102, %96 : vector<1x128xf32>
    %104 = arith.mulf %103, %101 : vector<1x128xf32>
    %105 = arith.mulf %96, %44 : vector<1x128xf32>
    %106 = arith.addf %104, %105 : vector<1x128xf32>
    %107 = vector.extract_strided_slice %5 {offsets = [5, 384], sizes = [1, 384], strides = [1, 1]} : vector<7x768xf32> to vector<1x384xf32>
    %108 = vector.extract_strided_slice %107 {offsets = [0, 0], sizes = [1, 128], strides = [1, 1]} : vector<1x384xf32> to vector<1x128xf32>
    %109 = vector.extract_strided_slice %79 {offsets = [0, 0], sizes = [1, 128], strides = [1, 1]} : vector<1x384xf32> to vector<1x128xf32>
    %110 = arith.addf %108, %109 : vector<1x128xf32>
    %111 = arith.negf %110 : vector<1x128xf32>
    %112 = math.exp %111 : vector<1x128xf32>
    %cst_31 = arith.constant 1.000000e+00 : f32
    %113 = vector.broadcast %cst_31 : f32 to vector<1x128xf32>
    %114 = arith.addf %113, %112 : vector<1x128xf32>
    %115 = arith.divf %113, %114 : vector<1x128xf32>
    %116 = vector.extract_strided_slice %107 {offsets = [0, 128], sizes = [1, 128], strides = [1, 1]} : vector<1x384xf32> to vector<1x128xf32>
    %117 = vector.extract_strided_slice %79 {offsets = [0, 128], sizes = [1, 128], strides = [1, 1]} : vector<1x384xf32> to vector<1x128xf32>
    %118 = arith.addf %116, %117 : vector<1x128xf32>
    %119 = arith.negf %118 : vector<1x128xf32>
    %120 = math.exp %119 : vector<1x128xf32>
    %cst_32 = arith.constant 1.000000e+00 : f32
    %121 = vector.broadcast %cst_32 : f32 to vector<1x128xf32>
    %122 = arith.addf %121, %120 : vector<1x128xf32>
    %123 = arith.divf %121, %122 : vector<1x128xf32>
    %124 = vector.extract_strided_slice %107 {offsets = [0, 256], sizes = [1, 128], strides = [1, 1]} : vector<1x384xf32> to vector<1x128xf32>
    %125 = vector.extract_strided_slice %79 {offsets = [0, 256], sizes = [1, 128], strides = [1, 1]} : vector<1x384xf32> to vector<1x128xf32>
    %126 = arith.mulf %115, %125 : vector<1x128xf32>
    %127 = arith.addf %124, %126 : vector<1x128xf32>
    %128 = math.tanh %127 : vector<1x128xf32>
    %cst_33 = arith.constant 1.000000e+00 : f32
    %129 = vector.broadcast %cst_33 : f32 to vector<1x128xf32>
    %130 = arith.subf %129, %123 : vector<1x128xf32>
    %131 = arith.mulf %130, %128 : vector<1x128xf32>
    %132 = arith.mulf %123, %71 : vector<1x128xf32>
    %133 = arith.addf %131, %132 : vector<1x128xf32>
    %c1 = arith.constant 1 : index
    %c0_34 = arith.constant 0 : index
    %134 = vector.load %arg16[%c1, %c0_34] : memref<7x128xf32, #tpu.memory_space<vmem>>, vector<1x128xf32>
    tpu.vector_store %arg16[%c1, %c0_34], %106 {strides = array<i32>} : memref<7x128xf32, #tpu.memory_space<vmem>>, vector<1x128xf32>,
    %c5 = arith.constant 5 : index
    %c0_35 = arith.constant 0 : index
    %135 = vector.load %arg17[%c5, %c0_35] : memref<7x128xf32, #tpu.memory_space<vmem>>, vector<1x128xf32>
    tpu.vector_store %arg17[%c5, %c0_35], %133 {strides = array<i32>} : memref<7x128xf32, #tpu.memory_space<vmem>>, vector<1x128xf32>,
    %136 = arith.truncf %106 : vector<1x128xf32> to vector<1x128xbf16>
    %cst_36 = arith.constant dense<0.000000e+00> : vector<1x384xf32>
    %137 = tpu.matmul %136, %6, %cst_36 {dimension_numbers = #tpu.dot_dimension_numbers<[1], [0], [0], [1], [0, 0, 1, 1], [], []>} : vector<1x128xbf16>, vector<128x384xbf16>, vector<1x384xf32> -> vector<1x384xf32>
    %138 = arith.addf %137, %7 : vector<1x384xf32>
    %139 = arith.truncf %133 : vector<1x128xf32> to vector<1x128xbf16>
    %cst_37 = arith.constant dense<0.000000e+00> : vector<1x384xf32>
    %140 = tpu.matmul %139, %8, %cst_37 {dimension_numbers = #tpu.dot_dimension_numbers<[1], [0], [0], [1], [0, 0, 1, 1], [], []>} : vector<1x128xbf16>, vector<128x384xbf16>, vector<1x384xf32> -> vector<1x384xf32>
    %141 = arith.addf %140, %9 : vector<1x384xf32>
    %142 = vector.extract_strided_slice %5 {offsets = [2, 0], sizes = [1, 384], strides = [1, 1]} : vector<7x768xf32> to vector<1x384xf32>
    %143 = vector.extract_strided_slice %142 {offsets = [0, 0], sizes = [1, 128], strides = [1, 1]} : vector<1x384xf32> to vector<1x128xf32>
    %144 = vector.extract_strided_slice %138 {offsets = [0, 0], sizes = [1, 128], strides = [1, 1]} : vector<1x384xf32> to vector<1x128xf32>
    %145 = arith.addf %143, %144 : vector<1x128xf32>
    %146 = arith.negf %145 : vector<1x128xf32>
    %147 = math.exp %146 : vector<1x128xf32>
    %cst_38 = arith.constant 1.000000e+00 : f32
    %148 = vector.broadcast %cst_38 : f32 to vector<1x128xf32>
    %149 = arith.addf %148, %147 : vector<1x128xf32>
    %150 = arith.divf %148, %149 : vector<1x128xf32>
    %151 = vector.extract_strided_slice %142 {offsets = [0, 128], sizes = [1, 128], strides = [1, 1]} : vector<1x384xf32> to vector<1x128xf32>
    %152 = vector.extract_strided_slice %138 {offsets = [0, 128], sizes = [1, 128], strides = [1, 1]} : vector<1x384xf32> to vector<1x128xf32>
    %153 = arith.addf %151, %152 : vector<1x128xf32>
    %154 = arith.negf %153 : vector<1x128xf32>
    %155 = math.exp %154 : vector<1x128xf32>
    %cst_39 = arith.constant 1.000000e+00 : f32
    %156 = vector.broadcast %cst_39 : f32 to vector<1x128xf32>
    %157 = arith.addf %156, %155 : vector<1x128xf32>
    %158 = arith.divf %156, %157 : vector<1x128xf32>
    %159 = vector.extract_strided_slice %142 {offsets = [0, 256], sizes = [1, 128], strides = [1, 1]} : vector<1x384xf32> to vector<1x128xf32>
    %160 = vector.extract_strided_slice %138 {offsets = [0, 256], sizes = [1, 128], strides = [1, 1]} : vector<1x384xf32> to vector<1x128xf32>
    %161 = arith.mulf %150, %160 : vector<1x128xf32>
    %162 = arith.addf %159, %161 : vector<1x128xf32>
    %163 = math.tanh %162 : vector<1x128xf32>
    %cst_40 = arith.constant 1.000000e+00 : f32
    %164 = vector.broadcast %cst_40 : f32 to vector<1x128xf32>
    %165 = arith.subf %164, %158 : vector<1x128xf32>
    %166 = arith.mulf %165, %163 : vector<1x128xf32>
    %167 = arith.mulf %158, %106 : vector<1x128xf32>
    %168 = arith.addf %166, %167 : vector<1x128xf32>
    %169 = vector.extract_strided_slice %5 {offsets = [4, 384], sizes = [1, 384], strides = [1, 1]} : vector<7x768xf32> to vector<1x384xf32>
    %170 = vector.extract_strided_slice %169 {offsets = [0, 0], sizes = [1, 128], strides = [1, 1]} : vector<1x384xf32> to vector<1x128xf32>
    %171 = vector.extract_strided_slice %141 {offsets = [0, 0], sizes = [1, 128], strides = [1, 1]} : vector<1x384xf32> to vector<1x128xf32>
    %172 = arith.addf %170, %171 : vector<1x128xf32>
    %173 = arith.negf %172 : vector<1x128xf32>
    %174 = math.exp %173 : vector<1x128xf32>
    %cst_41 = arith.constant 1.000000e+00 : f32
    %175 = vector.broadcast %cst_41 : f32 to vector<1x128xf32>
    %176 = arith.addf %175, %174 : vector<1x128xf32>
    %177 = arith.divf %175, %176 : vector<1x128xf32>
    %178 = vector.extract_strided_slice %169 {offsets = [0, 128], sizes = [1, 128], strides = [1, 1]} : vector<1x384xf32> to vector<1x128xf32>
    %179 = vector.extract_strided_slice %141 {offsets = [0, 128], sizes = [1, 128], strides = [1, 1]} : vector<1x384xf32> to vector<1x128xf32>
    %180 = arith.addf %178, %179 : vector<1x128xf32>
    %181 = arith.negf %180 : vector<1x128xf32>
    %182 = math.exp %181 : vector<1x128xf32>
    %cst_42 = arith.constant 1.000000e+00 : f32
    %183 = vector.broadcast %cst_42 : f32 to vector<1x128xf32>
    %184 = arith.addf %183, %182 : vector<1x128xf32>
    %185 = arith.divf %183, %184 : vector<1x128xf32>
    %186 = vector.extract_strided_slice %169 {offsets = [0, 256], sizes = [1, 128], strides = [1, 1]} : vector<1x384xf32> to vector<1x128xf32>
    %187 = vector.extract_strided_slice %141 {offsets = [0, 256], sizes = [1, 128], strides = [1, 1]} : vector<1x384xf32> to vector<1x128xf32>
    %188 = arith.mulf %177, %187 : vector<1x128xf32>
    %189 = arith.addf %186, %188 : vector<1x128xf32>
    %190 = math.tanh %189 : vector<1x128xf32>
    %cst_43 = arith.constant 1.000000e+00 : f32
    %191 = vector.broadcast %cst_43 : f32 to vector<1x128xf32>
    %192 = arith.subf %191, %185 : vector<1x128xf32>
    %193 = arith.mulf %192, %190 : vector<1x128xf32>
    %194 = arith.mulf %185, %133 : vector<1x128xf32>
    %195 = arith.addf %193, %194 : vector<1x128xf32>
    %c2 = arith.constant 2 : index
    %c0_44 = arith.constant 0 : index
    %196 = vector.load %arg16[%c2, %c0_44] : memref<7x128xf32, #tpu.memory_space<vmem>>, vector<1x128xf32>
    tpu.vector_store %arg16[%c2, %c0_44], %168 {strides = array<i32>} : memref<7x128xf32, #tpu.memory_space<vmem>>, vector<1x128xf32>,
    %c4 = arith.constant 4 : index
    %c0_45 = arith.constant 0 : index
    %197 = vector.load %arg17[%c4, %c0_45] : memref<7x128xf32, #tpu.memory_space<vmem>>, vector<1x128xf32>
    tpu.vector_store %arg17[%c4, %c0_45], %195 {strides = array<i32>} : memref<7x128xf32, #tpu.memory_space<vmem>>, vector<1x128xf32>,
    %198 = arith.truncf %168 : vector<1x128xf32> to vector<1x128xbf16>
    %cst_46 = arith.constant dense<0.000000e+00> : vector<1x384xf32>
    %199 = tpu.matmul %198, %6, %cst_46 {dimension_numbers = #tpu.dot_dimension_numbers<[1], [0], [0], [1], [0, 0, 1, 1], [], []>} : vector<1x128xbf16>, vector<128x384xbf16>, vector<1x384xf32> -> vector<1x384xf32>
    %200 = arith.addf %199, %7 : vector<1x384xf32>
    %201 = arith.truncf %195 : vector<1x128xf32> to vector<1x128xbf16>
    %cst_47 = arith.constant dense<0.000000e+00> : vector<1x384xf32>
    %202 = tpu.matmul %201, %8, %cst_47 {dimension_numbers = #tpu.dot_dimension_numbers<[1], [0], [0], [1], [0, 0, 1, 1], [], []>} : vector<1x128xbf16>, vector<128x384xbf16>, vector<1x384xf32> -> vector<1x384xf32>
    %203 = arith.addf %202, %9 : vector<1x384xf32>
    %204 = vector.extract_strided_slice %5 {offsets = [3, 0], sizes = [1, 384], strides = [1, 1]} : vector<7x768xf32> to vector<1x384xf32>
    %205 = vector.extract_strided_slice %204 {offsets = [0, 0], sizes = [1, 128], strides = [1, 1]} : vector<1x384xf32> to vector<1x128xf32>
    %206 = vector.extract_strided_slice %200 {offsets = [0, 0], sizes = [1, 128], strides = [1, 1]} : vector<1x384xf32> to vector<1x128xf32>
    %207 = arith.addf %205, %206 : vector<1x128xf32>
    %208 = arith.negf %207 : vector<1x128xf32>
    %209 = math.exp %208 : vector<1x128xf32>
    %cst_48 = arith.constant 1.000000e+00 : f32
    %210 = vector.broadcast %cst_48 : f32 to vector<1x128xf32>
    %211 = arith.addf %210, %209 : vector<1x128xf32>
    %212 = arith.divf %210, %211 : vector<1x128xf32>
    %213 = vector.extract_strided_slice %204 {offsets = [0, 128], sizes = [1, 128], strides = [1, 1]} : vector<1x384xf32> to vector<1x128xf32>
    %214 = vector.extract_strided_slice %200 {offsets = [0, 128], sizes = [1, 128], strides = [1, 1]} : vector<1x384xf32> to vector<1x128xf32>
    %215 = arith.addf %213, %214 : vector<1x128xf32>
    %216 = arith.negf %215 : vector<1x128xf32>
    %217 = math.exp %216 : vector<1x128xf32>
    %cst_49 = arith.constant 1.000000e+00 : f32
    %218 = vector.broadcast %cst_49 : f32 to vector<1x128xf32>
    %219 = arith.addf %218, %217 : vector<1x128xf32>
    %220 = arith.divf %218, %219 : vector<1x128xf32>
    %221 = vector.extract_strided_slice %204 {offsets = [0, 256], sizes = [1, 128], strides = [1, 1]} : vector<1x384xf32> to vector<1x128xf32>
    %222 = vector.extract_strided_slice %200 {offsets = [0, 256], sizes = [1, 128], strides = [1, 1]} : vector<1x384xf32> to vector<1x128xf32>
    %223 = arith.mulf %212, %222 : vector<1x128xf32>
    %224 = arith.addf %221, %223 : vector<1x128xf32>
    %225 = math.tanh %224 : vector<1x128xf32>
    %cst_50 = arith.constant 1.000000e+00 : f32
    %226 = vector.broadcast %cst_50 : f32 to vector<1x128xf32>
    %227 = arith.subf %226, %220 : vector<1x128xf32>
    %228 = arith.mulf %227, %225 : vector<1x128xf32>
    %229 = arith.mulf %220, %168 : vector<1x128xf32>
    %230 = arith.addf %228, %229 : vector<1x128xf32>
    %231 = vector.extract_strided_slice %5 {offsets = [3, 384], sizes = [1, 384], strides = [1, 1]} : vector<7x768xf32> to vector<1x384xf32>
    %232 = vector.extract_strided_slice %231 {offsets = [0, 0], sizes = [1, 128], strides = [1, 1]} : vector<1x384xf32> to vector<1x128xf32>
    %233 = vector.extract_strided_slice %203 {offsets = [0, 0], sizes = [1, 128], strides = [1, 1]} : vector<1x384xf32> to vector<1x128xf32>
    %234 = arith.addf %232, %233 : vector<1x128xf32>
    %235 = arith.negf %234 : vector<1x128xf32>
    %236 = math.exp %235 : vector<1x128xf32>
    %cst_51 = arith.constant 1.000000e+00 : f32
    %237 = vector.broadcast %cst_51 : f32 to vector<1x128xf32>
    %238 = arith.addf %237, %236 : vector<1x128xf32>
    %239 = arith.divf %237, %238 : vector<1x128xf32>
    %240 = vector.extract_strided_slice %231 {offsets = [0, 128], sizes = [1, 128], strides = [1, 1]} : vector<1x384xf32> to vector<1x128xf32>
    %241 = vector.extract_strided_slice %203 {offsets = [0, 128], sizes = [1, 128], strides = [1, 1]} : vector<1x384xf32> to vector<1x128xf32>
    %242 = arith.addf %240, %241 : vector<1x128xf32>
    %243 = arith.negf %242 : vector<1x128xf32>
    %244 = math.exp %243 : vector<1x128xf32>
    %cst_52 = arith.constant 1.000000e+00 : f32
    %245 = vector.broadcast %cst_52 : f32 to vector<1x128xf32>
    %246 = arith.addf %245, %244 : vector<1x128xf32>
    %247 = arith.divf %245, %246 : vector<1x128xf32>
    %248 = vector.extract_strided_slice %231 {offsets = [0, 256], sizes = [1, 128], strides = [1, 1]} : vector<1x384xf32> to vector<1x128xf32>
    %249 = vector.extract_strided_slice %203 {offsets = [0, 256], sizes = [1, 128], strides = [1, 1]} : vector<1x384xf32> to vector<1x128xf32>
    %250 = arith.mulf %239, %249 : vector<1x128xf32>
    %251 = arith.addf %248, %250 : vector<1x128xf32>
    %252 = math.tanh %251 : vector<1x128xf32>
    %cst_53 = arith.constant 1.000000e+00 : f32
    %253 = vector.broadcast %cst_53 : f32 to vector<1x128xf32>
    %254 = arith.subf %253, %247 : vector<1x128xf32>
    %255 = arith.mulf %254, %252 : vector<1x128xf32>
    %256 = arith.mulf %247, %195 : vector<1x128xf32>
    %257 = arith.addf %255, %256 : vector<1x128xf32>
    %c3 = arith.constant 3 : index
    %c0_54 = arith.constant 0 : index
    %258 = vector.load %arg16[%c3, %c0_54] : memref<7x128xf32, #tpu.memory_space<vmem>>, vector<1x128xf32>
    tpu.vector_store %arg16[%c3, %c0_54], %230 {strides = array<i32>} : memref<7x128xf32, #tpu.memory_space<vmem>>, vector<1x128xf32>,
    %c3_55 = arith.constant 3 : index
    %c0_56 = arith.constant 0 : index
    %259 = vector.load %arg17[%c3_55, %c0_56] : memref<7x128xf32, #tpu.memory_space<vmem>>, vector<1x128xf32>
    tpu.vector_store %arg17[%c3_55, %c0_56], %257 {strides = array<i32>} : memref<7x128xf32, #tpu.memory_space<vmem>>, vector<1x128xf32>,
    %260 = arith.truncf %230 : vector<1x128xf32> to vector<1x128xbf16>
    %cst_57 = arith.constant dense<0.000000e+00> : vector<1x384xf32>
    %261 = tpu.matmul %260, %6, %cst_57 {dimension_numbers = #tpu.dot_dimension_numbers<[1], [0], [0], [1], [0, 0, 1, 1], [], []>} : vector<1x128xbf16>, vector<128x384xbf16>, vector<1x384xf32> -> vector<1x384xf32>
    %262 = arith.addf %261, %7 : vector<1x384xf32>
    %263 = arith.truncf %257 : vector<1x128xf32> to vector<1x128xbf16>
    %cst_58 = arith.constant dense<0.000000e+00> : vector<1x384xf32>
    %264 = tpu.matmul %263, %8, %cst_58 {dimension_numbers = #tpu.dot_dimension_numbers<[1], [0], [0], [1], [0, 0, 1, 1], [], []>} : vector<1x128xbf16>, vector<128x384xbf16>, vector<1x384xf32> -> vector<1x384xf32>
    %265 = arith.addf %264, %9 : vector<1x384xf32>
    %266 = vector.extract_strided_slice %5 {offsets = [4, 0], sizes = [1, 384], strides = [1, 1]} : vector<7x768xf32> to vector<1x384xf32>
    %267 = vector.extract_strided_slice %266 {offsets = [0, 0], sizes = [1, 128], strides = [1, 1]} : vector<1x384xf32> to vector<1x128xf32>
    %268 = vector.extract_strided_slice %262 {offsets = [0, 0], sizes = [1, 128], strides = [1, 1]} : vector<1x384xf32> to vector<1x128xf32>
    %269 = arith.addf %267, %268 : vector<1x128xf32>
    %270 = arith.negf %269 : vector<1x128xf32>
    %271 = math.exp %270 : vector<1x128xf32>
    %cst_59 = arith.constant 1.000000e+00 : f32
    %272 = vector.broadcast %cst_59 : f32 to vector<1x128xf32>
    %273 = arith.addf %272, %271 : vector<1x128xf32>
    %274 = arith.divf %272, %273 : vector<1x128xf32>
    %275 = vector.extract_strided_slice %266 {offsets = [0, 128], sizes = [1, 128], strides = [1, 1]} : vector<1x384xf32> to vector<1x128xf32>
    %276 = vector.extract_strided_slice %262 {offsets = [0, 128], sizes = [1, 128], strides = [1, 1]} : vector<1x384xf32> to vector<1x128xf32>
    %277 = arith.addf %275, %276 : vector<1x128xf32>
    %278 = arith.negf %277 : vector<1x128xf32>
    %279 = math.exp %278 : vector<1x128xf32>
    %cst_60 = arith.constant 1.000000e+00 : f32
    %280 = vector.broadcast %cst_60 : f32 to vector<1x128xf32>
    %281 = arith.addf %280, %279 : vector<1x128xf32>
    %282 = arith.divf %280, %281 : vector<1x128xf32>
    %283 = vector.extract_strided_slice %266 {offsets = [0, 256], sizes = [1, 128], strides = [1, 1]} : vector<1x384xf32> to vector<1x128xf32>
    %284 = vector.extract_strided_slice %262 {offsets = [0, 256], sizes = [1, 128], strides = [1, 1]} : vector<1x384xf32> to vector<1x128xf32>
    %285 = arith.mulf %274, %284 : vector<1x128xf32>
    %286 = arith.addf %283, %285 : vector<1x128xf32>
    %287 = math.tanh %286 : vector<1x128xf32>
    %cst_61 = arith.constant 1.000000e+00 : f32
    %288 = vector.broadcast %cst_61 : f32 to vector<1x128xf32>
    %289 = arith.subf %288, %282 : vector<1x128xf32>
    %290 = arith.mulf %289, %287 : vector<1x128xf32>
    %291 = arith.mulf %282, %230 : vector<1x128xf32>
    %292 = arith.addf %290, %291 : vector<1x128xf32>
    %293 = vector.extract_strided_slice %5 {offsets = [2, 384], sizes = [1, 384], strides = [1, 1]} : vector<7x768xf32> to vector<1x384xf32>
    %294 = vector.extract_strided_slice %293 {offsets = [0, 0], sizes = [1, 128], strides = [1, 1]} : vector<1x384xf32> to vector<1x128xf32>
    %295 = vector.extract_strided_slice %265 {offsets = [0, 0], sizes = [1, 128], strides = [1, 1]} : vector<1x384xf32> to vector<1x128xf32>
    %296 = arith.addf %294, %295 : vector<1x128xf32>
    %297 = arith.negf %296 : vector<1x128xf32>
    %298 = math.exp %297 : vector<1x128xf32>
    %cst_62 = arith.constant 1.000000e+00 : f32
    %299 = vector.broadcast %cst_62 : f32 to vector<1x128xf32>
    %300 = arith.addf %299, %298 : vector<1x128xf32>
    %301 = arith.divf %299, %300 : vector<1x128xf32>
    %302 = vector.extract_strided_slice %293 {offsets = [0, 128], sizes = [1, 128], strides = [1, 1]} : vector<1x384xf32> to vector<1x128xf32>
    %303 = vector.extract_strided_slice %265 {offsets = [0, 128], sizes = [1, 128], strides = [1, 1]} : vector<1x384xf32> to vector<1x128xf32>
    %304 = arith.addf %302, %303 : vector<1x128xf32>
    %305 = arith.negf %304 : vector<1x128xf32>
    %306 = math.exp %305 : vector<1x128xf32>
    %cst_63 = arith.constant 1.000000e+00 : f32
    %307 = vector.broadcast %cst_63 : f32 to vector<1x128xf32>
    %308 = arith.addf %307, %306 : vector<1x128xf32>
    %309 = arith.divf %307, %308 : vector<1x128xf32>
    %310 = vector.extract_strided_slice %293 {offsets = [0, 256], sizes = [1, 128], strides = [1, 1]} : vector<1x384xf32> to vector<1x128xf32>
    %311 = vector.extract_strided_slice %265 {offsets = [0, 256], sizes = [1, 128], strides = [1, 1]} : vector<1x384xf32> to vector<1x128xf32>
    %312 = arith.mulf %301, %311 : vector<1x128xf32>
    %313 = arith.addf %310, %312 : vector<1x128xf32>
    %314 = math.tanh %313 : vector<1x128xf32>
    %cst_64 = arith.constant 1.000000e+00 : f32
    %315 = vector.broadcast %cst_64 : f32 to vector<1x128xf32>
    %316 = arith.subf %315, %309 : vector<1x128xf32>
    %317 = arith.mulf %316, %314 : vector<1x128xf32>
    %318 = arith.mulf %309, %257 : vector<1x128xf32>
    %319 = arith.addf %317, %318 : vector<1x128xf32>
    %c4_65 = arith.constant 4 : index
    %c0_66 = arith.constant 0 : index
    %320 = vector.load %arg16[%c4_65, %c0_66] : memref<7x128xf32, #tpu.memory_space<vmem>>, vector<1x128xf32>
    tpu.vector_store %arg16[%c4_65, %c0_66], %292 {strides = array<i32>} : memref<7x128xf32, #tpu.memory_space<vmem>>, vector<1x128xf32>,
    %c2_67 = arith.constant 2 : index
    %c0_68 = arith.constant 0 : index
    %321 = vector.load %arg17[%c2_67, %c0_68] : memref<7x128xf32, #tpu.memory_space<vmem>>, vector<1x128xf32>
    tpu.vector_store %arg17[%c2_67, %c0_68], %319 {strides = array<i32>} : memref<7x128xf32, #tpu.memory_space<vmem>>, vector<1x128xf32>,
    %322 = arith.truncf %292 : vector<1x128xf32> to vector<1x128xbf16>
    %cst_69 = arith.constant dense<0.000000e+00> : vector<1x384xf32>
    %323 = tpu.matmul %322, %6, %cst_69 {dimension_numbers = #tpu.dot_dimension_numbers<[1], [0], [0], [1], [0, 0, 1, 1], [], []>} : vector<1x128xbf16>, vector<128x384xbf16>, vector<1x384xf32> -> vector<1x384xf32>
    %324 = arith.addf %323, %7 : vector<1x384xf32>
    %325 = arith.truncf %319 : vector<1x128xf32> to vector<1x128xbf16>
    %cst_70 = arith.constant dense<0.000000e+00> : vector<1x384xf32>
    %326 = tpu.matmul %325, %8, %cst_70 {dimension_numbers = #tpu.dot_dimension_numbers<[1], [0], [0], [1], [0, 0, 1, 1], [], []>} : vector<1x128xbf16>, vector<128x384xbf16>, vector<1x384xf32> -> vector<1x384xf32>
    %327 = arith.addf %326, %9 : vector<1x384xf32>
    %328 = vector.extract_strided_slice %5 {offsets = [5, 0], sizes = [1, 384], strides = [1, 1]} : vector<7x768xf32> to vector<1x384xf32>
    %329 = vector.extract_strided_slice %328 {offsets = [0, 0], sizes = [1, 128], strides = [1, 1]} : vector<1x384xf32> to vector<1x128xf32>
    %330 = vector.extract_strided_slice %324 {offsets = [0, 0], sizes = [1, 128], strides = [1, 1]} : vector<1x384xf32> to vector<1x128xf32>
    %331 = arith.addf %329, %330 : vector<1x128xf32>
    %332 = arith.negf %331 : vector<1x128xf32>
    %333 = math.exp %332 : vector<1x128xf32>
    %cst_71 = arith.constant 1.000000e+00 : f32
    %334 = vector.broadcast %cst_71 : f32 to vector<1x128xf32>
    %335 = arith.addf %334, %333 : vector<1x128xf32>
    %336 = arith.divf %334, %335 : vector<1x128xf32>
    %337 = vector.extract_strided_slice %328 {offsets = [0, 128], sizes = [1, 128], strides = [1, 1]} : vector<1x384xf32> to vector<1x128xf32>
    %338 = vector.extract_strided_slice %324 {offsets = [0, 128], sizes = [1, 128], strides = [1, 1]} : vector<1x384xf32> to vector<1x128xf32>
    %339 = arith.addf %337, %338 : vector<1x128xf32>
    %340 = arith.negf %339 : vector<1x128xf32>
    %341 = math.exp %340 : vector<1x128xf32>
    %cst_72 = arith.constant 1.000000e+00 : f32
    %342 = vector.broadcast %cst_72 : f32 to vector<1x128xf32>
    %343 = arith.addf %342, %341 : vector<1x128xf32>
    %344 = arith.divf %342, %343 : vector<1x128xf32>
    %345 = vector.extract_strided_slice %328 {offsets = [0, 256], sizes = [1, 128], strides = [1, 1]} : vector<1x384xf32> to vector<1x128xf32>
    %346 = vector.extract_strided_slice %324 {offsets = [0, 256], sizes = [1, 128], strides = [1, 1]} : vector<1x384xf32> to vector<1x128xf32>
    %347 = arith.mulf %336, %346 : vector<1x128xf32>
    %348 = arith.addf %345, %347 : vector<1x128xf32>
    %349 = math.tanh %348 : vector<1x128xf32>
    %cst_73 = arith.constant 1.000000e+00 : f32
    %350 = vector.broadcast %cst_73 : f32 to vector<1x128xf32>
    %351 = arith.subf %350, %344 : vector<1x128xf32>
    %352 = arith.mulf %351, %349 : vector<1x128xf32>
    %353 = arith.mulf %344, %292 : vector<1x128xf32>
    %354 = arith.addf %352, %353 : vector<1x128xf32>
    %355 = vector.extract_strided_slice %5 {offsets = [1, 384], sizes = [1, 384], strides = [1, 1]} : vector<7x768xf32> to vector<1x384xf32>
    %356 = vector.extract_strided_slice %355 {offsets = [0, 0], sizes = [1, 128], strides = [1, 1]} : vector<1x384xf32> to vector<1x128xf32>
    %357 = vector.extract_strided_slice %327 {offsets = [0, 0], sizes = [1, 128], strides = [1, 1]} : vector<1x384xf32> to vector<1x128xf32>
    %358 = arith.addf %356, %357 : vector<1x128xf32>
    %359 = arith.negf %358 : vector<1x128xf32>
    %360 = math.exp %359 : vector<1x128xf32>
    %cst_74 = arith.constant 1.000000e+00 : f32
    %361 = vector.broadcast %cst_74 : f32 to vector<1x128xf32>
    %362 = arith.addf %361, %360 : vector<1x128xf32>
    %363 = arith.divf %361, %362 : vector<1x128xf32>
    %364 = vector.extract_strided_slice %355 {offsets = [0, 128], sizes = [1, 128], strides = [1, 1]} : vector<1x384xf32> to vector<1x128xf32>
    %365 = vector.extract_strided_slice %327 {offsets = [0, 128], sizes = [1, 128], strides = [1, 1]} : vector<1x384xf32> to vector<1x128xf32>
    %366 = arith.addf %364, %365 : vector<1x128xf32>
    %367 = arith.negf %366 : vector<1x128xf32>
    %368 = math.exp %367 : vector<1x128xf32>
    %cst_75 = arith.constant 1.000000e+00 : f32
    %369 = vector.broadcast %cst_75 : f32 to vector<1x128xf32>
    %370 = arith.addf %369, %368 : vector<1x128xf32>
    %371 = arith.divf %369, %370 : vector<1x128xf32>
    %372 = vector.extract_strided_slice %355 {offsets = [0, 256], sizes = [1, 128], strides = [1, 1]} : vector<1x384xf32> to vector<1x128xf32>
    %373 = vector.extract_strided_slice %327 {offsets = [0, 256], sizes = [1, 128], strides = [1, 1]} : vector<1x384xf32> to vector<1x128xf32>
    %374 = arith.mulf %363, %373 : vector<1x128xf32>
    %375 = arith.addf %372, %374 : vector<1x128xf32>
    %376 = math.tanh %375 : vector<1x128xf32>
    %cst_76 = arith.constant 1.000000e+00 : f32
    %377 = vector.broadcast %cst_76 : f32 to vector<1x128xf32>
    %378 = arith.subf %377, %371 : vector<1x128xf32>
    %379 = arith.mulf %378, %376 : vector<1x128xf32>
    %380 = arith.mulf %371, %319 : vector<1x128xf32>
    %381 = arith.addf %379, %380 : vector<1x128xf32>
    %c5_77 = arith.constant 5 : index
    %c0_78 = arith.constant 0 : index
    %382 = vector.load %arg16[%c5_77, %c0_78] : memref<7x128xf32, #tpu.memory_space<vmem>>, vector<1x128xf32>
    tpu.vector_store %arg16[%c5_77, %c0_78], %354 {strides = array<i32>} : memref<7x128xf32, #tpu.memory_space<vmem>>, vector<1x128xf32>,
    %c1_79 = arith.constant 1 : index
    %c0_80 = arith.constant 0 : index
    %383 = vector.load %arg17[%c1_79, %c0_80] : memref<7x128xf32, #tpu.memory_space<vmem>>, vector<1x128xf32>
    tpu.vector_store %arg17[%c1_79, %c0_80], %381 {strides = array<i32>} : memref<7x128xf32, #tpu.memory_space<vmem>>, vector<1x128xf32>,
    %384 = arith.truncf %354 : vector<1x128xf32> to vector<1x128xbf16>
    %cst_81 = arith.constant dense<0.000000e+00> : vector<1x384xf32>
    %385 = tpu.matmul %384, %6, %cst_81 {dimension_numbers = #tpu.dot_dimension_numbers<[1], [0], [0], [1], [0, 0, 1, 1], [], []>} : vector<1x128xbf16>, vector<128x384xbf16>, vector<1x384xf32> -> vector<1x384xf32>
    %386 = arith.addf %385, %7 : vector<1x384xf32>
    %387 = arith.truncf %381 : vector<1x128xf32> to vector<1x128xbf16>
    %cst_82 = arith.constant dense<0.000000e+00> : vector<1x384xf32>
    %388 = tpu.matmul %387, %8, %cst_82 {dimension_numbers = #tpu.dot_dimension_numbers<[1], [0], [0], [1], [0, 0, 1, 1], [], []>} : vector<1x128xbf16>, vector<128x384xbf16>, vector<1x384xf32> -> vector<1x384xf32>
    %389 = arith.addf %388, %9 : vector<1x384xf32>
    %390 = vector.extract_strided_slice %5 {offsets = [6, 0], sizes = [1, 384], strides = [1, 1]} : vector<7x768xf32> to vector<1x384xf32>
    %391 = vector.extract_strided_slice %390 {offsets = [0, 0], sizes = [1, 128], strides = [1, 1]} : vector<1x384xf32> to vector<1x128xf32>
    %392 = vector.extract_strided_slice %386 {offsets = [0, 0], sizes = [1, 128], strides = [1, 1]} : vector<1x384xf32> to vector<1x128xf32>
    %393 = arith.addf %391, %392 : vector<1x128xf32>
    %394 = arith.negf %393 : vector<1x128xf32>
    %395 = math.exp %394 : vector<1x128xf32>
    %cst_83 = arith.constant 1.000000e+00 : f32
    %396 = vector.broadcast %cst_83 : f32 to vector<1x128xf32>
    %397 = arith.addf %396, %395 : vector<1x128xf32>
    %398 = arith.divf %396, %397 : vector<1x128xf32>
    %399 = vector.extract_strided_slice %390 {offsets = [0, 128], sizes = [1, 128], strides = [1, 1]} : vector<1x384xf32> to vector<1x128xf32>
    %400 = vector.extract_strided_slice %386 {offsets = [0, 128], sizes = [1, 128], strides = [1, 1]} : vector<1x384xf32> to vector<1x128xf32>
    %401 = arith.addf %399, %400 : vector<1x128xf32>
    %402 = arith.negf %401 : vector<1x128xf32>
    %403 = math.exp %402 : vector<1x128xf32>
    %cst_84 = arith.constant 1.000000e+00 : f32
    %404 = vector.broadcast %cst_84 : f32 to vector<1x128xf32>
    %405 = arith.addf %404, %403 : vector<1x128xf32>
    %406 = arith.divf %404, %405 : vector<1x128xf32>
    %407 = vector.extract_strided_slice %390 {offsets = [0, 256], sizes = [1, 128], strides = [1, 1]} : vector<1x384xf32> to vector<1x128xf32>
    %408 = vector.extract_strided_slice %386 {offsets = [0, 256], sizes = [1, 128], strides = [1, 1]} : vector<1x384xf32> to vector<1x128xf32>
    %409 = arith.mulf %398, %408 : vector<1x128xf32>
    %410 = arith.addf %407, %409 : vector<1x128xf32>
    %411 = math.tanh %410 : vector<1x128xf32>
    %cst_85 = arith.constant 1.000000e+00 : f32
    %412 = vector.broadcast %cst_85 : f32 to vector<1x128xf32>
    %413 = arith.subf %412, %406 : vector<1x128xf32>
    %414 = arith.mulf %413, %411 : vector<1x128xf32>
    %415 = arith.mulf %406, %354 : vector<1x128xf32>
    %416 = arith.addf %414, %415 : vector<1x128xf32>
    %417 = vector.extract_strided_slice %5 {offsets = [0, 384], sizes = [1, 384], strides = [1, 1]} : vector<7x768xf32> to vector<1x384xf32>
    %418 = vector.extract_strided_slice %417 {offsets = [0, 0], sizes = [1, 128], strides = [1, 1]} : vector<1x384xf32> to vector<1x128xf32>
    %419 = vector.extract_strided_slice %389 {offsets = [0, 0], sizes = [1, 128], strides = [1, 1]} : vector<1x384xf32> to vector<1x128xf32>
    %420 = arith.addf %418, %419 : vector<1x128xf32>
    %421 = arith.negf %420 : vector<1x128xf32>
    %422 = math.exp %421 : vector<1x128xf32>
    %cst_86 = arith.constant 1.000000e+00 : f32
    %423 = vector.broadcast %cst_86 : f32 to vector<1x128xf32>
    %424 = arith.addf %423, %422 : vector<1x128xf32>
    %425 = arith.divf %423, %424 : vector<1x128xf32>
    %426 = vector.extract_strided_slice %417 {offsets = [0, 128], sizes = [1, 128], strides = [1, 1]} : vector<1x384xf32> to vector<1x128xf32>
    %427 = vector.extract_strided_slice %389 {offsets = [0, 128], sizes = [1, 128], strides = [1, 1]} : vector<1x384xf32> to vector<1x128xf32>
    %428 = arith.addf %426, %427 : vector<1x128xf32>
    %429 = arith.negf %428 : vector<1x128xf32>
    %430 = math.exp %429 : vector<1x128xf32>
    %cst_87 = arith.constant 1.000000e+00 : f32
    %431 = vector.broadcast %cst_87 : f32 to vector<1x128xf32>
    %432 = arith.addf %431, %430 : vector<1x128xf32>
    %433 = arith.divf %431, %432 : vector<1x128xf32>
    %434 = vector.extract_strided_slice %417 {offsets = [0, 256], sizes = [1, 128], strides = [1, 1]} : vector<1x384xf32> to vector<1x128xf32>
    %435 = vector.extract_strided_slice %389 {offsets = [0, 256], sizes = [1, 128], strides = [1, 1]} : vector<1x384xf32> to vector<1x128xf32>
    %436 = arith.mulf %425, %435 : vector<1x128xf32>
    %437 = arith.addf %434, %436 : vector<1x128xf32>
    %438 = math.tanh %437 : vector<1x128xf32>
    %cst_88 = arith.constant 1.000000e+00 : f32
    %439 = vector.broadcast %cst_88 : f32 to vector<1x128xf32>
    %440 = arith.subf %439, %433 : vector<1x128xf32>
    %441 = arith.mulf %440, %438 : vector<1x128xf32>
    %442 = arith.mulf %433, %381 : vector<1x128xf32>
    %443 = arith.addf %441, %442 : vector<1x128xf32>
    %c6_89 = arith.constant 6 : index
    %c0_90 = arith.constant 0 : index
    %444 = vector.load %arg16[%c6_89, %c0_90] : memref<7x128xf32, #tpu.memory_space<vmem>>, vector<1x128xf32>
    tpu.vector_store %arg16[%c6_89, %c0_90], %416 {strides = array<i32>} : memref<7x128xf32, #tpu.memory_space<vmem>>, vector<1x128xf32>,
    %c0_91 = arith.constant 0 : index
    %c0_92 = arith.constant 0 : index
    %445 = vector.load %arg17[%c0_91, %c0_92] : memref<7x128xf32, #tpu.memory_space<vmem>>, vector<1x128xf32>
    tpu.vector_store %arg17[%c0_91, %c0_92], %443 {strides = array<i32>} : memref<7x128xf32, #tpu.memory_space<vmem>>, vector<1x128xf32>,
    %c0_93 = arith.constant 0 : index
    %c0_94 = arith.constant 0 : index
    %446 = vector.load %arg16[%c0_93, %c0_94] : memref<7x128xf32, #tpu.memory_space<vmem>>, vector<7x128xf32>
    %c0_95 = arith.constant 0 : index
    %c0_96 = arith.constant 0 : index
    %447 = vector.load %arg17[%c0_95, %c0_96] : memref<7x128xf32, #tpu.memory_space<vmem>>, vector<7x128xf32>
    %448 = arith.addf %446, %447 : vector<7x128xf32>
    %449 = tpu.iota {dimensions = array<i32: 1>} : vector<1x128xi32>
    %c1_i32 = arith.constant 1 : i32
    %c0_i32 = arith.constant 0 : i32
    %c10_i32 = arith.constant 10 : i32
    %450 = arith.addi %c0_i32, %c10_i32 : i32
    %c1_i32_97 = arith.constant 1 : i32
    %451:2 = scf.for %arg18 = %c0_i32 to %450 step %c1_i32_97 iter_args(%arg19 = %416, %arg20 = %c1_i32) -> (vector<1x128xf32>, i32)  : i32 {
      %452 = vector.broadcast %arg20 : i32 to vector<1x128xi32>
      %453 = arith.cmpi eq, %449, %452 : vector<1x128xi32>
      %454 = arith.extui %453 : vector<1x128xi1> to vector<1x128xi32>
      %455 = arith.sitofp %454 : vector<1x128xi32> to vector<1x128xf32>
      %456 = arith.truncf %455 : vector<1x128xf32> to vector<1x128xbf16>
      %c0_99 = arith.constant 0 : index
      %c0_100 = arith.constant 0 : index
      %457 = vector.load %arg1[%c0_99, %c0_100] : memref<128x128xbf16, #tpu.memory_space<vmem>>, vector<128x128xbf16>
      %cst_101 = arith.constant dense<0.000000e+00> : vector<1x128xf32>
      %458 = tpu.matmul %456, %457, %cst_101 {dimension_numbers = #tpu.dot_dimension_numbers<[1], [0], [0], [1], [0, 0, 1, 1], [], []>} : vector<1x128xbf16>, vector<128x128xbf16>, vector<1x128xf32> -> vector<1x128xf32>
      %459 = tpu.concatenate %458, %arg19 in 1 : vector<1x128xf32>, vector<1x128xf32> -> vector<1x256xf32>
      %460 = arith.truncf %459 : vector<1x256xf32> to vector<1x256xbf16>
      %c0_102 = arith.constant 0 : index
      %c0_103 = arith.constant 0 : index
      %461 = vector.load %arg8[%c0_102, %c0_103] : memref<256x768xbf16, #tpu.memory_space<vmem>>, vector<256x768xbf16>
      %cst_104 = arith.constant dense<0.000000e+00> : vector<1x768xf32>
      %462 = tpu.matmul %460, %461, %cst_104 {dimension_numbers = #tpu.dot_dimension_numbers<[1], [0], [0], [1], [0, 0, 1, 1], [], []>} : vector<1x256xbf16>, vector<256x768xbf16>, vector<1x768xf32> -> vector<1x768xf32>
      %c0_105 = arith.constant 0 : index
      %c0_106 = arith.constant 0 : index
      %463 = vector.load %arg9[%c0_105, %c0_106] : memref<1x768xf32, #tpu.memory_space<vmem>>, vector<1x768xf32>
      %464 = arith.addf %462, %463 : vector<1x768xf32>
      %465 = vector.extract_strided_slice %464 {offsets = [0, 0], sizes = [1, 384], strides = [1, 1]} : vector<1x768xf32> to vector<1x384xf32>
      %466 = vector.extract_strided_slice %464 {offsets = [0, 384], sizes = [1, 384], strides = [1, 1]} : vector<1x768xf32> to vector<1x384xf32>
      %467 = vector.extract_strided_slice %465 {offsets = [0, 0], sizes = [1, 128], strides = [1, 1]} : vector<1x384xf32> to vector<1x128xf32>
      %468 = vector.extract_strided_slice %466 {offsets = [0, 0], sizes = [1, 128], strides = [1, 1]} : vector<1x384xf32> to vector<1x128xf32>
      %469 = arith.addf %467, %468 : vector<1x128xf32>
      %470 = arith.negf %469 : vector<1x128xf32>
      %471 = math.exp %470 : vector<1x128xf32>
      %cst_107 = arith.constant 1.000000e+00 : f32
      %472 = vector.broadcast %cst_107 : f32 to vector<1x128xf32>
      %473 = arith.addf %472, %471 : vector<1x128xf32>
      %474 = arith.divf %472, %473 : vector<1x128xf32>
      %475 = vector.extract_strided_slice %465 {offsets = [0, 128], sizes = [1, 128], strides = [1, 1]} : vector<1x384xf32> to vector<1x128xf32>
      %476 = vector.extract_strided_slice %466 {offsets = [0, 128], sizes = [1, 128], strides = [1, 1]} : vector<1x384xf32> to vector<1x128xf32>
      %477 = arith.addf %475, %476 : vector<1x128xf32>
      %478 = arith.negf %477 : vector<1x128xf32>
      %479 = math.exp %478 : vector<1x128xf32>
      %cst_108 = arith.constant 1.000000e+00 : f32
      %480 = vector.broadcast %cst_108 : f32 to vector<1x128xf32>
      %481 = arith.addf %480, %479 : vector<1x128xf32>
      %482 = arith.divf %480, %481 : vector<1x128xf32>
      %483 = vector.extract_strided_slice %465 {offsets = [0, 256], sizes = [1, 128], strides = [1, 1]} : vector<1x384xf32> to vector<1x128xf32>
      %484 = vector.extract_strided_slice %466 {offsets = [0, 256], sizes = [1, 128], strides = [1, 1]} : vector<1x384xf32> to vector<1x128xf32>
      %485 = arith.mulf %474, %484 : vector<1x128xf32>
      %486 = arith.addf %483, %485 : vector<1x128xf32>
      %487 = math.tanh %486 : vector<1x128xf32>
      %cst_109 = arith.constant 1.000000e+00 : f32
      %488 = vector.broadcast %cst_109 : f32 to vector<1x128xf32>
      %489 = arith.subf %488, %482 : vector<1x128xf32>
      %490 = arith.mulf %489, %487 : vector<1x128xf32>
      %491 = arith.mulf %482, %arg19 : vector<1x128xf32>
      %492 = arith.addf %490, %491 : vector<1x128xf32>
      %cst_110 = arith.constant dense<0.000000e+00> : vector<1x7xf32>
      %493 = tpu.matmul %492, %448, %cst_110 {dimension_numbers = #tpu.dot_dimension_numbers<[1], [1], [0], [0], [0, 0, 1, 0], [], []>} : vector<1x128xf32>, vector<7x128xf32>, vector<1x7xf32> -> vector<1x7xf32>
      %cst_111 = arith.constant dense<0xFF800000> : vector<1xf32>
      %494 = vector.multi_reduction <maximumf>, %493, %cst_111 [1] : vector<1x7xf32> to vector<1xf32>
      %495 = vector.shape_cast %494 : vector<1xf32> to vector<1x1xf32>
      %496 = vector.broadcast %495 : vector<1x1xf32> to vector<1x7xf32>
      %497 = arith.subf %493, %496 : vector<1x7xf32>
      %498 = math.exp %497 : vector<1x7xf32>
      %cst_112 = arith.constant dense<0.000000e+00> : vector<1xf32>
      %499 = vector.multi_reduction <add>, %498, %cst_112 [1] : vector<1x7xf32> to vector<1xf32>
      %500 = vector.shape_cast %499 : vector<1xf32> to vector<1x1xf32>
      %501 = vector.broadcast %500 : vector<1x1xf32> to vector<1x7xf32>
      %502 = arith.divf %498, %501 : vector<1x7xf32>
      %cst_113 = arith.constant dense<0.000000e+00> : vector<1x128xf32>
      %503 = tpu.matmul %502, %448, %cst_113 {dimension_numbers = #tpu.dot_dimension_numbers<[1], [0], [0], [1], [0, 0, 1, 1], [], []>} : vector<1x7xf32>, vector<7x128xf32>, vector<1x128xf32> -> vector<1x128xf32>
      %504 = tpu.concatenate %492, %503 in 1 : vector<1x128xf32>, vector<1x128xf32> -> vector<1x256xf32>
      %505 = arith.truncf %504 : vector<1x256xf32> to vector<1x256xbf16>
      %c0_114 = arith.constant 0 : index
      %c0_115 = arith.constant 0 : index
      %506 = vector.load %arg10[%c0_114, %c0_115] : memref<256x128xbf16, #tpu.memory_space<vmem>>, vector<256x128xbf16>
      %cst_116 = arith.constant dense<0.000000e+00> : vector<1x128xf32>
      %507 = tpu.matmul %505, %506, %cst_116 {dimension_numbers = #tpu.dot_dimension_numbers<[1], [0], [0], [1], [0, 0, 1, 1], [], []>} : vector<1x256xbf16>, vector<256x128xbf16>, vector<1x128xf32> -> vector<1x128xf32>
      %c0_117 = arith.constant 0 : index
      %c0_118 = arith.constant 0 : index
      %508 = vector.load %arg11[%c0_117, %c0_118] : memref<1x128xf32, #tpu.memory_space<vmem>>, vector<1x128xf32>
      %509 = arith.addf %507, %508 : vector<1x128xf32>
      %510 = math.tanh %509 : vector<1x128xf32>
      %511 = arith.truncf %510 : vector<1x128xf32> to vector<1x128xbf16>
      %c0_119 = arith.constant 0 : index
      %c0_120 = arith.constant 0 : index
      %512 = vector.load %arg12[%c0_119, %c0_120] : memref<128x128xbf16, #tpu.memory_space<vmem>>, vector<128x128xbf16>
      %cst_121 = arith.constant dense<0.000000e+00> : vector<1x128xf32>
      %513 = tpu.matmul %511, %512, %cst_121 {dimension_numbers = #tpu.dot_dimension_numbers<[1], [0], [0], [1], [0, 0, 1, 1], [], []>} : vector<1x128xbf16>, vector<128x128xbf16>, vector<1x128xf32> -> vector<1x128xf32>
      %c0_122 = arith.constant 0 : index
      %c0_123 = arith.constant 0 : index
      %514 = vector.load %arg13[%c0_122, %c0_123] : memref<1x128xf32, #tpu.memory_space<vmem>>, vector<1x128xf32>
      %515 = arith.addf %513, %514 : vector<1x128xf32>
      %516 = vector.shape_cast %515 : vector<1x128xf32> to vector<1x1x128xf32>
      %cst_124 = arith.constant dense<0xFF800000> : vector<1xf32>
      %517 = vector.multi_reduction <maximumf>, %516, %cst_124 [1, 2] : vector<1x1x128xf32> to vector<1xf32>
      %518 = vector.shape_cast %517 : vector<1xf32> to vector<1x1x1xf32>
      %519 = vector.extract %518[0, 0, 0] : f32 from vector<1x1x1xf32>
      %520 = vector.broadcast %519 : f32 to vector<1x128xf32>
      %521 = arith.cmpf oeq, %515, %520 : vector<1x128xf32>
      %c128_i32 = arith.constant 128 : i32
      %522 = vector.broadcast %c128_i32 : i32 to vector<1x128xi32>
      %523 = arith.select %521, %449, %522 : vector<1x128xi1>, vector<1x128xi32>
      %524 = vector.shape_cast %523 : vector<1x128xi32> to vector<1x1x128xi32>
      %cst_125 = arith.constant dense<2147483647> : vector<1xi32>
      %525 = vector.multi_reduction <minsi>, %524, %cst_125 [1, 2] : vector<1x1x128xi32> to vector<1xi32>
      %526 = vector.shape_cast %525 : vector<1xi32> to vector<1x1x1xi32>
      %527 = vector.extract %526[0, 0, 0] : i32 from vector<1x1x1xi32>
      %528 = vector.broadcast %519 : f32 to vector<1x128xf32>
      %529 = arith.subf %515, %528 : vector<1x128xf32>
      %530 = math.exp %529 : vector<1x128xf32>
      %cst_126 = arith.constant dense<0.000000e+00> : vector<1xf32>
      %531 = vector.multi_reduction <add>, %530, %cst_126 [1] : vector<1x128xf32> to vector<1xf32>
      %532 = vector.shape_cast %531 : vector<1xf32> to vector<1x1xf32>
      %533 = tpu.reciprocal %532 {approx = true} : vector<1x1xf32> -> vector<1x1xf32>
      %534 = vector.shape_cast %533 : vector<1x1xf32> to vector<1x1x1xf32>
      %cst_127 = arith.constant dense<0xFF800000> : vector<1xf32>
      %535 = vector.multi_reduction <maximumf>, %534, %cst_127 [1, 2] : vector<1x1x1xf32> to vector<1xf32>
      %536 = vector.shape_cast %535 : vector<1xf32> to vector<1x1x1xf32>
      %537 = vector.extract %536[0, 0, 0] : f32 from vector<1x1x1xf32>
      %538 = arith.index_cast %arg18 : i32 to index
      %539 = memref.load %arg14[%538] : memref<10xi32, #tpu.memory_space<smem>>
      memref.store %527, %arg14[%538] : memref<10xi32, #tpu.memory_space<smem>>
      %540 = arith.index_cast %arg18 : i32 to index
      %541 = memref.load %arg15[%540] : memref<10xf32, #tpu.memory_space<smem>>
      memref.store %537, %arg15[%540] : memref<10xf32, #tpu.memory_space<smem>>
      scf.yield %492, %527 : vector<1x128xf32>, i32
    }
    %c10_i32_98 = arith.constant 10 : i32
    return
  }
}

</mosaic_0001>

<llo_original>
// kernel: tpu_custom_call.1
$region0: #{tpu_custom_call.1}
  #allocation0 [shape = 'u32[]', space=smem, size = 0x4, offset = 0x4, fixed_abs, tag = 'smem constant byte address 0x4 - core index']
  #allocation1 [shape = 'u32[144,128]{1,0:T(1,128)}', space=vmem, size = 0x12000, scoped, tag = 'internal scratch']
  #allocation2 [shape = 'f32[7,128]{1,0:T(8,128)}', space=vmem, size = 0x1000, scoped, tag = 'scratch operand']
  #allocation3 [shape = 'f32[7,128]{1,0:T(8,128)}', space=vmem, size = 0x1000, scoped, tag = 'scratch operand']
  %s0 = inlined_call_operand.hbm [shape: bf16[7,128], index: 0, kind: input, shape index: {}]
  %s1 = inlined_call_operand.hbm [shape: bf16[128,128], index: 1, kind: input, shape index: {}]
  %s2 = inlined_call_operand.hbm [shape: bf16[128,768], index: 2, kind: input, shape index: {}]
  %s3 = inlined_call_operand.vmem [shape: f32[1,768], index: 3, kind: input, shape index: {}]
  %s4 = inlined_call_operand.hbm [shape: bf16[128,384], index: 4, kind: input, shape index: {}]
  %s5 = inlined_call_operand.vmem [shape: f32[1,384], index: 5, kind: input, shape index: {}]
  %s6 = inlined_call_operand.hbm [shape: bf16[128,384], index: 6, kind: input, shape index: {}]
  %s7 = inlined_call_operand.vmem [shape: f32[1,384], index: 7, kind: input, shape index: {}]
  %s8 = inlined_call_operand.hbm [shape: bf16[256,768], index: 8, kind: input, shape index: {}]
  %s9 = inlined_call_operand.vmem [shape: f32[1,768], index: 9, kind: input, shape index: {}]
  %s10 = inlined_call_operand.hbm [shape: bf16[256,128], index: 10, kind: input, shape index: {}]
  %s11 = inlined_call_operand.vmem [shape: f32[1,128], index: 11, kind: input, shape index: {}]
  %s12 = inlined_call_operand.hbm [shape: bf16[128,128], index: 12, kind: input, shape index: {}]
  %s13 = inlined_call_operand.vmem [shape: f32[1,128], index: 13, kind: input, shape index: {}]
  %s14 = inlined_call_operand.hbm [shape: s32[10], index: 14, kind: output, shape index: {0}]
  %s15 = inlined_call_operand.hbm [shape: f32[10], index: 15, kind: output, shape index: {1}]
  %16 = xla_tuple %s14, %s15
  %s17 = sld [smem:[#allocation0]]
  $region113: #{tpu_custom_call.1} parent=0
    _
  %s19 = ssub.s32 1, %s17
  %s20 = scalar_select 0, %s19, %s17
  $region1: #{tpu_custom_call.1} parent=0
    #allocation4 [shape = 'u8[2048]{0}', space=vmem, size = 0x800, scoped, tag = 'input window, operand 0, single buffered']
    #allocation5 [shape = 's32[1]{0}', space=sflag, size = 0x4, scoped, tag = 'scoped memory for tpu_custom_call.1']
    #allocation6 [shape = 's32[1]{0}', space=sflag, size = 0x4, scoped, tag = 'scoped memory for tpu_custom_call.1']
    #allocation7 [shape = 'u8[32768]{0}', space=vmem, size = 0x8000, scoped, tag = 'input window, operand 1, single buffered']
    #allocation8 [shape = 's32[1]{0}', space=sflag, size = 0x4, scoped, tag = 'scoped memory for tpu_custom_call.1']
    #allocation9 [shape = 'u8[196608]{0}', space=vmem, size = 0x30000, scoped, tag = 'input window, operand 2, single buffered']
    #allocation10 [shape = 'u8[98304]{0}', space=vmem, size = 0x18000, scoped, tag = 'input window, operand 4, single buffered']
    #allocation11 [shape = 's32[1]{0}', space=sflag, size = 0x4, scoped, tag = 'scoped memory for tpu_custom_call.1']
    #allocation12 [shape = 'u8[98304]{0}', space=vmem, size = 0x18000, scoped, tag = 'input window, operand 6, single buffered']
    #allocation13 [shape = 'u8[393216]{0}', space=vmem, size = 0x60000, scoped, tag = 'input window, operand 8, single buffered']
    #allocation14 [shape = 's32[1]{0}', space=sflag, size = 0x4, scoped, tag = 'scoped memory for tpu_custom_call.1']
    #allocation15 [shape = 'u8[65536]{0}', space=vmem, size = 0x10000, scoped, tag = 'input window, operand 10, single buffered']
    #allocation16 [shape = 'u8[32768]{0}', space=vmem, size = 0x8000, scoped, tag = 'input window, operand 12, single buffered']
    #allocation17 [shape = 's32[1]{0}', space=sflag, size = 0x4, scoped, tag = 'scoped memory for tpu_custom_call.1']
    #allocation18 [shape = 'u8[512]{0}', space=smem, size = 0x200, scoped, tag = 'output window, operand 0, single buffered']
    #allocation19 [shape = 'u8[512]{0}', space=smem, size = 0x200, scoped, tag = 'output window, operand 1, single buffered']
    #allocation20 [shape = 's32[1]{0}', space=sflag, size = 0x4, scoped, tag = 'scoped memory for tpu_custom_call.1']
    %21 = vsyncpa [#allocation5], 0
    %22 = vsyncpa [#allocation8], 0
    %23 = vsyncpa [#allocation11], 0
    %24 = vsyncpa [#allocation14], 0
    %25 = vsyncpa [#allocation17], 0
    %26 = vsyncpa [#allocation6], 0
    %27 = vsyncpa [#allocation20], 0
    // Predicated region
    $region2: #{tpu_custom_call.1} parent=1 // pred_check
      _
    $region3: #{tpu_custom_call.1} parent=1 // pred_check_branch
      %29 = sbr.rel (0) target = $region5
    $region4: #{tpu_custom_call.1} parent=1 // pred_region
      %s31 = ssub.s32 64, 64
      %32 = vsyncadd [#allocation5], %s31
      %s34 = sshll.u32 [#allocation4], 4
      %s35 = int_to_ptr.vmem [resolvable:$true] %s34
      %37 = dma.hbm_to_vmem [thread:$0]  %s0, 64, %s35, [#allocation5]
    $region5: #{tpu_custom_call.1} parent=1 // pred_fallthru
      _
    // Predicated region
    $region6: #{tpu_custom_call.1} parent=1 // pred_check
      _
    $region7: #{tpu_custom_call.1} parent=1 // pred_check_branch
      %39 = sbr.rel (0) target = $region9
    $region8: #{tpu_custom_call.1} parent=1 // pred_region
      %s41 = ssub.s32 1024, 1024
      %42 = vsyncadd [#allocation8], %s41
      %s43 = sshll.u32 [#allocation7], 4
      %s44 = int_to_ptr.vmem [resolvable:$true] %s43
      %49 = dma.hbm_to_vmem [thread:$0]  %s1, 1024, %s44, [#allocation8], 64, 64, 4
    $region9: #{tpu_custom_call.1} parent=1 // pred_fallthru
      _
    // Predicated region
    $region10: #{tpu_custom_call.1} parent=1 // pred_check
      _
    $region11: #{tpu_custom_call.1} parent=1 // pred_check_branch
      %51 = sbr.rel (0) target = $region13
    $region12: #{tpu_custom_call.1} parent=1 // pred_region
      %s53 = ssub.s32 6144, 6144
      %54 = vsyncadd [#allocation8], %s53
      %s55 = sshll.u32 [#allocation9], 4
      %s56 = int_to_ptr.vmem [resolvable:$true] %s55
      %61 = dma.hbm_to_vmem [thread:$0]  %s2, 6144, %s56, [#allocation8], 384, 384, 24
    $region13: #{tpu_custom_call.1} parent=1 // pred_fallthru
      _
    // Predicated region
    $region14: #{tpu_custom_call.1} parent=1 // pred_check
      _
    $region15: #{tpu_custom_call.1} parent=1 // pred_check_branch
      %63 = sbr.rel (0) target = $region17
    $region16: #{tpu_custom_call.1} parent=1 // pred_region
      _
    $region17: #{tpu_custom_call.1} parent=1 // pred_fallthru
      _
    // Predicated region
    $region18: #{tpu_custom_call.1} parent=1 // pred_check
      _
    $region19: #{tpu_custom_call.1} parent=1 // pred_check_branch
      %65 = sbr.rel (0) target = $region21
    $region20: #{tpu_custom_call.1} parent=1 // pred_region
      %s67 = ssub.s32 3072, 3072
      %68 = vsyncadd [#allocation11], %s67
      %s69 = sshll.u32 [#allocation10], 4
      %s70 = int_to_ptr.vmem [resolvable:$true] %s69
      %75 = dma.hbm_to_vmem [thread:$0]  %s4, 3072, %s70, [#allocation11], 192, 192, 12
    $region21: #{tpu_custom_call.1} parent=1 // pred_fallthru
      _
    // Predicated region
    $region22: #{tpu_custom_call.1} parent=1 // pred_check
      _
    $region23: #{tpu_custom_call.1} parent=1 // pred_check_branch
      %77 = sbr.rel (0) target = $region25
    $region24: #{tpu_custom_call.1} parent=1 // pred_region
      _
    $region25: #{tpu_custom_call.1} parent=1 // pred_fallthru
      _
    // Predicated region
    $region26: #{tpu_custom_call.1} parent=1 // pred_check
      _
    $region27: #{tpu_custom_call.1} parent=1 // pred_check_branch
      %79 = sbr.rel (0) target = $region29
    $region28: #{tpu_custom_call.1} parent=1 // pred_region
      %s81 = ssub.s32 3072, 3072
      %82 = vsyncadd [#allocation11], %s81
      %s83 = sshll.u32 [#allocation12], 4
      %s84 = int_to_ptr.vmem [resolvable:$true] %s83
      %89 = dma.hbm_to_vmem [thread:$0]  %s6, 3072, %s84, [#allocation11], 192, 192, 12
    $region29: #{tpu_custom_call.1} parent=1 // pred_fallthru
      _
    // Predicated region
    $region30: #{tpu_custom_call.1} parent=1 // pred_check
      _
    $region31: #{tpu_custom_call.1} parent=1 // pred_check_branch
      %91 = sbr.rel (0) target = $region33
    $region32: #{tpu_custom_call.1} parent=1 // pred_region
      _
    $region33: #{tpu_custom_call.1} parent=1 // pred_fallthru
      _
    // Predicated region
    $region34: #{tpu_custom_call.1} parent=1 // pred_check
      _
    $region35: #{tpu_custom_call.1} parent=1 // pred_check_branch
      %93 = sbr.rel (0) target = $region37
    $region36: #{tpu_custom_call.1} parent=1 // pred_region
      %s95 = ssub.s32 12288, 12288
      %96 = vsyncadd [#allocation14], %s95
      %s97 = sshll.u32 [#allocation13], 4
      %s98 = int_to_ptr.vmem [resolvable:$true] %s97
      %103 = dma.hbm_to_vmem [thread:$0]  %s8, 12288, %s98, [#allocation14], 384, 384, 24
    $region37: #{tpu_custom_call.1} parent=1 // pred_fallthru
      _
    // Predicated region
    $region38: #{tpu_custom_call.1} parent=1 // pred_check
      _
    $region39: #{tpu_custom_call.1} parent=1 // pred_check_branch
      %105 = sbr.rel (0) target = $region41
    $region40: #{tpu_custom_call.1} parent=1 // pred_region
      _
    $region41: #{tpu_custom_call.1} parent=1 // pred_fallthru
      _
    // Predicated region
    $region42: #{tpu_custom_call.1} parent=1 // pred_check
      _
    $region43: #{tpu_custom_call.1} parent=1 // pred_check_branch
      %107 = sbr.rel (0) target = $region45
    $region44: #{tpu_custom_call.1} parent=1 // pred_region
      %s109 = ssub.s32 2048, 2048
      %110 = vsyncadd [#allocation14], %s109
      %s111 = sshll.u32 [#allocation15], 4
      %s112 = int_to_ptr.vmem [resolvable:$true] %s111
      %117 = dma.hbm_to_vmem [thread:$0]  %s10, 2048, %s112, [#allocation14], 64, 64, 4
    $region45: #{tpu_custom_call.1} parent=1 // pred_fallthru
      _
    // Predicated region
    $region46: #{tpu_custom_call.1} parent=1 // pred_check
      _
    $region47: #{tpu_custom_call.1} parent=1 // pred_check_branch
      %119 = sbr.rel (0) target = $region49
    $region48: #{tpu_custom_call.1} parent=1 // pred_region
      _
    $region49: #{tpu_custom_call.1} parent=1 // pred_fallthru
      _
    // Predicated region
    $region50: #{tpu_custom_call.1} parent=1 // pred_check
      _
    $region51: #{tpu_custom_call.1} parent=1 // pred_check_branch
      %121 = sbr.rel (0) target = $region53
    $region52: #{tpu_custom_call.1} parent=1 // pred_region
      %s123 = ssub.s32 1024, 1024
      %124 = vsyncadd [#allocation17], %s123
      %s125 = sshll.u32 [#allocation16], 4
      %s126 = int_to_ptr.vmem [resolvable:$true] %s125
      %131 = dma.hbm_to_vmem [thread:$0]  %s12, 1024, %s126, [#allocation17], 64, 64, 4
    $region53: #{tpu_custom_call.1} parent=1 // pred_fallthru
      _
    // Predicated region
    $region54: #{tpu_custom_call.1} parent=1 // pred_check
      _
    $region55: #{tpu_custom_call.1} parent=1 // pred_check_branch
      %133 = sbr.rel (0) target = $region57
    $region56: #{tpu_custom_call.1} parent=1 // pred_region
      _
    $region57: #{tpu_custom_call.1} parent=1 // pred_fallthru
      _
    // Predicated region
    $region58: #{tpu_custom_call.1} parent=1 // pred_check
      _
    $region59: #{tpu_custom_call.1} parent=1 // pred_check_branch
      %135 = sbr.rel (0) target = $region61
    $region60: #{tpu_custom_call.1} parent=1 // pred_region
      %136 = dma.done [#allocation5], 64
    $region61: #{tpu_custom_call.1} parent=1 // pred_fallthru
      _
    // Predicated region
    $region62: #{tpu_custom_call.1} parent=1 // pred_check
      _
    $region63: #{tpu_custom_call.1} parent=1 // pred_check_branch
      %138 = sbr.rel (0) target = $region65
    $region64: #{tpu_custom_call.1} parent=1 // pred_region
      %139 = dma.done [#allocation8], 1024
    $region65: #{tpu_custom_call.1} parent=1 // pred_fallthru
      _
    // Predicated region
    $region66: #{tpu_custom_call.1} parent=1 // pred_check
      _
    $region67: #{tpu_custom_call.1} parent=1 // pred_check_branch
      %141 = sbr.rel (0) target = $region69
    $region68: #{tpu_custom_call.1} parent=1 // pred_region
      %142 = dma.done [#allocation8], 6144
    $region69: #{tpu_custom_call.1} parent=1 // pred_fallthru
      _
    // Predicated region
    $region70: #{tpu_custom_call.1} parent=1 // pred_check
      _
    $region71: #{tpu_custom_call.1} parent=1 // pred_check_branch
      %144 = sbr.rel (0) target = $region73
    $region72: #{tpu_custom_call.1} parent=1 // pred_region
      %145 = dma.done [#allocation11], 3072
    $region73: #{tpu_custom_call.1} parent=1 // pred_fallthru
      _
    // Predicated region
    $region74: #{tpu_custom_call.1} parent=1 // pred_check
      _
    $region75: #{tpu_custom_call.1} parent=1 // pred_check_branch
      %147 = sbr.rel (0) target = $region77
    $region76: #{tpu_custom_call.1} parent=1 // pred_region
      %148 = dma.done [#allocation11], 3072
    $region77: #{tpu_custom_call.1} parent=1 // pred_fallthru
      _
    // Predicated region
    $region78: #{tpu_custom_call.1} parent=1 // pred_check
      _
    $region79: #{tpu_custom_call.1} parent=1 // pred_check_branch
      %150 = sbr.rel (0) target = $region81
    $region80: #{tpu_custom_call.1} parent=1 // pred_region
      %151 = dma.done [#allocation14], 12288
    $region81: #{tpu_custom_call.1} parent=1 // pred_fallthru
      _
    // Predicated region
    $region82: #{tpu_custom_call.1} parent=1 // pred_check
      _
    $region83: #{tpu_custom_call.1} parent=1 // pred_check_branch
      %153 = sbr.rel (0) target = $region85
    $region84: #{tpu_custom_call.1} parent=1 // pred_region
      %154 = dma.done [#allocation14], 2048
    $region85: #{tpu_custom_call.1} parent=1 // pred_fallthru
      _
    // Predicated region
    $region86: #{tpu_custom_call.1} parent=1 // pred_check
      _
    $region87: #{tpu_custom_call.1} parent=1 // pred_check_branch
      %156 = sbr.rel (0) target = $region89
    $region88: #{tpu_custom_call.1} parent=1 // pred_region
      %157 = dma.done [#allocation17], 1024
    $region89: #{tpu_custom_call.1} parent=1 // pred_fallthru
      _
    %v159 = vld [vmem:[#allocation4] sm:$0xf]
    %v160 = vld [vmem:[#allocation9] sm:$0xff]
    %v161 = vld [vmem:[#allocation9 + $0x8] sm:$0xff]
    %v162 = vld [vmem:[#allocation9 + $0x10] sm:$0xff]
    %v163 = vld [vmem:[#allocation9 + $0x18] sm:$0xff]
    %v164 = vld [vmem:[#allocation9 + $0x20] sm:$0xff]
    %v165 = vld [vmem:[#allocation9 + $0x28] sm:$0xff]
    %v166 = vld [vmem:[#allocation9 + $0x30] sm:$0xff]
    %v167 = vld [vmem:[#allocation9 + $0x38] sm:$0xff]
    %v168 = vld [vmem:[#allocation9 + $0x40] sm:$0xff]
    %v169 = vld [vmem:[#allocation9 + $0x48] sm:$0xff]
    %v170 = vld [vmem:[#allocation9 + $0x50] sm:$0xff]
    %v171 = vld [vmem:[#allocation9 + $0x58] sm:$0xff]
    %v172 = vld [vmem:[#allocation9 + $0x60] sm:$0xff]
    %v173 = vld [vmem:[#allocation9 + $0x68] sm:$0xff]
    %v174 = vld [vmem:[#allocation9 + $0x70] sm:$0xff]
    %v175 = vld [vmem:[#allocation9 + $0x78] sm:$0xff]
    %v176 = vld [vmem:[#allocation9 + $0x80] sm:$0xff]
    %v177 = vld [vmem:[#allocation9 + $0x88] sm:$0xff]
    %v178 = vld [vmem:[#allocation9 + $0x90] sm:$0xff]
    %v179 = vld [vmem:[#allocation9 + $0x98] sm:$0xff]
    %v180 = vld [vmem:[#allocation9 + $0xa0] sm:$0xff]
    %v181 = vld [vmem:[#allocation9 + $0xa8] sm:$0xff]
    %v182 = vld [vmem:[#allocation9 + $0xb0] sm:$0xff]
    %v183 = vld [vmem:[#allocation9 + $0xb8] sm:$0xff]
    %v184 = vld [vmem:[#allocation9 + $0xc0] sm:$0xff]
    %v185 = vld [vmem:[#allocation9 + $0xc8] sm:$0xff]
    %v186 = vld [vmem:[#allocation9 + $0xd0] sm:$0xff]
    %v187 = vld [vmem:[#allocation9 + $0xd8] sm:$0xff]
    %v188 = vld [vmem:[#allocation9 + $0xe0] sm:$0xff]
    %v189 = vld [vmem:[#allocation9 + $0xe8] sm:$0xff]
    %v190 = vld [vmem:[#allocation9 + $0xf0] sm:$0xff]
    %v191 = vld [vmem:[#allocation9 + $0xf8] sm:$0xff]
    %v192 = vld [vmem:[#allocation9 + $0x100] sm:$0xff]
    %v193 = vld [vmem:[#allocation9 + $0x108] sm:$0xff]
    %v194 = vld [vmem:[#allocation9 + $0x110] sm:$0xff]
    %v195 = vld [vmem:[#allocation9 + $0x118] sm:$0xff]
    %v196 = vld [vmem:[#allocation9 + $0x120] sm:$0xff]
    %v197 = vld [vmem:[#allocation9 + $0x128] sm:$0xff]
    %v198 = vld [vmem:[#allocation9 + $0x130] sm:$0xff]
    %v199 = vld [vmem:[#allocation9 + $0x138] sm:$0xff]
    %v200 = vld [vmem:[#allocation9 + $0x140] sm:$0xff]
    %v201 = vld [vmem:[#allocation9 + $0x148] sm:$0xff]
    %v202 = vld [vmem:[#allocation9 + $0x150] sm:$0xff]
    %v203 = vld [vmem:[#allocation9 + $0x158] sm:$0xff]
    %v204 = vld [vmem:[#allocation9 + $0x160] sm:$0xff]
    %v205 = vld [vmem:[#allocation9 + $0x168] sm:$0xff]
    %v206 = vld [vmem:[#allocation9 + $0x170] sm:$0xff]
    %v207 = vld [vmem:[#allocation9 + $0x178] sm:$0xff]
    %v208 = vld [vmem:[%s3] sm:$0x3f]
    %v210 = vlaneseq
    %v211 = vshrl.u32 %v210, 7
    %v212 = vsub.s32 0, %v211
    %v213 = vrot.slane %v208, %v212
    %v214 = vlaneseq
    %v215 = vshrl.u32 %v214, 7
    %v216 = vsub.s32 1, %v215
    %v217 = vrot.slane %v208, %v216
    %v218 = vlaneseq
    %v219 = vshrl.u32 %v218, 7
    %v220 = vsub.s32 2, %v219
    %v221 = vrot.slane %v208, %v220
    %v222 = vlaneseq
    %v223 = vshrl.u32 %v222, 7
    %v224 = vsub.s32 3, %v223
    %v225 = vrot.slane %v208, %v224
    %v226 = vlaneseq
    %v227 = vshrl.u32 %v226, 7
    %v228 = vsub.s32 4, %v227
    %v229 = vrot.slane %v208, %v228
    %v230 = vlaneseq
    %v231 = vshrl.u32 %v230, 7
    %v232 = vsub.s32 5, %v231
    %v233 = vrot.slane %v208, %v232
    %v288 = vunpack.c.l.b16 %v160
    %v289 = vunpack.c.h.b16 %v160
    %v290 = vunpack.c.l.b16 %v161
    %v291 = vunpack.c.h.b16 %v161
    %v292 = vunpack.c.l.b16 %v162
    %v293 = vunpack.c.h.b16 %v162
    %v294 = vunpack.c.l.b16 %v163
    %v295 = vunpack.c.h.b16 %v163
    %v296 = vunpack.c.l.b16 %v164
    %v297 = vunpack.c.h.b16 %v164
    %v298 = vunpack.c.l.b16 %v165
    %v299 = vunpack.c.h.b16 %v165
    %v300 = vunpack.c.l.b16 %v166
    %v301 = vunpack.c.h.b16 %v166
    %v302 = vunpack.c.l.b16 %v167
    %v303 = vunpack.c.h.b16 %v167
    %v304 = vunpack.c.l.b16 %v168
    %v305 = vunpack.c.h.b16 %v168
    %v306 = vunpack.c.l.b16 %v169
    %v307 = vunpack.c.h.b16 %v169
    %v308 = vunpack.c.l.b16 %v170
    %v309 = vunpack.c.h.b16 %v170
    %v310 = vunpack.c.l.b16 %v171
    %v311 = vunpack.c.h.b16 %v171
    %v312 = vunpack.c.l.b16 %v172
    %v313 = vunpack.c.h.b16 %v172
    %v314 = vunpack.c.l.b16 %v173
    %v315 = vunpack.c.h.b16 %v173
    %v316 = vunpack.c.l.b16 %v174
    %v317 = vunpack.c.h.b16 %v174
    %v318 = vunpack.c.l.b16 %v175
    %v319 = vunpack.c.h.b16 %v175
    %v320 = vunpack.c.l.b16 %v176
    %v321 = vunpack.c.h.b16 %v176
    %v322 = vunpack.c.l.b16 %v177
    %v323 = vunpack.c.h.b16 %v177
    %v324 = vunpack.c.l.b16 %v178
    %v325 = vunpack.c.h.b16 %v178
    %v326 = vunpack.c.l.b16 %v179
    %v327 = vunpack.c.h.b16 %v179
    %v328 = vunpack.c.l.b16 %v180
    %v329 = vunpack.c.h.b16 %v180
    %v330 = vunpack.c.l.b16 %v181
    %v331 = vunpack.c.h.b16 %v181
    %v332 = vunpack.c.l.b16 %v182
    %v333 = vunpack.c.h.b16 %v182
    %v334 = vunpack.c.l.b16 %v183
    %v335 = vunpack.c.h.b16 %v183
    %v336 = vunpack.c.l.b16 %v184
    %v337 = vunpack.c.h.b16 %v184
    %v338 = vunpack.c.l.b16 %v185
    %v339 = vunpack.c.h.b16 %v185
    %v340 = vunpack.c.l.b16 %v186
    %v341 = vunpack.c.h.b16 %v186
    %v342 = vunpack.c.l.b16 %v187
    %v343 = vunpack.c.h.b16 %v187
    %v344 = vunpack.c.l.b16 %v188
    %v345 = vunpack.c.h.b16 %v188
    %v346 = vunpack.c.l.b16 %v189
    %v347 = vunpack.c.h.b16 %v189
    %v348 = vunpack.c.l.b16 %v190
    %v349 = vunpack.c.h.b16 %v190
    %v350 = vunpack.c.l.b16 %v191
    %v351 = vunpack.c.h.b16 %v191
    %v352 = vunpack.c.l.b16 %v192
    %v353 = vunpack.c.h.b16 %v192
    %v354 = vunpack.c.l.b16 %v193
    %v355 = vunpack.c.h.b16 %v193
    %v356 = vunpack.c.l.b16 %v194
    %v357 = vunpack.c.h.b16 %v194
    %v358 = vunpack.c.l.b16 %v195
    %v359 = vunpack.c.h.b16 %v195
    %v360 = vunpack.c.l.b16 %v196
    %v361 = vunpack.c.h.b16 %v196
    %v362 = vunpack.c.l.b16 %v197
    %v363 = vunpack.c.h.b16 %v197
    %v364 = vunpack.c.l.b16 %v198
    %v365 = vunpack.c.h.b16 %v198
    %v366 = vunpack.c.l.b16 %v199
    %v367 = vunpack.c.h.b16 %v199
    %v368 = vunpack.c.l.b16 %v200
    %v369 = vunpack.c.h.b16 %v200
    %v370 = vunpack.c.l.b16 %v201
    %v371 = vunpack.c.h.b16 %v201
    %v372 = vunpack.c.l.b16 %v202
    %v373 = vunpack.c.h.b16 %v202
    %v374 = vunpack.c.l.b16 %v203
    %v375 = vunpack.c.h.b16 %v203
    %v376 = vunpack.c.l.b16 %v204
    %v377 = vunpack.c.h.b16 %v204
    %v378 = vunpack.c.l.b16 %v205
    %v379 = vunpack.c.h.b16 %v205
    %v380 = vunpack.c.l.b16 %v206
    %v381 = vunpack.c.h.b16 %v206
    %v382 = vunpack.c.l.b16 %v207
    %v383 = vunpack.c.h.b16 %v207
    %v384 = vpack.c.b16 %v294, %v288
    %v385 = vpack.c.b16 %v295, %v289
    %v386 = vpack.c.b16 %v296, %v290
    %v387 = vpack.c.b16 %v297, %v291
    %v388 = vpack.c.b16 %v298, %v292
    %v389 = vpack.c.b16 %v299, %v293
    %v390 = vpack.c.b16 %v306, %v300
    %v391 = vpack.c.b16 %v307, %v301
    %v392 = vpack.c.b16 %v308, %v302
    %v393 = vpack.c.b16 %v309, %v303
    %v394 = vpack.c.b16 %v310, %v304
    %v395 = vpack.c.b16 %v311, %v305
    %v396 = vpack.c.b16 %v318, %v312
    %v397 = vpack.c.b16 %v319, %v313
    %v398 = vpack.c.b16 %v320, %v314
    %v399 = vpack.c.b16 %v321, %v315
    %v400 = vpack.c.b16 %v322, %v316
    %v401 = vpack.c.b16 %v323, %v317
    %v402 = vpack.c.b16 %v330, %v324
    %v403 = vpack.c.b16 %v331, %v325
    %v404 = vpack.c.b16 %v332, %v326
    %v405 = vpack.c.b16 %v333, %v327
    %v406 = vpack.c.b16 %v334, %v328
    %v407 = vpack.c.b16 %v335, %v329
    %v408 = vpack.c.b16 %v342, %v336
    %v409 = vpack.c.b16 %v343, %v337
    %v410 = vpack.c.b16 %v344, %v338
    %v411 = vpack.c.b16 %v345, %v339
    %v412 = vpack.c.b16 %v346, %v340
    %v413 = vpack.c.b16 %v347, %v341
    %v414 = vpack.c.b16 %v354, %v348
    %v415 = vpack.c.b16 %v355, %v349
    %v416 = vpack.c.b16 %v356, %v350
    %v417 = vpack.c.b16 %v357, %v351
    %v418 = vpack.c.b16 %v358, %v352
    %v419 = vpack.c.b16 %v359, %v353
    %v420 = vpack.c.b16 %v366, %v360
    %v421 = vpack.c.b16 %v367, %v361
    %v422 = vpack.c.b16 %v368, %v362
    %v423 = vpack.c.b16 %v369, %v363
    %v424 = vpack.c.b16 %v370, %v364
    %v425 = vpack.c.b16 %v371, %v365
    %v426 = vpack.c.b16 %v378, %v372
    %v427 = vpack.c.b16 %v379, %v373
    %v428 = vpack.c.b16 %v380, %v374
    %v429 = vpack.c.b16 %v381, %v375
    %v430 = vpack.c.b16 %v382, %v376
    %v431 = vpack.c.b16 %v383, %v377
    %480 = vmatprep.subr.bf16.mxu0 %v385
    %481 = vmatpush1.bf16.msra.mxu0 %v384
    %482 = vmatprep.subr.bf16.mxu0 %v391
    %483 = vmatpush1.bf16.msra.mxu0 %v390
    %484 = vmatprep.subr.bf16.mxu0 %v397
    %485 = vmatpush1.bf16.msra.mxu0 %v396
    %486 = vmatprep.subr.bf16.mxu0 %v403
    %487 = vmatpush1.bf16.msra.mxu0 %v402
    %488 = vmatprep.subr.bf16.mxu0 %v409
    %489 = vmatpush1.bf16.msra.mxu0 %v408
    %490 = vmatprep.subr.bf16.mxu0 %v415
    %491 = vmatpush1.bf16.msra.mxu0 %v414
    %492 = vmatprep.subr.bf16.mxu0 %v421
    %493 = vmatpush1.bf16.msra.mxu0 %v420
    %494 = vmatprep.subr.bf16.mxu0 %v427
    %495 = vmatpush1.bf16.msra.mxu0 %v426
    %496 = vmatprep.subr.bf16.mxu0 0
    %497 = vmatpush1.bf16.msra.mxu0 0
    %498 = vmatprep.subr.bf16.mxu0 0
    %499 = vmatpush1.bf16.msra.mxu0 0
    %500 = vmatprep.subr.bf16.mxu0 0
    %501 = vmatpush1.bf16.msra.mxu0 0
    %502 = vmatprep.subr.bf16.mxu0 0
    %503 = vmatpush1.bf16.msra.mxu0 0
    %504 = vmatprep.subr.bf16.mxu0 0
    %505 = vmatpush1.bf16.msra.mxu0 0
    %506 = vmatprep.subr.bf16.mxu0 0
    %507 = vmatpush1.bf16.msra.mxu0 0
    %508 = vmatprep.subr.bf16.mxu0 0
    %509 = vmatpush1.bf16.msra.mxu0 0
    %510 = vmatprep.subr.bf16.mxu0 0
    %511 = vmatpush1.bf16.msra.mxu0 0
    %512 = vmatprep.mubr.bf16.mxu0 0
    %513 = vmatmul.mubr.bf16.gmra.mrb[0].mxu0 %v159
    %v514 = vpop.f32.mrb[0].mxu0
    %v515 = vadd.f32 %v213, %v514
    %v516 = vpop.f32.mrb[0].mxu0
    %v517 = vadd.f32 %v217, %v516
    %v518 = vpop.f32.mrb[0].mxu0
    %v519 = vpop.f32.mrb[0].mxu0
    %520 = vdwg.mxu0
    %521 = vmatprep.subr.bf16.mxu0 %v387
    %522 = vmatpush1.bf16.msra.mxu0 %v386
    %523 = vmatprep.subr.bf16.mxu0 %v393
    %524 = vmatpush1.bf16.msra.mxu0 %v392
    %525 = vmatprep.subr.bf16.mxu0 %v399
    %526 = vmatpush1.bf16.msra.mxu0 %v398
    %527 = vmatprep.subr.bf16.mxu0 %v405
    %528 = vmatpush1.bf16.msra.mxu0 %v404
    %529 = vmatprep.subr.bf16.mxu0 %v411
    %530 = vmatpush1.bf16.msra.mxu0 %v410
    %531 = vmatprep.subr.bf16.mxu0 %v417
    %532 = vmatpush1.bf16.msra.mxu0 %v416
    %533 = vmatprep.subr.bf16.mxu0 %v423
    %534 = vmatpush1.bf16.msra.mxu0 %v422
    %535 = vmatprep.subr.bf16.mxu0 %v429
    %536 = vmatpush1.bf16.msra.mxu0 %v428
    %537 = vmatprep.subr.bf16.mxu0 0
    %538 = vmatpush1.bf16.msra.mxu0 0
    %539 = vmatprep.subr.bf16.mxu0 0
    %540 = vmatpush1.bf16.msra.mxu0 0
    %541 = vmatprep.subr.bf16.mxu0 0
    %542 = vmatpush1.bf16.msra.mxu0 0
    %543 = vmatprep.subr.bf16.mxu0 0
    %544 = vmatpush1.bf16.msra.mxu0 0
    %545 = vmatprep.subr.bf16.mxu0 0
    %546 = vmatpush1.bf16.msra.mxu0 0
    %547 = vmatprep.subr.bf16.mxu0 0
    %548 = vmatpush1.bf16.msra.mxu0 0
    %549 = vmatprep.subr.bf16.mxu0 0
    %550 = vmatpush1.bf16.msra.mxu0 0
    %551 = vmatprep.subr.bf16.mxu0 0
    %552 = vmatpush1.bf16.msra.mxu0 0
    %553 = vmatprep.mubr.bf16.mxu0 0
    %554 = vmatmul.mubr.bf16.gmra.mrb[0].mxu0 %v159
    %v555 = vpop.f32.mrb[0].mxu0
    %v556 = vadd.f32 %v221, %v555
    %v557 = vpop.f32.mrb[0].mxu0
    %v558 = vadd.f32 %v225, %v557
    %v559 = vpop.f32.mrb[0].mxu0
    %v560 = vpop.f32.mrb[0].mxu0
    %561 = vdwg.mxu0
    %562 = vmatprep.subr.bf16.mxu0 %v389
    %563 = vmatpush1.bf16.msra.mxu0 %v388
    %564 = vmatprep.subr.bf16.mxu0 %v395
    %565 = vmatpush1.bf16.msra.mxu0 %v394
    %566 = vmatprep.subr.bf16.mxu0 %v401
    %567 = vmatpush1.bf16.msra.mxu0 %v400
    %568 = vmatprep.subr.bf16.mxu0 %v407
    %569 = vmatpush1.bf16.msra.mxu0 %v406
    %570 = vmatprep.subr.bf16.mxu0 %v413
    %571 = vmatpush1.bf16.msra.mxu0 %v412
    %572 = vmatprep.subr.bf16.mxu0 %v419
    %573 = vmatpush1.bf16.msra.mxu0 %v418
    %574 = vmatprep.subr.bf16.mxu0 %v425
    %575 = vmatpush1.bf16.msra.mxu0 %v424
    %576 = vmatprep.subr.bf16.mxu0 %v431
    %577 = vmatpush1.bf16.msra.mxu0 %v430
    %578 = vmatprep.subr.bf16.mxu0 0
    %579 = vmatpush1.bf16.msra.mxu0 0
    %580 = vmatprep.subr.bf16.mxu0 0
    %581 = vmatpush1.bf16.msra.mxu0 0
    %582 = vmatprep.subr.bf16.mxu0 0
    %583 = vmatpush1.bf16.msra.mxu0 0
    %584 = vmatprep.subr.bf16.mxu0 0
    %585 = vmatpush1.bf16.msra.mxu0 0
    %586 = vmatprep.subr.bf16.mxu0 0
    %587 = vmatpush1.bf16.msra.mxu0 0
    %588 = vmatprep.subr.bf16.mxu0 0
    %589 = vmatpush1.bf16.msra.mxu0 0
    %590 = vmatprep.subr.bf16.mxu0 0
    %591 = vmatpush1.bf16.msra.mxu0 0
    %592 = vmatprep.subr.bf16.mxu0 0
    %593 = vmatpush1.bf16.msra.mxu0 0
    %594 = vmatprep.mubr.bf16.mxu0 0
    %595 = vmatmul.mubr.bf16.gmra.mrb[0].mxu0 %v159
    %v596 = vpop.f32.mrb[0].mxu0
    %v597 = vadd.f32 %v229, %v596
    %v598 = vpop.f32.mrb[0].mxu0
    %v599 = vadd.f32 %v233, %v598
    %v600 = vpop.f32.mrb[0].mxu0
    %v601 = vpop.f32.mrb[0].mxu0
    %602 = vdwg.mxu0
    %v603 = vld [vmem:[#allocation10] sm:$0xff]
    %v604 = vld [vmem:[#allocation10 + $0x8] sm:$0xf]
    %v605 = vld [vmem:[#allocation10 + $0xc] sm:$0xff]
    %v606 = vld [vmem:[#allocation10 + $0x14] sm:$0xf]
    %v607 = vld [vmem:[#allocation10 + $0x18] sm:$0xff]
    %v608 = vld [vmem:[#allocation10 + $0x20] sm:$0xf]
    %v609 = vld [vmem:[#allocation10 + $0x24] sm:$0xff]
    %v610 = vld [vmem:[#allocation10 + $0x2c] sm:$0xf]
    %v611 = vld [vmem:[#allocation10 + $0x30] sm:$0xff]
    %v612 = vld [vmem:[#allocation10 + $0x38] sm:$0xf]
    %v613 = vld [vmem:[#allocation10 + $0x3c] sm:$0xff]
    %v614 = vld [vmem:[#allocation10 + $0x44] sm:$0xf]
    %v615 = vld [vmem:[#allocation10 + $0x48] sm:$0xff]
    %v616 = vld [vmem:[#allocation10 + $0x50] sm:$0xf]
    %v617 = vld [vmem:[#allocation10 + $0x54] sm:$0xff]
    %v618 = vld [vmem:[#allocation10 + $0x5c] sm:$0xf]
    %v619 = vld [vmem:[#allocation10 + $0x60] sm:$0xff]
    %v620 = vld [vmem:[#allocation10 + $0x68] sm:$0xf]
    %v621 = vld [vmem:[#allocation10 + $0x6c] sm:$0xff]
    %v622 = vld [vmem:[#allocation10 + $0x74] sm:$0xf]
    %v623 = vld [vmem:[#allocation10 + $0x78] sm:$0xff]
    %v624 = vld [vmem:[#allocation10 + $0x80] sm:$0xf]
    %v625 = vld [vmem:[#allocation10 + $0x84] sm:$0xff]
    %v626 = vld [vmem:[#allocation10 + $0x8c] sm:$0xf]
    %v627 = vld [vmem:[#allocation10 + $0x90] sm:$0xff]
    %v628 = vld [vmem:[#allocation10 + $0x98] sm:$0xf]
    %v629 = vld [vmem:[#allocation10 + $0x9c] sm:$0xff]
    %v630 = vld [vmem:[#allocation10 + $0xa4] sm:$0xf]
    %v631 = vld [vmem:[#allocation10 + $0xa8] sm:$0xff]
    %v632 = vld [vmem:[#allocation10 + $0xb0] sm:$0xf]
    %v633 = vld [vmem:[#allocation10 + $0xb4] sm:$0xff]
    %v634 = vld [vmem:[#allocation10 + $0xbc] sm:$0xf]
    %v635 = vld [vmem:[%s5] sm:$0x7]
    %v636 = vld [vmem:[#allocation12] sm:$0xff]
    %v637 = vld [vmem:[#allocation12 + $0x8] sm:$0xf]
    %v638 = vld [vmem:[#allocation12 + $0xc] sm:$0xff]
    %v639 = vld [vmem:[#allocation12 + $0x14] sm:$0xf]
    %v640 = vld [vmem:[#allocation12 + $0x18] sm:$0xff]
    %v641 = vld [vmem:[#allocation12 + $0x20] sm:$0xf]
    %v642 = vld [vmem:[#allocation12 + $0x24] sm:$0xff]
    %v643 = vld [vmem:[#allocation12 + $0x2c] sm:$0xf]
    %v644 = vld [vmem:[#allocation12 + $0x30] sm:$0xff]
    %v645 = vld [vmem:[#allocation12 + $0x38] sm:$0xf]
    %v646 = vld [vmem:[#allocation12 + $0x3c] sm:$0xff]
    %v647 = vld [vmem:[#allocation12 + $0x44] sm:$0xf]
    %v648 = vld [vmem:[#allocation12 + $0x48] sm:$0xff]
    %v649 = vld [vmem:[#allocation12 + $0x50] sm:$0xf]
    %v650 = vld [vmem:[#allocation12 + $0x54] sm:$0xff]
    %v651 = vld [vmem:[#allocation12 + $0x5c] sm:$0xf]
    %v652 = vld [vmem:[#allocation12 + $0x60] sm:$0xff]
    %v653 = vld [vmem:[#allocation12 + $0x68] sm:$0xf]
    %v654 = vld [vmem:[#allocation12 + $0x6c] sm:$0xff]
    %v655 = vld [vmem:[#allocation12 + $0x74] sm:$0xf]
    %v656 = vld [vmem:[#allocation12 + $0x78] sm:$0xff]
    %v657 = vld [vmem:[#allocation12 + $0x80] sm:$0xf]
    %v658 = vld [vmem:[#allocation12 + $0x84] sm:$0xff]
    %v659 = vld [vmem:[#allocation12 + $0x8c] sm:$0xf]
    %v660 = vld [vmem:[#allocation12 + $0x90] sm:$0xff]
    %v661 = vld [vmem:[#allocation12 + $0x98] sm:$0xf]
    %v662 = vld [vmem:[#allocation12 + $0x9c] sm:$0xff]
    %v663 = vld [vmem:[#allocation12 + $0xa4] sm:$0xf]
    %v664 = vld [vmem:[#allocation12 + $0xa8] sm:$0xff]
    %v665 = vld [vmem:[#allocation12 + $0xb0] sm:$0xf]
    %v666 = vld [vmem:[#allocation12 + $0xb4] sm:$0xff]
    %v667 = vld [vmem:[#allocation12 + $0xbc] sm:$0xf]
    %v668 = vld [vmem:[%s7] sm:$0x7]
    %v701 = vunpack.c.l.b16 %v603
    %v702 = vunpack.c.h.b16 %v603
    %v703 = vunpack.c.l.b16 %v604
    %v704 = vunpack.c.l.b16 %v605
    %v705 = vunpack.c.h.b16 %v605
    %v706 = vunpack.c.l.b16 %v606
    %v707 = vunpack.c.l.b16 %v607
    %v708 = vunpack.c.h.b16 %v607
    %v709 = vunpack.c.l.b16 %v608
    %v710 = vunpack.c.l.b16 %v609
    %v711 = vunpack.c.h.b16 %v609
    %v712 = vunpack.c.l.b16 %v610
    %v713 = vunpack.c.l.b16 %v611
    %v714 = vunpack.c.h.b16 %v611
    %v715 = vunpack.c.l.b16 %v612
    %v716 = vunpack.c.l.b16 %v613
    %v717 = vunpack.c.h.b16 %v613
    %v718 = vunpack.c.l.b16 %v614
    %v719 = vunpack.c.l.b16 %v615
    %v720 = vunpack.c.h.b16 %v615
    %v721 = vunpack.c.l.b16 %v616
    %v722 = vunpack.c.l.b16 %v617
    %v723 = vunpack.c.h.b16 %v617
    %v724 = vunpack.c.l.b16 %v618
    %v725 = vunpack.c.l.b16 %v619
    %v726 = vunpack.c.h.b16 %v619
    %v727 = vunpack.c.l.b16 %v620
    %v728 = vunpack.c.l.b16 %v621
    %v729 = vunpack.c.h.b16 %v621
    %v730 = vunpack.c.l.b16 %v622
    %v731 = vunpack.c.l.b16 %v623
    %v732 = vunpack.c.h.b16 %v623
    %v733 = vunpack.c.l.b16 %v624
    %v734 = vunpack.c.l.b16 %v625
    %v735 = vunpack.c.h.b16 %v625
    %v736 = vunpack.c.l.b16 %v626
    %v737 = vunpack.c.l.b16 %v627
    %v738 = vunpack.c.h.b16 %v627
    %v739 = vunpack.c.l.b16 %v628
    %v740 = vunpack.c.l.b16 %v629
    %v741 = vunpack.c.h.b16 %v629
    %v742 = vunpack.c.l.b16 %v630
    %v743 = vunpack.c.l.b16 %v631
    %v744 = vunpack.c.h.b16 %v631
    %v745 = vunpack.c.l.b16 %v632
    %v746 = vunpack.c.l.b16 %v633
    %v747 = vunpack.c.h.b16 %v633
    %v748 = vunpack.c.l.b16 %v634
    %v749 = vpack.c.b16 %v704, %v701
    %v750 = vpack.c.b16 %v705, %v702
    %v751 = vpack.c.b16 %v706, %v703
    %v752 = vpack.c.b16 %v710, %v707
    %v753 = vpack.c.b16 %v711, %v708
    %v754 = vpack.c.b16 %v712, %v709
    %v755 = vpack.c.b16 %v716, %v713
    %v756 = vpack.c.b16 %v717, %v714
    %v757 = vpack.c.b16 %v718, %v715
    %v758 = vpack.c.b16 %v722, %v719
    %v759 = vpack.c.b16 %v723, %v720
    %v760 = vpack.c.b16 %v724, %v721
    %v761 = vpack.c.b16 %v728, %v725
    %v762 = vpack.c.b16 %v729, %v726
    %v763 = vpack.c.b16 %v730, %v727
    %v764 = vpack.c.b16 %v734, %v731
    %v765 = vpack.c.b16 %v735, %v732
    %v766 = vpack.c.b16 %v736, %v733
    %v767 = vpack.c.b16 %v740, %v737
    %v768 = vpack.c.b16 %v741, %v738
    %v769 = vpack.c.b16 %v742, %v739
    %v770 = vpack.c.b16 %v746, %v743
    %v771 = vpack.c.b16 %v747, %v744
    %v772 = vpack.c.b16 %v748, %v745
    %v798 = vlaneseq
    %v799 = vshrl.u32 %v798, 7
    %v800 = vsub.s32 0, %v799
    %v801 = vrot.slane %v635, %v800
    %v802 = vlaneseq
    %v803 = vshrl.u32 %v802, 7
    %v804 = vsub.s32 1, %v803
    %v805 = vrot.slane %v635, %v804
    %v806 = vlaneseq
    %v807 = vshrl.u32 %v806, 7
    %v808 = vsub.s32 2, %v807
    %v809 = vrot.slane %v635, %v808
    %813 = vmatprep.subr.bf16.mxu0 %v750
    %814 = vmatpush1.bf16.msra.mxu0 %v749
    %815 = vmatprep.subr.bf16.mxu0 %v753
    %816 = vmatpush1.bf16.msra.mxu0 %v752
    %817 = vmatprep.subr.bf16.mxu0 %v756
    %818 = vmatpush1.bf16.msra.mxu0 %v755
    %819 = vmatprep.subr.bf16.mxu0 %v759
    %820 = vmatpush1.bf16.msra.mxu0 %v758
    %821 = vmatprep.subr.bf16.mxu0 %v762
    %822 = vmatpush1.bf16.msra.mxu0 %v761
    %823 = vmatprep.subr.bf16.mxu0 %v765
    %824 = vmatpush1.bf16.msra.mxu0 %v764
    %825 = vmatprep.subr.bf16.mxu0 %v768
    %826 = vmatpush1.bf16.msra.mxu0 %v767
    %827 = vmatprep.subr.bf16.mxu0 %v771
    %828 = vmatpush1.bf16.msra.mxu0 %v770
    %829 = vmatprep.subr.bf16.mxu0 0
    %830 = vmatpush1.bf16.msra.mxu0 0
    %831 = vmatprep.subr.bf16.mxu0 0
    %832 = vmatpush1.bf16.msra.mxu0 0
    %833 = vmatprep.subr.bf16.mxu0 0
    %834 = vmatpush1.bf16.msra.mxu0 0
    %835 = vmatprep.subr.bf16.mxu0 0
    %836 = vmatpush1.bf16.msra.mxu0 0
    %837 = vmatprep.subr.bf16.mxu0 0
    %838 = vmatpush1.bf16.msra.mxu0 0
    %839 = vmatprep.subr.bf16.mxu0 0
    %840 = vmatpush1.bf16.msra.mxu0 0
    %841 = vmatprep.subr.bf16.mxu0 0
    %842 = vmatpush1.bf16.msra.mxu0 0
    %843 = vmatprep.subr.bf16.mxu0 0
    %844 = vmatpush1.bf16.msra.mxu0 0
    %845 = vmatprep.mubr.bf16.mxu0 0
    %846 = vmatmul.mubr.bf16.gmra.mrb[0].mxu0 0
    %v847 = vpop.f32.mrb[0].mxu0
    %v848 = vadd.f32 %v801, %v847
    %v849 = vpop.f32.mrb[0].mxu0
    %v850 = vadd.f32 %v805, %v849
    %v851 = vpop.f32.mrb[0].mxu0
    %v852 = vpop.f32.mrb[0].mxu0
    %853 = vdwg.mxu0
    %854 = vmatprep.subr.bf16.mxu0 0
    %855 = vmatpush1.bf16.msra.mxu0 %v751
    %856 = vmatprep.subr.bf16.mxu0 0
    %857 = vmatpush1.bf16.msra.mxu0 %v754
    %858 = vmatprep.subr.bf16.mxu0 0
    %859 = vmatpush1.bf16.msra.mxu0 %v757
    %860 = vmatprep.subr.bf16.mxu0 0
    %861 = vmatpush1.bf16.msra.mxu0 %v760
    %862 = vmatprep.subr.bf16.mxu0 0
    %863 = vmatpush1.bf16.msra.mxu0 %v763
    %864 = vmatprep.subr.bf16.mxu0 0
    %865 = vmatpush1.bf16.msra.mxu0 %v766
    %866 = vmatprep.subr.bf16.mxu0 0
    %867 = vmatpush1.bf16.msra.mxu0 %v769
    %868 = vmatprep.subr.bf16.mxu0 0
    %869 = vmatpush1.bf16.msra.mxu0 %v772
    %870 = vmatprep.subr.bf16.mxu0 0
    %871 = vmatpush1.bf16.msra.mxu0 0
    %872 = vmatprep.subr.bf16.mxu0 0
    %873 = vmatpush1.bf16.msra.mxu0 0
    %874 = vmatprep.subr.bf16.mxu0 0
    %875 = vmatpush1.bf16.msra.mxu0 0
    %876 = vmatprep.subr.bf16.mxu0 0
    %877 = vmatpush1.bf16.msra.mxu0 0
    %878 = vmatprep.subr.bf16.mxu0 0
    %879 = vmatpush1.bf16.msra.mxu0 0
    %880 = vmatprep.subr.bf16.mxu0 0
    %881 = vmatpush1.bf16.msra.mxu0 0
    %882 = vmatprep.subr.bf16.mxu0 0
    %883 = vmatpush1.bf16.msra.mxu0 0
    %884 = vmatprep.subr.bf16.mxu0 0
    %885 = vmatpush1.bf16.msra.mxu0 0
    %886 = vmatprep.mubr.bf16.mxu0 0
    %887 = vmatmul.mubr.bf16.gmra.mrb[0].mxu0 0
    %v888 = vpop.f32.mrb[0].mxu0
    %v889 = vadd.f32 %v809, %v888
    %v890 = vpop.f32.mrb[0].mxu0
    %v891 = vpop.f32.mrb[0].mxu0
    %v892 = vpop.f32.mrb[0].mxu0
    %893 = vdwg.mxu0
    %v926 = vunpack.c.l.b16 %v636
    %v927 = vunpack.c.h.b16 %v636
    %v928 = vunpack.c.l.b16 %v637
    %v929 = vunpack.c.l.b16 %v638
    %v930 = vunpack.c.h.b16 %v638
    %v931 = vunpack.c.l.b16 %v639
    %v932 = vunpack.c.l.b16 %v640
    %v933 = vunpack.c.h.b16 %v640
    %v934 = vunpack.c.l.b16 %v641
    %v935 = vunpack.c.l.b16 %v642
    %v936 = vunpack.c.h.b16 %v642
    %v937 = vunpack.c.l.b16 %v643
    %v938 = vunpack.c.l.b16 %v644
    %v939 = vunpack.c.h.b16 %v644
    %v940 = vunpack.c.l.b16 %v645
    %v941 = vunpack.c.l.b16 %v646
    %v942 = vunpack.c.h.b16 %v646
    %v943 = vunpack.c.l.b16 %v647
    %v944 = vunpack.c.l.b16 %v648
    %v945 = vunpack.c.h.b16 %v648
    %v946 = vunpack.c.l.b16 %v649
    %v947 = vunpack.c.l.b16 %v650
    %v948 = vunpack.c.h.b16 %v650
    %v949 = vunpack.c.l.b16 %v651
    %v950 = vunpack.c.l.b16 %v652
    %v951 = vunpack.c.h.b16 %v652
    %v952 = vunpack.c.l.b16 %v653
    %v953 = vunpack.c.l.b16 %v654
    %v954 = vunpack.c.h.b16 %v654
    %v955 = vunpack.c.l.b16 %v655
    %v956 = vunpack.c.l.b16 %v656
    %v957 = vunpack.c.h.b16 %v656
    %v958 = vunpack.c.l.b16 %v657
    %v959 = vunpack.c.l.b16 %v658
    %v960 = vunpack.c.h.b16 %v658
    %v961 = vunpack.c.l.b16 %v659
    %v962 = vunpack.c.l.b16 %v660
    %v963 = vunpack.c.h.b16 %v660
    %v964 = vunpack.c.l.b16 %v661
    %v965 = vunpack.c.l.b16 %v662
    %v966 = vunpack.c.h.b16 %v662
    %v967 = vunpack.c.l.b16 %v663
    %v968 = vunpack.c.l.b16 %v664
    %v969 = vunpack.c.h.b16 %v664
    %v970 = vunpack.c.l.b16 %v665
    %v971 = vunpack.c.l.b16 %v666
    %v972 = vunpack.c.h.b16 %v666
    %v973 = vunpack.c.l.b16 %v667
    %v974 = vpack.c.b16 %v929, %v926
    %v975 = vpack.c.b16 %v930, %v927
    %v976 = vpack.c.b16 %v931, %v928
    %v977 = vpack.c.b16 %v935, %v932
    %v978 = vpack.c.b16 %v936, %v933
    %v979 = vpack.c.b16 %v937, %v934
    %v980 = vpack.c.b16 %v941, %v938
    %v981 = vpack.c.b16 %v942, %v939
    %v982 = vpack.c.b16 %v943, %v940
    %v983 = vpack.c.b16 %v947, %v944
    %v984 = vpack.c.b16 %v948, %v945
    %v985 = vpack.c.b16 %v949, %v946
    %v986 = vpack.c.b16 %v953, %v950
    %v987 = vpack.c.b16 %v954, %v951
    %v988 = vpack.c.b16 %v955, %v952
    %v989 = vpack.c.b16 %v959, %v956
    %v990 = vpack.c.b16 %v960, %v957
    %v991 = vpack.c.b16 %v961, %v958
    %v992 = vpack.c.b16 %v965, %v962
    %v993 = vpack.c.b16 %v966, %v963
    %v994 = vpack.c.b16 %v967, %v964
    %v995 = vpack.c.b16 %v971, %v968
    %v996 = vpack.c.b16 %v972, %v969
    %v997 = vpack.c.b16 %v973, %v970
    %v1023 = vlaneseq
    %v1024 = vshrl.u32 %v1023, 7
    %v1025 = vsub.s32 0, %v1024
    %v1026 = vrot.slane %v668, %v1025
    %v1027 = vlaneseq
    %v1028 = vshrl.u32 %v1027, 7
    %v1029 = vsub.s32 1, %v1028
    %v1030 = vrot.slane %v668, %v1029
    %v1031 = vlaneseq
    %v1032 = vshrl.u32 %v1031, 7
    %v1033 = vsub.s32 2, %v1032
    %v1034 = vrot.slane %v668, %v1033
    %1038 = vmatprep.subr.bf16.mxu0 %v975
    %1039 = vmatpush1.bf16.msra.mxu0 %v974
    %1040 = vmatprep.subr.bf16.mxu0 %v978
    %1041 = vmatpush1.bf16.msra.mxu0 %v977
    %1042 = vmatprep.subr.bf16.mxu0 %v981
    %1043 = vmatpush1.bf16.msra.mxu0 %v980
    %1044 = vmatprep.subr.bf16.mxu0 %v984
    %1045 = vmatpush1.bf16.msra.mxu0 %v983
    %1046 = vmatprep.subr.bf16.mxu0 %v987
    %1047 = vmatpush1.bf16.msra.mxu0 %v986
    %1048 = vmatprep.subr.bf16.mxu0 %v990
    %1049 = vmatpush1.bf16.msra.mxu0 %v989
    %1050 = vmatprep.subr.bf16.mxu0 %v993
    %1051 = vmatpush1.bf16.msra.mxu0 %v992
    %1052 = vmatprep.subr.bf16.mxu0 %v996
    %1053 = vmatpush1.bf16.msra.mxu0 %v995
    %1054 = vmatprep.subr.bf16.mxu0 0
    %1055 = vmatpush1.bf16.msra.mxu0 0
    %1056 = vmatprep.subr.bf16.mxu0 0
    %1057 = vmatpush1.bf16.msra.mxu0 0
    %1058 = vmatprep.subr.bf16.mxu0 0
    %1059 = vmatpush1.bf16.msra.mxu0 0
    %1060 = vmatprep.subr.bf16.mxu0 0
    %1061 = vmatpush1.bf16.msra.mxu0 0
    %1062 = vmatprep.subr.bf16.mxu0 0
    %1063 = vmatpush1.bf16.msra.mxu0 0
    %1064 = vmatprep.subr.bf16.mxu0 0
    %1065 = vmatpush1.bf16.msra.mxu0 0
    %1066 = vmatprep.subr.bf16.mxu0 0
    %1067 = vmatpush1.bf16.msra.mxu0 0
    %1068 = vmatprep.subr.bf16.mxu0 0
    %1069 = vmatpush1.bf16.msra.mxu0 0
    %1070 = vmatprep.mubr.bf16.mxu0 0
    %1071 = vmatmul.mubr.bf16.gmra.mrb[0].mxu0 0
    %v1072 = vpop.f32.mrb[0].mxu0
    %v1073 = vadd.f32 %v1026, %v1072
    %v1074 = vpop.f32.mrb[0].mxu0
    %v1075 = vadd.f32 %v1030, %v1074
    %v1076 = vpop.f32.mrb[0].mxu0
    %v1077 = vpop.f32.mrb[0].mxu0
    %1078 = vdwg.mxu0
    %1079 = vmatprep.subr.bf16.mxu0 0
    %1080 = vmatpush1.bf16.msra.mxu0 %v976
    %1081 = vmatprep.subr.bf16.mxu0 0
    %1082 = vmatpush1.bf16.msra.mxu0 %v979
    %1083 = vmatprep.subr.bf16.mxu0 0
    %1084 = vmatpush1.bf16.msra.mxu0 %v982
    %1085 = vmatprep.subr.bf16.mxu0 0
    %1086 = vmatpush1.bf16.msra.mxu0 %v985
    %1087 = vmatprep.subr.bf16.mxu0 0
    %1088 = vmatpush1.bf16.msra.mxu0 %v988
    %1089 = vmatprep.subr.bf16.mxu0 0
    %1090 = vmatpush1.bf16.msra.mxu0 %v991
    %1091 = vmatprep.subr.bf16.mxu0 0
    %1092 = vmatpush1.bf16.msra.mxu0 %v994
    %1093 = vmatprep.subr.bf16.mxu0 0
    %1094 = vmatpush1.bf16.msra.mxu0 %v997
    %1095 = vmatprep.subr.bf16.mxu0 0
    %1096 = vmatpush1.bf16.msra.mxu0 0
    %1097 = vmatprep.subr.bf16.mxu0 0
    %1098 = vmatpush1.bf16.msra.mxu0 0
    %1099 = vmatprep.subr.bf16.mxu0 0
    %1100 = vmatpush1.bf16.msra.mxu0 0
    %1101 = vmatprep.subr.bf16.mxu0 0
    %1102 = vmatpush1.bf16.msra.mxu0 0
    %1103 = vmatprep.subr.bf16.mxu0 0
    %1104 = vmatpush1.bf16.msra.mxu0 0
    %1105 = vmatprep.subr.bf16.mxu0 0
    %1106 = vmatpush1.bf16.msra.mxu0 0
    %1107 = vmatprep.subr.bf16.mxu0 0
    %1108 = vmatpush1.bf16.msra.mxu0 0
    %1109 = vmatprep.subr.bf16.mxu0 0
    %1110 = vmatpush1.bf16.msra.mxu0 0
    %1111 = vmatprep.mubr.bf16.mxu0 0
    %1112 = vmatmul.mubr.bf16.gmra.mrb[0].mxu0 0
    %v1113 = vpop.f32.mrb[0].mxu0
    %v1114 = vadd.f32 %v1034, %v1113
    %v1115 = vpop.f32.mrb[0].mxu0
    %v1116 = vpop.f32.mrb[0].mxu0
    %v1117 = vpop.f32.mrb[0].mxu0
    %1118 = vdwg.mxu0
    %v1119 = vadd.f32 %v515, %v848
    %v1120 = vxor.u32 %v1119, 2147483648
    %v1121 = vmul.f32 %v1120, 1.442695
    %v1122 = vpow.pop %v1121
    %v1123 = vadd.f32 %v1122, 1.0
    %v1124 = vrcp.pop %v1123
    %v1125 = vmul.f32 1.0, %v1124
    %v1126 = vadd.f32 %v517, %v850
    %v1127 = vxor.u32 %v1126, 2147483648
    %v1128 = vmul.f32 %v1127, 1.442695
    %v1129 = vpow.pop %v1128
    %v1130 = vadd.f32 %v1129, 1.0
    %v1131 = vrcp.pop %v1130
    %v1132 = vmul.f32 1.0, %v1131
    %v1133 = vmul.f32 %v1125, %v889
    %v1134 = vadd.f32 %v556, %v1133
    %v1135 = vtanh.pop %v1134
    %v1136 = vsub.f32 1.0, %v1132
    %v1137 = vmul.f32 %v1136, %v1135
    %v1138 = vmul.f32 %v1132, 0.0
    %v1139 = vadd.f32 %v1137, %v1138
    %v1141 = vrot.slane %v1073, 2
    %v1143 = vadd.f32 %v558, %v1141
    %v1144 = vxor.u32 %v1143, 2147483648
    %v1145 = vmul.f32 %v1144, 1.442695
    %v1146 = vpow.pop %v1145
    %v1147 = vadd.f32 %v1146, 1.0
    %v1148 = vrcp.pop %v1147
    %v1149 = vmul.f32 1.0, %v1148
    %v1151 = vrot.slane %v1075, 2
    %v1153 = vadd.f32 %v597, %v1151
    %v1154 = vxor.u32 %v1153, 2147483648
    %v1155 = vmul.f32 %v1154, 1.442695
    %v1156 = vpow.pop %v1155
    %v1157 = vadd.f32 %v1156, 1.0
    %v1158 = vrcp.pop %v1157
    %v1159 = vmul.f32 1.0, %v1158
    %v1161 = vrot.slane %v1114, 2
    %v1163 = vmul.f32 %v1149, %v1161
    %v1164 = vadd.f32 %v599, %v1163
    %v1165 = vtanh.pop %v1164
    %v1166 = vsub.f32 1.0, %v1159
    %v1167 = vmul.f32 %v1166, %v1165
    %v1168 = vmul.f32 %v1159, 0.0
    %v1169 = vadd.f32 %v1167, %v1168
    %1170 = vst [vmem:[#allocation2] sm:$0x1] %v1139
    %1171 = vst [vmem:[#allocation3] sm:$0x40] %v1169
    %v1172 = vpack.c.bf16 %v1139, %v1139
    %1173 = vmatprep.subr.bf16.mxu0 %v750
    %1174 = vmatpush1.bf16.msra.mxu0 %v749
    %1175 = vmatprep.subr.bf16.mxu0 %v753
    %1176 = vmatpush1.bf16.msra.mxu0 %v752
    %1177 = vmatprep.subr.bf16.mxu0 %v756
    %1178 = vmatpush1.bf16.msra.mxu0 %v755
    %1179 = vmatprep.subr.bf16.mxu0 %v759
    %1180 = vmatpush1.bf16.msra.mxu0 %v758
    %1181 = vmatprep.subr.bf16.mxu0 %v762
    %1182 = vmatpush1.bf16.msra.mxu0 %v761
    %1183 = vmatprep.subr.bf16.mxu0 %v765
    %1184 = vmatpush1.bf16.msra.mxu0 %v764
    %1185 = vmatprep.subr.bf16.mxu0 %v768
    %1186 = vmatpush1.bf16.msra.mxu0 %v767
    %1187 = vmatprep.subr.bf16.mxu0 %v771
    %1188 = vmatpush1.bf16.msra.mxu0 %v770
    %1189 = vmatprep.subr.bf16.mxu0 0
    %1190 = vmatpush1.bf16.msra.mxu0 0
    %1191 = vmatprep.subr.bf16.mxu0 0
    %1192 = vmatpush1.bf16.msra.mxu0 0
    %1193 = vmatprep.subr.bf16.mxu0 0
    %1194 = vmatpush1.bf16.msra.mxu0 0
    %1195 = vmatprep.subr.bf16.mxu0 0
    %1196 = vmatpush1.bf16.msra.mxu0 0
    %1197 = vmatprep.subr.bf16.mxu0 0
    %1198 = vmatpush1.bf16.msra.mxu0 0
    %1199 = vmatprep.subr.bf16.mxu0 0
    %1200 = vmatpush1.bf16.msra.mxu0 0
    %1201 = vmatprep.subr.bf16.mxu0 0
    %1202 = vmatpush1.bf16.msra.mxu0 0
    %1203 = vmatprep.subr.bf16.mxu0 0
    %1204 = vmatpush1.bf16.msra.mxu0 0
    %1205 = vmatprep.mubr.bf16.mxu0 0
    %1206 = vmatmul.mubr.bf16.gmra.mrb[0].mxu0 %v1172
    %v1207 = vpop.f32.mrb[0].mxu0
    %v1208 = vadd.f32 %v801, %v1207
    %v1209 = vpop.f32.mrb[0].mxu0
    %v1210 = vadd.f32 %v805, %v1209
    %v1211 = vpop.f32.mrb[0].mxu0
    %v1212 = vpop.f32.mrb[0].mxu0
    %1213 = vdwg.mxu0
    %1214 = vmatprep.subr.bf16.mxu0 0
    %1215 = vmatpush1.bf16.msra.mxu0 %v751
    %1216 = vmatprep.subr.bf16.mxu0 0
    %1217 = vmatpush1.bf16.msra.mxu0 %v754
    %1218 = vmatprep.subr.bf16.mxu0 0
    %1219 = vmatpush1.bf16.msra.mxu0 %v757
    %1220 = vmatprep.subr.bf16.mxu0 0
    %1221 = vmatpush1.bf16.msra.mxu0 %v760
    %1222 = vmatprep.subr.bf16.mxu0 0
    %1223 = vmatpush1.bf16.msra.mxu0 %v763
    %1224 = vmatprep.subr.bf16.mxu0 0
    %1225 = vmatpush1.bf16.msra.mxu0 %v766
    %1226 = vmatprep.subr.bf16.mxu0 0
    %1227 = vmatpush1.bf16.msra.mxu0 %v769
    %1228 = vmatprep.subr.bf16.mxu0 0
    %1229 = vmatpush1.bf16.msra.mxu0 %v772
    %1230 = vmatprep.subr.bf16.mxu0 0
    %1231 = vmatpush1.bf16.msra.mxu0 0
    %1232 = vmatprep.subr.bf16.mxu0 0
    %1233 = vmatpush1.bf16.msra.mxu0 0
    %1234 = vmatprep.subr.bf16.mxu0 0
    %1235 = vmatpush1.bf16.msra.mxu0 0
    %1236 = vmatprep.subr.bf16.mxu0 0
    %1237 = vmatpush1.bf16.msra.mxu0 0
    %1238 = vmatprep.subr.bf16.mxu0 0
    %1239 = vmatpush1.bf16.msra.mxu0 0
    %1240 = vmatprep.subr.bf16.mxu0 0
    %1241 = vmatpush1.bf16.msra.mxu0 0
    %1242 = vmatprep.subr.bf16.mxu0 0
    %1243 = vmatpush1.bf16.msra.mxu0 0
    %1244 = vmatprep.subr.bf16.mxu0 0
    %1245 = vmatpush1.bf16.msra.mxu0 0
    %1246 = vmatprep.mubr.bf16.mxu0 0
    %1247 = vmatmul.mubr.bf16.gmra.mrb[0].mxu0 %v1172
    %v1248 = vpop.f32.mrb[0].mxu0
    %v1249 = vadd.f32 %v809, %v1248
    %v1250 = vpop.f32.mrb[0].mxu0
    %v1251 = vpop.f32.mrb[0].mxu0
    %v1252 = vpop.f32.mrb[0].mxu0
    %1253 = vdwg.mxu0
    %v1254 = vpack.c.bf16 %v1169, %v1169
    %v1256 = vrot.slane %v1254, 3
    %1258 = vmatprep.subr.bf16.mxu0 %v975
    %1259 = vmatpush1.bf16.msra.mxu0 %v974
    %1260 = vmatprep.subr.bf16.mxu0 %v978
    %1261 = vmatpush1.bf16.msra.mxu0 %v977
    %1262 = vmatprep.subr.bf16.mxu0 %v981
    %1263 = vmatpush1.bf16.msra.mxu0 %v980
    %1264 = vmatprep.subr.bf16.mxu0 %v984
    %1265 = vmatpush1.bf16.msra.mxu0 %v983
    %1266 = vmatprep.subr.bf16.mxu0 %v987
    %1267 = vmatpush1.bf16.msra.mxu0 %v986
    %1268 = vmatprep.subr.bf16.mxu0 %v990
    %1269 = vmatpush1.bf16.msra.mxu0 %v989
    %1270 = vmatprep.subr.bf16.mxu0 %v993
    %1271 = vmatpush1.bf16.msra.mxu0 %v992
    %1272 = vmatprep.subr.bf16.mxu0 %v996
    %1273 = vmatpush1.bf16.msra.mxu0 %v995
    %1274 = vmatprep.subr.bf16.mxu0 0
    %1275 = vmatpush1.bf16.msra.mxu0 0
    %1276 = vmatprep.subr.bf16.mxu0 0
    %1277 = vmatpush1.bf16.msra.mxu0 0
    %1278 = vmatprep.subr.bf16.mxu0 0
    %1279 = vmatpush1.bf16.msra.mxu0 0
    %1280 = vmatprep.subr.bf16.mxu0 0
    %1281 = vmatpush1.bf16.msra.mxu0 0
    %1282 = vmatprep.subr.bf16.mxu0 0
    %1283 = vmatpush1.bf16.msra.mxu0 0
    %1284 = vmatprep.subr.bf16.mxu0 0
    %1285 = vmatpush1.bf16.msra.mxu0 0
    %1286 = vmatprep.subr.bf16.mxu0 0
    %1287 = vmatpush1.bf16.msra.mxu0 0
    %1288 = vmatprep.subr.bf16.mxu0 0
    %1289 = vmatpush1.bf16.msra.mxu0 0
    %1290 = vmatprep.mubr.bf16.mxu0 0
    %1291 = vmatmul.mubr.bf16.gmra.mrb[0].mxu0 %v1256
    %v1292 = vpop.f32.mrb[0].mxu0
    %v1293 = vadd.f32 %v1026, %v1292
    %v1294 = vpop.f32.mrb[0].mxu0
    %v1295 = vadd.f32 %v1030, %v1294
    %v1296 = vpop.f32.mrb[0].mxu0
    %v1297 = vpop.f32.mrb[0].mxu0
    %1298 = vdwg.mxu0
    %1299 = vmatprep.subr.bf16.mxu0 0
    %1300 = vmatpush1.bf16.msra.mxu0 %v976
    %1301 = vmatprep.subr.bf16.mxu0 0
    %1302 = vmatpush1.bf16.msra.mxu0 %v979
    %1303 = vmatprep.subr.bf16.mxu0 0
    %1304 = vmatpush1.bf16.msra.mxu0 %v982
    %1305 = vmatprep.subr.bf16.mxu0 0
    %1306 = vmatpush1.bf16.msra.mxu0 %v985
    %1307 = vmatprep.subr.bf16.mxu0 0
    %1308 = vmatpush1.bf16.msra.mxu0 %v988
    %1309 = vmatprep.subr.bf16.mxu0 0
    %1310 = vmatpush1.bf16.msra.mxu0 %v991
    %1311 = vmatprep.subr.bf16.mxu0 0
    %1312 = vmatpush1.bf16.msra.mxu0 %v994
    %1313 = vmatprep.subr.bf16.mxu0 0
    %1314 = vmatpush1.bf16.msra.mxu0 %v997
    %1315 = vmatprep.subr.bf16.mxu0 0
    %1316 = vmatpush1.bf16.msra.mxu0 0
    %1317 = vmatprep.subr.bf16.mxu0 0
    %1318 = vmatpush1.bf16.msra.mxu0 0
    %1319 = vmatprep.subr.bf16.mxu0 0
    %1320 = vmatpush1.bf16.msra.mxu0 0
    %1321 = vmatprep.subr.bf16.mxu0 0
    %1322 = vmatpush1.bf16.msra.mxu0 0
    %1323 = vmatprep.subr.bf16.mxu0 0
    %1324 = vmatpush1.bf16.msra.mxu0 0
    %1325 = vmatprep.subr.bf16.mxu0 0
    %1326 = vmatpush1.bf16.msra.mxu0 0
    %1327 = vmatprep.subr.bf16.mxu0 0
    %1328 = vmatpush1.bf16.msra.mxu0 0
    %1329 = vmatprep.subr.bf16.mxu0 0
    %1330 = vmatpush1.bf16.msra.mxu0 0
    %1331 = vmatprep.mubr.bf16.mxu0 0
    %1332 = vmatmul.mubr.bf16.gmra.mrb[0].mxu0 %v1256
    %v1333 = vpop.f32.mrb[0].mxu0
    %v1334 = vadd.f32 %v1034, %v1333
    %v1335 = vpop.f32.mrb[0].mxu0
    %v1336 = vpop.f32.mrb[0].mxu0
    %v1337 = vpop.f32.mrb[0].mxu0
    %1338 = vdwg.mxu0
    %v1340 = vrot.slane %v1208, 7
    %v1342 = vadd.f32 %v515, %v1340
    %v1343 = vxor.u32 %v1342, 2147483648
    %v1344 = vmul.f32 %v1343, 1.442695
    %v1345 = vpow.pop %v1344
    %v1346 = vadd.f32 %v1345, 1.0
    %v1347 = vrcp.pop %v1346
    %v1348 = vmul.f32 1.0, %v1347
    %v1350 = vrot.slane %v1210, 7
    %v1352 = vadd.f32 %v517, %v1350
    %v1353 = vxor.u32 %v1352, 2147483648
    %v1354 = vmul.f32 %v1353, 1.442695
    %v1355 = vpow.pop %v1354
    %v1356 = vadd.f32 %v1355, 1.0
    %v1357 = vrcp.pop %v1356
    %v1358 = vmul.f32 1.0, %v1357
    %v1360 = vrot.slane %v1249, 7
    %v1362 = vmul.f32 %v1348, %v1360
    %v1363 = vadd.f32 %v556, %v1362
    %v1364 = vtanh.pop %v1363
    %v1365 = vsub.f32 1.0, %v1358
    %v1366 = vmul.f32 %v1365, %v1364
    %v1368 = vrot.slane %v1139, 7
    %v1370 = vmul.f32 %v1358, %v1368
    %v1371 = vadd.f32 %v1366, %v1370
    %v1373 = vrot.slane %v1293, 3
    %v1375 = vadd.f32 %v558, %v1373
    %v1376 = vxor.u32 %v1375, 2147483648
    %v1377 = vmul.f32 %v1376, 1.442695
    %v1378 = vpow.pop %v1377
    %v1379 = vadd.f32 %v1378, 1.0
    %v1380 = vrcp.pop %v1379
    %v1381 = vmul.f32 1.0, %v1380
    %v1383 = vrot.slane %v1295, 3
    %v1385 = vadd.f32 %v597, %v1383
    %v1386 = vxor.u32 %v1385, 2147483648
    %v1387 = vmul.f32 %v1386, 1.442695
    %v1388 = vpow.pop %v1387
    %v1389 = vadd.f32 %v1388, 1.0
    %v1390 = vrcp.pop %v1389
    %v1391 = vmul.f32 1.0, %v1390
    %v1393 = vrot.slane %v1334, 3
    %v1395 = vmul.f32 %v1381, %v1393
    %v1396 = vadd.f32 %v599, %v1395
    %v1397 = vtanh.pop %v1396
    %v1398 = vsub.f32 1.0, %v1391
    %v1399 = vmul.f32 %v1398, %v1397
    %v1401 = vrot.slane %v1169, 1
    %v1403 = vmul.f32 %v1391, %v1401
    %v1404 = vadd.f32 %v1399, %v1403
    %1405 = vst [vmem:[#allocation2] sm:$0x2] %v1371
    %1406 = vst [vmem:[#allocation3] sm:$0x20] %v1404
    %v1407 = vpack.c.bf16 %v1371, %v1371
    %v1409 = vshrl.u32 %v1407, 16
    %1412 = vmatprep.subr.bf16.mxu0 %v750
    %1413 = vmatpush1.bf16.msra.mxu0 %v749
    %1414 = vmatprep.subr.bf16.mxu0 %v753
    %1415 = vmatpush1.bf16.msra.mxu0 %v752
    %1416 = vmatprep.subr.bf16.mxu0 %v756
    %1417 = vmatpush1.bf16.msra.mxu0 %v755
    %1418 = vmatprep.subr.bf16.mxu0 %v759
    %1419 = vmatpush1.bf16.msra.mxu0 %v758
    %1420 = vmatprep.subr.bf16.mxu0 %v762
    %1421 = vmatpush1.bf16.msra.mxu0 %v761
    %1422 = vmatprep.subr.bf16.mxu0 %v765
    %1423 = vmatpush1.bf16.msra.mxu0 %v764
    %1424 = vmatprep.subr.bf16.mxu0 %v768
    %1425 = vmatpush1.bf16.msra.mxu0 %v767
    %1426 = vmatprep.subr.bf16.mxu0 %v771
    %1427 = vmatpush1.bf16.msra.mxu0 %v770
    %1428 = vmatprep.subr.bf16.mxu0 0
    %1429 = vmatpush1.bf16.msra.mxu0 0
    %1430 = vmatprep.subr.bf16.mxu0 0
    %1431 = vmatpush1.bf16.msra.mxu0 0
    %1432 = vmatprep.subr.bf16.mxu0 0
    %1433 = vmatpush1.bf16.msra.mxu0 0
    %1434 = vmatprep.subr.bf16.mxu0 0
    %1435 = vmatpush1.bf16.msra.mxu0 0
    %1436 = vmatprep.subr.bf16.mxu0 0
    %1437 = vmatpush1.bf16.msra.mxu0 0
    %1438 = vmatprep.subr.bf16.mxu0 0
    %1439 = vmatpush1.bf16.msra.mxu0 0
    %1440 = vmatprep.subr.bf16.mxu0 0
    %1441 = vmatpush1.bf16.msra.mxu0 0
    %1442 = vmatprep.subr.bf16.mxu0 0
    %1443 = vmatpush1.bf16.msra.mxu0 0
    %1444 = vmatprep.mubr.bf16.mxu0 0
    %1445 = vmatmul.mubr.bf16.gmra.mrb[0].mxu0 %v1409
    %v1446 = vpop.f32.mrb[0].mxu0
    %v1447 = vadd.f32 %v801, %v1446
    %v1448 = vpop.f32.mrb[0].mxu0
    %v1449 = vadd.f32 %v805, %v1448
    %v1450 = vpop.f32.mrb[0].mxu0
    %v1451 = vpop.f32.mrb[0].mxu0
    %1452 = vdwg.mxu0
    %1453 = vmatprep.subr.bf16.mxu0 0
    %1454 = vmatpush1.bf16.msra.mxu0 %v751
    %1455 = vmatprep.subr.bf16.mxu0 0
    %1456 = vmatpush1.bf16.msra.mxu0 %v754
    %1457 = vmatprep.subr.bf16.mxu0 0
    %1458 = vmatpush1.bf16.msra.mxu0 %v757
    %1459 = vmatprep.subr.bf16.mxu0 0
    %1460 = vmatpush1.bf16.msra.mxu0 %v760
    %1461 = vmatprep.subr.bf16.mxu0 0
    %1462 = vmatpush1.bf16.msra.mxu0 %v763
    %1463 = vmatprep.subr.bf16.mxu0 0
    %1464 = vmatpush1.bf16.msra.mxu0 %v766
    %1465 = vmatprep.subr.bf16.mxu0 0
    %1466 = vmatpush1.bf16.msra.mxu0 %v769
    %1467 = vmatprep.subr.bf16.mxu0 0
    %1468 = vmatpush1.bf16.msra.mxu0 %v772
    %1469 = vmatprep.subr.bf16.mxu0 0
    %1470 = vmatpush1.bf16.msra.mxu0 0
    %1471 = vmatprep.subr.bf16.mxu0 0
    %1472 = vmatpush1.bf16.msra.mxu0 0
    %1473 = vmatprep.subr.bf16.mxu0 0
    %1474 = vmatpush1.bf16.msra.mxu0 0
    %1475 = vmatprep.subr.bf16.mxu0 0
    %1476 = vmatpush1.bf16.msra.mxu0 0
    %1477 = vmatprep.subr.bf16.mxu0 0
    %1478 = vmatpush1.bf16.msra.mxu0 0
    %1479 = vmatprep.subr.bf16.mxu0 0
    %1480 = vmatpush1.bf16.msra.mxu0 0
    %1481 = vmatprep.subr.bf16.mxu0 0
    %1482 = vmatpush1.bf16.msra.mxu0 0
    %1483 = vmatprep.subr.bf16.mxu0 0
    %1484 = vmatpush1.bf16.msra.mxu0 0
    %1485 = vmatprep.mubr.bf16.mxu0 0
    %1486 = vmatmul.mubr.bf16.gmra.mrb[0].mxu0 %v1409
    %v1487 = vpop.f32.mrb[0].mxu0
    %v1488 = vadd.f32 %v809, %v1487
    %v1489 = vpop.f32.mrb[0].mxu0
    %v1490 = vpop.f32.mrb[0].mxu0
    %v1491 = vpop.f32.mrb[0].mxu0
    %1492 = vdwg.mxu0
    %v1493 = vpack.c.bf16 %v1404, %v1404
    %v1495 = vshrl.u32 %v1493, 16
    %v1497 = vrot.slane %v1495, 2
    %1499 = vmatprep.subr.bf16.mxu0 %v975
    %1500 = vmatpush1.bf16.msra.mxu0 %v974
    %1501 = vmatprep.subr.bf16.mxu0 %v978
    %1502 = vmatpush1.bf16.msra.mxu0 %v977
    %1503 = vmatprep.subr.bf16.mxu0 %v981
    %1504 = vmatpush1.bf16.msra.mxu0 %v980
    %1505 = vmatprep.subr.bf16.mxu0 %v984
    %1506 = vmatpush1.bf16.msra.mxu0 %v983
    %1507 = vmatprep.subr.bf16.mxu0 %v987
    %1508 = vmatpush1.bf16.msra.mxu0 %v986
    %1509 = vmatprep.subr.bf16.mxu0 %v990
    %1510 = vmatpush1.bf16.msra.mxu0 %v989
    %1511 = vmatprep.subr.bf16.mxu0 %v993
    %1512 = vmatpush1.bf16.msra.mxu0 %v992
    %1513 = vmatprep.subr.bf16.mxu0 %v996
    %1514 = vmatpush1.bf16.msra.mxu0 %v995
    %1515 = vmatprep.subr.bf16.mxu0 0
    %1516 = vmatpush1.bf16.msra.mxu0 0
    %1517 = vmatprep.subr.bf16.mxu0 0
    %1518 = vmatpush1.bf16.msra.mxu0 0
    %1519 = vmatprep.subr.bf16.mxu0 0
    %1520 = vmatpush1.bf16.msra.mxu0 0
    %1521 = vmatprep.subr.bf16.mxu0 0
    %1522 = vmatpush1.bf16.msra.mxu0 0
    %1523 = vmatprep.subr.bf16.mxu0 0
    %1524 = vmatpush1.bf16.msra.mxu0 0
    %1525 = vmatprep.subr.bf16.mxu0 0
    %1526 = vmatpush1.bf16.msra.mxu0 0
    %1527 = vmatprep.subr.bf16.mxu0 0
    %1528 = vmatpush1.bf16.msra.mxu0 0
    %1529 = vmatprep.subr.bf16.mxu0 0
    %1530 = vmatpush1.bf16.msra.mxu0 0
    %1531 = vmatprep.mubr.bf16.mxu0 0
    %1532 = vmatmul.mubr.bf16.gmra.mrb[0].mxu0 %v1497
    %v1533 = vpop.f32.mrb[0].mxu0
    %v1534 = vadd.f32 %v1026, %v1533
    %v1535 = vpop.f32.mrb[0].mxu0
    %v1536 = vadd.f32 %v1030, %v1535
    %v1537 = vpop.f32.mrb[0].mxu0
    %v1538 = vpop.f32.mrb[0].mxu0
    %1539 = vdwg.mxu0
    %1540 = vmatprep.subr.bf16.mxu0 0
    %1541 = vmatpush1.bf16.msra.mxu0 %v976
    %1542 = vmatprep.subr.bf16.mxu0 0
    %1543 = vmatpush1.bf16.msra.mxu0 %v979
    %1544 = vmatprep.subr.bf16.mxu0 0
    %1545 = vmatpush1.bf16.msra.mxu0 %v982
    %1546 = vmatprep.subr.bf16.mxu0 0
    %1547 = vmatpush1.bf16.msra.mxu0 %v985
    %1548 = vmatprep.subr.bf16.mxu0 0
    %1549 = vmatpush1.bf16.msra.mxu0 %v988
    %1550 = vmatprep.subr.bf16.mxu0 0
    %1551 = vmatpush1.bf16.msra.mxu0 %v991
    %1552 = vmatprep.subr.bf16.mxu0 0
    %1553 = vmatpush1.bf16.msra.mxu0 %v994
    %1554 = vmatprep.subr.bf16.mxu0 0
    %1555 = vmatpush1.bf16.msra.mxu0 %v997
    %1556 = vmatprep.subr.bf16.mxu0 0
    %1557 = vmatpush1.bf16.msra.mxu0 0
    %1558 = vmatprep.subr.bf16.mxu0 0
    %1559 = vmatpush1.bf16.msra.mxu0 0
    %1560 = vmatprep.subr.bf16.mxu0 0
    %1561 = vmatpush1.bf16.msra.mxu0 0
    %1562 = vmatprep.subr.bf16.mxu0 0
    %1563 = vmatpush1.bf16.msra.mxu0 0
    %1564 = vmatprep.subr.bf16.mxu0 0
    %1565 = vmatpush1.bf16.msra.mxu0 0
    %1566 = vmatprep.subr.bf16.mxu0 0
    %1567 = vmatpush1.bf16.msra.mxu0 0
    %1568 = vmatprep.subr.bf16.mxu0 0
    %1569 = vmatpush1.bf16.msra.mxu0 0
    %1570 = vmatprep.subr.bf16.mxu0 0
    %1571 = vmatpush1.bf16.msra.mxu0 0
    %1572 = vmatprep.mubr.bf16.mxu0 0
    %1573 = vmatmul.mubr.bf16.gmra.mrb[0].mxu0 %v1497
    %v1574 = vpop.f32.mrb[0].mxu0
    %v1575 = vadd.f32 %v1034, %v1574
    %v1576 = vpop.f32.mrb[0].mxu0
    %v1577 = vpop.f32.mrb[0].mxu0
    %v1578 = vpop.f32.mrb[0].mxu0
    %1579 = vdwg.mxu0
    %v1581 = vrot.slane %v1447, 6
    %v1583 = vadd.f32 %v515, %v1581
    %v1584 = vxor.u32 %v1583, 2147483648
    %v1585 = vmul.f32 %v1584, 1.442695
    %v1586 = vpow.pop %v1585
    %v1587 = vadd.f32 %v1586, 1.0
    %v1588 = vrcp.pop %v1587
    %v1589 = vmul.f32 1.0, %v1588
    %v1591 = vrot.slane %v1449, 6
    %v1593 = vadd.f32 %v517, %v1591
    %v1594 = vxor.u32 %v1593, 2147483648
    %v1595 = vmul.f32 %v1594, 1.442695
    %v1596 = vpow.pop %v1595
    %v1597 = vadd.f32 %v1596, 1.0
    %v1598 = vrcp.pop %v1597
    %v1599 = vmul.f32 1.0, %v1598
    %v1601 = vrot.slane %v1488, 6
    %v1603 = vmul.f32 %v1589, %v1601
    %v1604 = vadd.f32 %v556, %v1603
    %v1605 = vtanh.pop %v1604
    %v1606 = vsub.f32 1.0, %v1599
    %v1607 = vmul.f32 %v1606, %v1605
    %v1609 = vrot.slane %v1371, 7
    %v1611 = vmul.f32 %v1599, %v1609
    %v1612 = vadd.f32 %v1607, %v1611
    %v1614 = vrot.slane %v1534, 4
    %v1616 = vadd.f32 %v558, %v1614
    %v1617 = vxor.u32 %v1616, 2147483648
    %v1618 = vmul.f32 %v1617, 1.442695
    %v1619 = vpow.pop %v1618
    %v1620 = vadd.f32 %v1619, 1.0
    %v1621 = vrcp.pop %v1620
    %v1622 = vmul.f32 1.0, %v1621
    %v1624 = vrot.slane %v1536, 4
    %v1626 = vadd.f32 %v597, %v1624
    %v1627 = vxor.u32 %v1626, 2147483648
    %v1628 = vmul.f32 %v1627, 1.442695
    %v1629 = vpow.pop %v1628
    %v1630 = vadd.f32 %v1629, 1.0
    %v1631 = vrcp.pop %v1630
    %v1632 = vmul.f32 1.0, %v1631
    %v1634 = vrot.slane %v1575, 4
    %v1636 = vmul.f32 %v1622, %v1634
    %v1637 = vadd.f32 %v599, %v1636
    %v1638 = vtanh.pop %v1637
    %v1639 = vsub.f32 1.0, %v1632
    %v1640 = vmul.f32 %v1639, %v1638
    %v1642 = vrot.slane %v1404, 1
    %v1644 = vmul.f32 %v1632, %v1642
    %v1645 = vadd.f32 %v1640, %v1644
    %1646 = vst [vmem:[#allocation2] sm:$0x4] %v1612
    %1647 = vst [vmem:[#allocation3] sm:$0x10] %v1645
    %v1648 = vpack.c.bf16 %v1612, %v1612
    %v1650 = vrot.slane %v1648, 1
    %1652 = vmatprep.subr.bf16.mxu0 %v750
    %1653 = vmatpush1.bf16.msra.mxu0 %v749
    %1654 = vmatprep.subr.bf16.mxu0 %v753
    %1655 = vmatpush1.bf16.msra.mxu0 %v752
    %1656 = vmatprep.subr.bf16.mxu0 %v756
    %1657 = vmatpush1.bf16.msra.mxu0 %v755
    %1658 = vmatprep.subr.bf16.mxu0 %v759
    %1659 = vmatpush1.bf16.msra.mxu0 %v758
    %1660 = vmatprep.subr.bf16.mxu0 %v762
    %1661 = vmatpush1.bf16.msra.mxu0 %v761
    %1662 = vmatprep.subr.bf16.mxu0 %v765
    %1663 = vmatpush1.bf16.msra.mxu0 %v764
    %1664 = vmatprep.subr.bf16.mxu0 %v768
    %1665 = vmatpush1.bf16.msra.mxu0 %v767
    %1666 = vmatprep.subr.bf16.mxu0 %v771
    %1667 = vmatpush1.bf16.msra.mxu0 %v770
    %1668 = vmatprep.subr.bf16.mxu0 0
    %1669 = vmatpush1.bf16.msra.mxu0 0
    %1670 = vmatprep.subr.bf16.mxu0 0
    %1671 = vmatpush1.bf16.msra.mxu0 0
    %1672 = vmatprep.subr.bf16.mxu0 0
    %1673 = vmatpush1.bf16.msra.mxu0 0
    %1674 = vmatprep.subr.bf16.mxu0 0
    %1675 = vmatpush1.bf16.msra.mxu0 0
    %1676 = vmatprep.subr.bf16.mxu0 0
    %1677 = vmatpush1.bf16.msra.mxu0 0
    %1678 = vmatprep.subr.bf16.mxu0 0
    %1679 = vmatpush1.bf16.msra.mxu0 0
    %1680 = vmatprep.subr.bf16.mxu0 0
    %1681 = vmatpush1.bf16.msra.mxu0 0
    %1682 = vmatprep.subr.bf16.mxu0 0
    %1683 = vmatpush1.bf16.msra.mxu0 0
    %1684 = vmatprep.mubr.bf16.mxu0 0
    %1685 = vmatmul.mubr.bf16.gmra.mrb[0].mxu0 %v1650
    %v1686 = vpop.f32.mrb[0].mxu0
    %v1687 = vadd.f32 %v801, %v1686
    %v1688 = vpop.f32.mrb[0].mxu0
    %v1689 = vadd.f32 %v805, %v1688
    %v1690 = vpop.f32.mrb[0].mxu0
    %v1691 = vpop.f32.mrb[0].mxu0
    %1692 = vdwg.mxu0
    %1693 = vmatprep.subr.bf16.mxu0 0
    %1694 = vmatpush1.bf16.msra.mxu0 %v751
    %1695 = vmatprep.subr.bf16.mxu0 0
    %1696 = vmatpush1.bf16.msra.mxu0 %v754
    %1697 = vmatprep.subr.bf16.mxu0 0
    %1698 = vmatpush1.bf16.msra.mxu0 %v757
    %1699 = vmatprep.subr.bf16.mxu0 0
    %1700 = vmatpush1.bf16.msra.mxu0 %v760
    %1701 = vmatprep.subr.bf16.mxu0 0
    %1702 = vmatpush1.bf16.msra.mxu0 %v763
    %1703 = vmatprep.subr.bf16.mxu0 0
    %1704 = vmatpush1.bf16.msra.mxu0 %v766
    %1705 = vmatprep.subr.bf16.mxu0 0
    %1706 = vmatpush1.bf16.msra.mxu0 %v769
    %1707 = vmatprep.subr.bf16.mxu0 0
    %1708 = vmatpush1.bf16.msra.mxu0 %v772
    %1709 = vmatprep.subr.bf16.mxu0 0
    %1710 = vmatpush1.bf16.msra.mxu0 0
    %1711 = vmatprep.subr.bf16.mxu0 0
    %1712 = vmatpush1.bf16.msra.mxu0 0
    %1713 = vmatprep.subr.bf16.mxu0 0
    %1714 = vmatpush1.bf16.msra.mxu0 0
    %1715 = vmatprep.subr.bf16.mxu0 0
    %1716 = vmatpush1.bf16.msra.mxu0 0
    %1717 = vmatprep.subr.bf16.mxu0 0
    %1718 = vmatpush1.bf16.msra.mxu0 0
    %1719 = vmatprep.subr.bf16.mxu0 0
    %1720 = vmatpush1.bf16.msra.mxu0 0
    %1721 = vmatprep.subr.bf16.mxu0 0
    %1722 = vmatpush1.bf16.msra.mxu0 0
    %1723 = vmatprep.subr.bf16.mxu0 0
    %1724 = vmatpush1.bf16.msra.mxu0 0
    %1725 = vmatprep.mubr.bf16.mxu0 0
    %1726 = vmatmul.mubr.bf16.gmra.mrb[0].mxu0 %v1650
    %v1727 = vpop.f32.mrb[0].mxu0
    %v1728 = vadd.f32 %v809, %v1727
    %v1729 = vpop.f32.mrb[0].mxu0
    %v1730 = vpop.f32.mrb[0].mxu0
    %v1731 = vpop.f32.mrb[0].mxu0
    %1732 = vdwg.mxu0
    %v1733 = vpack.c.bf16 %v1645, %v1645
    %v1735 = vrot.slane %v1733, 2
    %1737 = vmatprep.subr.bf16.mxu0 %v975
    %1738 = vmatpush1.bf16.msra.mxu0 %v974
    %1739 = vmatprep.subr.bf16.mxu0 %v978
    %1740 = vmatpush1.bf16.msra.mxu0 %v977
    %1741 = vmatprep.subr.bf16.mxu0 %v981
    %1742 = vmatpush1.bf16.msra.mxu0 %v980
    %1743 = vmatprep.subr.bf16.mxu0 %v984
    %1744 = vmatpush1.bf16.msra.mxu0 %v983
    %1745 = vmatprep.subr.bf16.mxu0 %v987
    %1746 = vmatpush1.bf16.msra.mxu0 %v986
    %1747 = vmatprep.subr.bf16.mxu0 %v990
    %1748 = vmatpush1.bf16.msra.mxu0 %v989
    %1749 = vmatprep.subr.bf16.mxu0 %v993
    %1750 = vmatpush1.bf16.msra.mxu0 %v992
    %1751 = vmatprep.subr.bf16.mxu0 %v996
    %1752 = vmatpush1.bf16.msra.mxu0 %v995
    %1753 = vmatprep.subr.bf16.mxu0 0
    %1754 = vmatpush1.bf16.msra.mxu0 0
    %1755 = vmatprep.subr.bf16.mxu0 0
    %1756 = vmatpush1.bf16.msra.mxu0 0
    %1757 = vmatprep.subr.bf16.mxu0 0
    %1758 = vmatpush1.bf16.msra.mxu0 0
    %1759 = vmatprep.subr.bf16.mxu0 0
    %1760 = vmatpush1.bf16.msra.mxu0 0
    %1761 = vmatprep.subr.bf16.mxu0 0
    %1762 = vmatpush1.bf16.msra.mxu0 0
    %1763 = vmatprep.subr.bf16.mxu0 0
    %1764 = vmatpush1.bf16.msra.mxu0 0
    %1765 = vmatprep.subr.bf16.mxu0 0
    %1766 = vmatpush1.bf16.msra.mxu0 0
    %1767 = vmatprep.subr.bf16.mxu0 0
    %1768 = vmatpush1.bf16.msra.mxu0 0
    %1769 = vmatprep.mubr.bf16.mxu0 0
    %1770 = vmatmul.mubr.bf16.gmra.mrb[0].mxu0 %v1735
    %v1771 = vpop.f32.mrb[0].mxu0
    %v1772 = vadd.f32 %v1026, %v1771
    %v1773 = vpop.f32.mrb[0].mxu0
    %v1774 = vadd.f32 %v1030, %v1773
    %v1775 = vpop.f32.mrb[0].mxu0
    %v1776 = vpop.f32.mrb[0].mxu0
    %1777 = vdwg.mxu0
    %1778 = vmatprep.subr.bf16.mxu0 0
    %1779 = vmatpush1.bf16.msra.mxu0 %v976
    %1780 = vmatprep.subr.bf16.mxu0 0
    %1781 = vmatpush1.bf16.msra.mxu0 %v979
    %1782 = vmatprep.subr.bf16.mxu0 0
    %1783 = vmatpush1.bf16.msra.mxu0 %v982
    %1784 = vmatprep.subr.bf16.mxu0 0
    %1785 = vmatpush1.bf16.msra.mxu0 %v985
    %1786 = vmatprep.subr.bf16.mxu0 0
    %1787 = vmatpush1.bf16.msra.mxu0 %v988
    %1788 = vmatprep.subr.bf16.mxu0 0
    %1789 = vmatpush1.bf16.msra.mxu0 %v991
    %1790 = vmatprep.subr.bf16.mxu0 0
    %1791 = vmatpush1.bf16.msra.mxu0 %v994
    %1792 = vmatprep.subr.bf16.mxu0 0
    %1793 = vmatpush1.bf16.msra.mxu0 %v997
    %1794 = vmatprep.subr.bf16.mxu0 0
    %1795 = vmatpush1.bf16.msra.mxu0 0
    %1796 = vmatprep.subr.bf16.mxu0 0
    %1797 = vmatpush1.bf16.msra.mxu0 0
    %1798 = vmatprep.subr.bf16.mxu0 0
    %1799 = vmatpush1.bf16.msra.mxu0 0
    %1800 = vmatprep.subr.bf16.mxu0 0
    %1801 = vmatpush1.bf16.msra.mxu0 0
    %1802 = vmatprep.subr.bf16.mxu0 0
    %1803 = vmatpush1.bf16.msra.mxu0 0
    %1804 = vmatprep.subr.bf16.mxu0 0
    %1805 = vmatpush1.bf16.msra.mxu0 0
    %1806 = vmatprep.subr.bf16.mxu0 0
    %1807 = vmatpush1.bf16.msra.mxu0 0
    %1808 = vmatprep.subr.bf16.mxu0 0
    %1809 = vmatpush1.bf16.msra.mxu0 0
    %1810 = vmatprep.mubr.bf16.mxu0 0
    %1811 = vmatmul.mubr.bf16.gmra.mrb[0].mxu0 %v1735
    %v1812 = vpop.f32.mrb[0].mxu0
    %v1813 = vadd.f32 %v1034, %v1812
    %v1814 = vpop.f32.mrb[0].mxu0
    %v1815 = vpop.f32.mrb[0].mxu0
    %v1816 = vpop.f32.mrb[0].mxu0
    %1817 = vdwg.mxu0
    %v1819 = vrot.slane %v1687, 5
    %v1821 = vadd.f32 %v515, %v1819
    %v1822 = vxor.u32 %v1821, 2147483648
    %v1823 = vmul.f32 %v1822, 1.442695
    %v1824 = vpow.pop %v1823
    %v1825 = vadd.f32 %v1824, 1.0
    %v1826 = vrcp.pop %v1825
    %v1827 = vmul.f32 1.0, %v1826
    %v1829 = vrot.slane %v1689, 5
    %v1831 = vadd.f32 %v517, %v1829
    %v1832 = vxor.u32 %v1831, 2147483648
    %v1833 = vmul.f32 %v1832, 1.442695
    %v1834 = vpow.pop %v1833
    %v1835 = vadd.f32 %v1834, 1.0
    %v1836 = vrcp.pop %v1835
    %v1837 = vmul.f32 1.0, %v1836
    %v1839 = vrot.slane %v1728, 5
    %v1841 = vmul.f32 %v1827, %v1839
    %v1842 = vadd.f32 %v556, %v1841
    %v1843 = vtanh.pop %v1842
    %v1844 = vsub.f32 1.0, %v1837
    %v1845 = vmul.f32 %v1844, %v1843
    %v1847 = vrot.slane %v1612, 7
    %v1849 = vmul.f32 %v1837, %v1847
    %v1850 = vadd.f32 %v1845, %v1849
    %v1852 = vrot.slane %v1772, 5
    %v1854 = vadd.f32 %v558, %v1852
    %v1855 = vxor.u32 %v1854, 2147483648
    %v1856 = vmul.f32 %v1855, 1.442695
    %v1857 = vpow.pop %v1856
    %v1858 = vadd.f32 %v1857, 1.0
    %v1859 = vrcp.pop %v1858
    %v1860 = vmul.f32 1.0, %v1859
    %v1862 = vrot.slane %v1774, 5
    %v1864 = vadd.f32 %v597, %v1862
    %v1865 = vxor.u32 %v1864, 2147483648
    %v1866 = vmul.f32 %v1865, 1.442695
    %v1867 = vpow.pop %v1866
    %v1868 = vadd.f32 %v1867, 1.0
    %v1869 = vrcp.pop %v1868
    %v1870 = vmul.f32 1.0, %v1869
    %v1872 = vrot.slane %v1813, 5
    %v1874 = vmul.f32 %v1860, %v1872
    %v1875 = vadd.f32 %v599, %v1874
    %v1876 = vtanh.pop %v1875
    %v1877 = vsub.f32 1.0, %v1870
    %v1878 = vmul.f32 %v1877, %v1876
    %v1880 = vrot.slane %v1645, 1
    %v1882 = vmul.f32 %v1870, %v1880
    %v1883 = vadd.f32 %v1878, %v1882
    %1884 = vst [vmem:[#allocation2] sm:$0x8] %v1850
    %1885 = vst [vmem:[#allocation3] sm:$0x8] %v1883
    %v1886 = vpack.c.bf16 %v1850, %v1850
    %v1888 = vshrl.u32 %v1886, 16
    %v1890 = vrot.slane %v1888, 1
    %1892 = vmatprep.subr.bf16.mxu0 %v750
    %1893 = vmatpush1.bf16.msra.mxu0 %v749
    %1894 = vmatprep.subr.bf16.mxu0 %v753
    %1895 = vmatpush1.bf16.msra.mxu0 %v752
    %1896 = vmatprep.subr.bf16.mxu0 %v756
    %1897 = vmatpush1.bf16.msra.mxu0 %v755
    %1898 = vmatprep.subr.bf16.mxu0 %v759
    %1899 = vmatpush1.bf16.msra.mxu0 %v758
    %1900 = vmatprep.subr.bf16.mxu0 %v762
    %1901 = vmatpush1.bf16.msra.mxu0 %v761
    %1902 = vmatprep.subr.bf16.mxu0 %v765
    %1903 = vmatpush1.bf16.msra.mxu0 %v764
    %1904 = vmatprep.subr.bf16.mxu0 %v768
    %1905 = vmatpush1.bf16.msra.mxu0 %v767
    %1906 = vmatprep.subr.bf16.mxu0 %v771
    %1907 = vmatpush1.bf16.msra.mxu0 %v770
    %1908 = vmatprep.subr.bf16.mxu0 0
    %1909 = vmatpush1.bf16.msra.mxu0 0
    %1910 = vmatprep.subr.bf16.mxu0 0
    %1911 = vmatpush1.bf16.msra.mxu0 0
    %1912 = vmatprep.subr.bf16.mxu0 0
    %1913 = vmatpush1.bf16.msra.mxu0 0
    %1914 = vmatprep.subr.bf16.mxu0 0
    %1915 = vmatpush1.bf16.msra.mxu0 0
    %1916 = vmatprep.subr.bf16.mxu0 0
    %1917 = vmatpush1.bf16.msra.mxu0 0
    %1918 = vmatprep.subr.bf16.mxu0 0
    %1919 = vmatpush1.bf16.msra.mxu0 0
    %1920 = vmatprep.subr.bf16.mxu0 0
    %1921 = vmatpush1.bf16.msra.mxu0 0
    %1922 = vmatprep.subr.bf16.mxu0 0
    %1923 = vmatpush1.bf16.msra.mxu0 0
    %1924 = vmatprep.mubr.bf16.mxu0 0
    %1925 = vmatmul.mubr.bf16.gmra.mrb[0].mxu0 %v1890
    %v1926 = vpop.f32.mrb[0].mxu0
    %v1927 = vadd.f32 %v801, %v1926
    %v1928 = vpop.f32.mrb[0].mxu0
    %v1929 = vadd.f32 %v805, %v1928
    %v1930 = vpop.f32.mrb[0].mxu0
    %v1931 = vpop.f32.mrb[0].mxu0
    %1932 = vdwg.mxu0
    %1933 = vmatprep.subr.bf16.mxu0 0
    %1934 = vmatpush1.bf16.msra.mxu0 %v751
    %1935 = vmatprep.subr.bf16.mxu0 0
    %1936 = vmatpush1.bf16.msra.mxu0 %v754
    %1937 = vmatprep.subr.bf16.mxu0 0
    %1938 = vmatpush1.bf16.msra.mxu0 %v757
    %1939 = vmatprep.subr.bf16.mxu0 0
    %1940 = vmatpush1.bf16.msra.mxu0 %v760
    %1941 = vmatprep.subr.bf16.mxu0 0
    %1942 = vmatpush1.bf16.msra.mxu0 %v763
    %1943 = vmatprep.subr.bf16.mxu0 0
    %1944 = vmatpush1.bf16.msra.mxu0 %v766
    %1945 = vmatprep.subr.bf16.mxu0 0
    %1946 = vmatpush1.bf16.msra.mxu0 %v769
    %1947 = vmatprep.subr.bf16.mxu0 0
    %1948 = vmatpush1.bf16.msra.mxu0 %v772
    %1949 = vmatprep.subr.bf16.mxu0 0
    %1950 = vmatpush1.bf16.msra.mxu0 0
    %1951 = vmatprep.subr.bf16.mxu0 0
    %1952 = vmatpush1.bf16.msra.mxu0 0
    %1953 = vmatprep.subr.bf16.mxu0 0
    %1954 = vmatpush1.bf16.msra.mxu0 0
    %1955 = vmatprep.subr.bf16.mxu0 0
    %1956 = vmatpush1.bf16.msra.mxu0 0
    %1957 = vmatprep.subr.bf16.mxu0 0
    %1958 = vmatpush1.bf16.msra.mxu0 0
    %1959 = vmatprep.subr.bf16.mxu0 0
    %1960 = vmatpush1.bf16.msra.mxu0 0
    %1961 = vmatprep.subr.bf16.mxu0 0
    %1962 = vmatpush1.bf16.msra.mxu0 0
    %1963 = vmatprep.subr.bf16.mxu0 0
    %1964 = vmatpush1.bf16.msra.mxu0 0
    %1965 = vmatprep.mubr.bf16.mxu0 0
    %1966 = vmatmul.mubr.bf16.gmra.mrb[0].mxu0 %v1890
    %v1967 = vpop.f32.mrb[0].mxu0
    %v1968 = vadd.f32 %v809, %v1967
    %v1969 = vpop.f32.mrb[0].mxu0
    %v1970 = vpop.f32.mrb[0].mxu0
    %v1971 = vpop.f32.mrb[0].mxu0
    %1972 = vdwg.mxu0
    %v1973 = vpack.c.bf16 %v1883, %v1883
    %v1975 = vshrl.u32 %v1973, 16
    %v1977 = vrot.slane %v1975, 1
    %1979 = vmatprep.subr.bf16.mxu0 %v975
    %1980 = vmatpush1.bf16.msra.mxu0 %v974
    %1981 = vmatprep.subr.bf16.mxu0 %v978
    %1982 = vmatpush1.bf16.msra.mxu0 %v977
    %1983 = vmatprep.subr.bf16.mxu0 %v981
    %1984 = vmatpush1.bf16.msra.mxu0 %v980
    %1985 = vmatprep.subr.bf16.mxu0 %v984
    %1986 = vmatpush1.bf16.msra.mxu0 %v983
    %1987 = vmatprep.subr.bf16.mxu0 %v987
    %1988 = vmatpush1.bf16.msra.mxu0 %v986
    %1989 = vmatprep.subr.bf16.mxu0 %v990
    %1990 = vmatpush1.bf16.msra.mxu0 %v989
    %1991 = vmatprep.subr.bf16.mxu0 %v993
    %1992 = vmatpush1.bf16.msra.mxu0 %v992
    %1993 = vmatprep.subr.bf16.mxu0 %v996
    %1994 = vmatpush1.bf16.msra.mxu0 %v995
    %1995 = vmatprep.subr.bf16.mxu0 0
    %1996 = vmatpush1.bf16.msra.mxu0 0
    %1997 = vmatprep.subr.bf16.mxu0 0
    %1998 = vmatpush1.bf16.msra.mxu0 0
    %1999 = vmatprep.subr.bf16.mxu0 0
    %2000 = vmatpush1.bf16.msra.mxu0 0
    %2001 = vmatprep.subr.bf16.mxu0 0
    %2002 = vmatpush1.bf16.msra.mxu0 0
    %2003 = vmatprep.subr.bf16.mxu0 0
    %2004 = vmatpush1.bf16.msra.mxu0 0
    %2005 = vmatprep.subr.bf16.mxu0 0
    %2006 = vmatpush1.bf16.msra.mxu0 0
    %2007 = vmatprep.subr.bf16.mxu0 0
    %2008 = vmatpush1.bf16.msra.mxu0 0
    %2009 = vmatprep.subr.bf16.mxu0 0
    %2010 = vmatpush1.bf16.msra.mxu0 0
    %2011 = vmatprep.mubr.bf16.mxu0 0
    %2012 = vmatmul.mubr.bf16.gmra.mrb[0].mxu0 %v1977
    %v2013 = vpop.f32.mrb[0].mxu0
    %v2014 = vadd.f32 %v1026, %v2013
    %v2015 = vpop.f32.mrb[0].mxu0
    %v2016 = vadd.f32 %v1030, %v2015
    %v2017 = vpop.f32.mrb[0].mxu0
    %v2018 = vpop.f32.mrb[0].mxu0
    %2019 = vdwg.mxu0
    %2020 = vmatprep.subr.bf16.mxu0 0
    %2021 = vmatpush1.bf16.msra.mxu0 %v976
    %2022 = vmatprep.subr.bf16.mxu0 0
    %2023 = vmatpush1.bf16.msra.mxu0 %v979
    %2024 = vmatprep.subr.bf16.mxu0 0
    %2025 = vmatpush1.bf16.msra.mxu0 %v982
    %2026 = vmatprep.subr.bf16.mxu0 0
    %2027 = vmatpush1.bf16.msra.mxu0 %v985
    %2028 = vmatprep.subr.bf16.mxu0 0
    %2029 = vmatpush1.bf16.msra.mxu0 %v988
    %2030 = vmatprep.subr.bf16.mxu0 0
    %2031 = vmatpush1.bf16.msra.mxu0 %v991
    %2032 = vmatprep.subr.bf16.mxu0 0
    %2033 = vmatpush1.bf16.msra.mxu0 %v994
    %2034 = vmatprep.subr.bf16.mxu0 0
    %2035 = vmatpush1.bf16.msra.mxu0 %v997
    %2036 = vmatprep.subr.bf16.mxu0 0
    %2037 = vmatpush1.bf16.msra.mxu0 0
    %2038 = vmatprep.subr.bf16.mxu0 0
    %2039 = vmatpush1.bf16.msra.mxu0 0
    %2040 = vmatprep.subr.bf16.mxu0 0
    %2041 = vmatpush1.bf16.msra.mxu0 0
    %2042 = vmatprep.subr.bf16.mxu0 0
    %2043 = vmatpush1.bf16.msra.mxu0 0
    %2044 = vmatprep.subr.bf16.mxu0 0
    %2045 = vmatpush1.bf16.msra.mxu0 0
    %2046 = vmatprep.subr.bf16.mxu0 0
    %2047 = vmatpush1.bf16.msra.mxu0 0
    %2048 = vmatprep.subr.bf16.mxu0 0
    %2049 = vmatpush1.bf16.msra.mxu0 0
    %2050 = vmatprep.subr.bf16.mxu0 0
    %2051 = vmatpush1.bf16.msra.mxu0 0
    %2052 = vmatprep.mubr.bf16.mxu0 0
    %2053 = vmatmul.mubr.bf16.gmra.mrb[0].mxu0 %v1977
    %v2054 = vpop.f32.mrb[0].mxu0
    %v2055 = vadd.f32 %v1034, %v2054
    %v2056 = vpop.f32.mrb[0].mxu0
    %v2057 = vpop.f32.mrb[0].mxu0
    %v2058 = vpop.f32.mrb[0].mxu0
    %2059 = vdwg.mxu0
    %v2061 = vrot.slane %v1927, 4
    %v2063 = vadd.f32 %v515, %v2061
    %v2064 = vxor.u32 %v2063, 2147483648
    %v2065 = vmul.f32 %v2064, 1.442695
    %v2066 = vpow.pop %v2065
    %v2067 = vadd.f32 %v2066, 1.0
    %v2068 = vrcp.pop %v2067
    %v2069 = vmul.f32 1.0, %v2068
    %v2071 = vrot.slane %v1929, 4
    %v2073 = vadd.f32 %v517, %v2071
    %v2074 = vxor.u32 %v2073, 2147483648
    %v2075 = vmul.f32 %v2074, 1.442695
    %v2076 = vpow.pop %v2075
    %v2077 = vadd.f32 %v2076, 1.0
    %v2078 = vrcp.pop %v2077
    %v2079 = vmul.f32 1.0, %v2078
    %v2081 = vrot.slane %v1968, 4
    %v2083 = vmul.f32 %v2069, %v2081
    %v2084 = vadd.f32 %v556, %v2083
    %v2085 = vtanh.pop %v2084
    %v2086 = vsub.f32 1.0, %v2079
    %v2087 = vmul.f32 %v2086, %v2085
    %v2089 = vrot.slane %v1850, 7
    %v2091 = vmul.f32 %v2079, %v2089
    %v2092 = vadd.f32 %v2087, %v2091
    %v2094 = vrot.slane %v2014, 6
    %v2096 = vadd.f32 %v558, %v2094
    %v2097 = vxor.u32 %v2096, 2147483648
    %v2098 = vmul.f32 %v2097, 1.442695
    %v2099 = vpow.pop %v2098
    %v2100 = vadd.f32 %v2099, 1.0
    %v2101 = vrcp.pop %v2100
    %v2102 = vmul.f32 1.0, %v2101
    %v2104 = vrot.slane %v2016, 6
    %v2106 = vadd.f32 %v597, %v2104
    %v2107 = vxor.u32 %v2106, 2147483648
    %v2108 = vmul.f32 %v2107, 1.442695
    %v2109 = vpow.pop %v2108
    %v2110 = vadd.f32 %v2109, 1.0
    %v2111 = vrcp.pop %v2110
    %v2112 = vmul.f32 1.0, %v2111
    %v2114 = vrot.slane %v2055, 6
    %v2116 = vmul.f32 %v2102, %v2114
    %v2117 = vadd.f32 %v599, %v2116
    %v2118 = vtanh.pop %v2117
    %v2119 = vsub.f32 1.0, %v2112
    %v2120 = vmul.f32 %v2119, %v2118
    %v2122 = vrot.slane %v1883, 1
    %v2124 = vmul.f32 %v2112, %v2122
    %v2125 = vadd.f32 %v2120, %v2124
    %2126 = vst [vmem:[#allocation2] sm:$0x10] %v2092
    %2127 = vst [vmem:[#allocation3] sm:$0x4] %v2125
    %v2128 = vpack.c.bf16 %v2092, %v2092
    %v2130 = vrot.slane %v2128, 2
    %2132 = vmatprep.subr.bf16.mxu0 %v750
    %2133 = vmatpush1.bf16.msra.mxu0 %v749
    %2134 = vmatprep.subr.bf16.mxu0 %v753
    %2135 = vmatpush1.bf16.msra.mxu0 %v752
    %2136 = vmatprep.subr.bf16.mxu0 %v756
    %2137 = vmatpush1.bf16.msra.mxu0 %v755
    %2138 = vmatprep.subr.bf16.mxu0 %v759
    %2139 = vmatpush1.bf16.msra.mxu0 %v758
    %2140 = vmatprep.subr.bf16.mxu0 %v762
    %2141 = vmatpush1.bf16.msra.mxu0 %v761
    %2142 = vmatprep.subr.bf16.mxu0 %v765
    %2143 = vmatpush1.bf16.msra.mxu0 %v764
    %2144 = vmatprep.subr.bf16.mxu0 %v768
    %2145 = vmatpush1.bf16.msra.mxu0 %v767
    %2146 = vmatprep.subr.bf16.mxu0 %v771
    %2147 = vmatpush1.bf16.msra.mxu0 %v770
    %2148 = vmatprep.subr.bf16.mxu0 0
    %2149 = vmatpush1.bf16.msra.mxu0 0
    %2150 = vmatprep.subr.bf16.mxu0 0
    %2151 = vmatpush1.bf16.msra.mxu0 0
    %2152 = vmatprep.subr.bf16.mxu0 0
    %2153 = vmatpush1.bf16.msra.mxu0 0
    %2154 = vmatprep.subr.bf16.mxu0 0
    %2155 = vmatpush1.bf16.msra.mxu0 0
    %2156 = vmatprep.subr.bf16.mxu0 0
    %2157 = vmatpush1.bf16.msra.mxu0 0
    %2158 = vmatprep.subr.bf16.mxu0 0
    %2159 = vmatpush1.bf16.msra.mxu0 0
    %2160 = vmatprep.subr.bf16.mxu0 0
    %2161 = vmatpush1.bf16.msra.mxu0 0
    %2162 = vmatprep.subr.bf16.mxu0 0
    %2163 = vmatpush1.bf16.msra.mxu0 0
    %2164 = vmatprep.mubr.bf16.mxu0 0
    %2165 = vmatmul.mubr.bf16.gmra.mrb[0].mxu0 %v2130
    %v2166 = vpop.f32.mrb[0].mxu0
    %v2167 = vadd.f32 %v801, %v2166
    %v2168 = vpop.f32.mrb[0].mxu0
    %v2169 = vadd.f32 %v805, %v2168
    %v2170 = vpop.f32.mrb[0].mxu0
    %v2171 = vpop.f32.mrb[0].mxu0
    %2172 = vdwg.mxu0
    %2173 = vmatprep.subr.bf16.mxu0 0
    %2174 = vmatpush1.bf16.msra.mxu0 %v751
    %2175 = vmatprep.subr.bf16.mxu0 0
    %2176 = vmatpush1.bf16.msra.mxu0 %v754
    %2177 = vmatprep.subr.bf16.mxu0 0
    %2178 = vmatpush1.bf16.msra.mxu0 %v757
    %2179 = vmatprep.subr.bf16.mxu0 0
    %2180 = vmatpush1.bf16.msra.mxu0 %v760
    %2181 = vmatprep.subr.bf16.mxu0 0
    %2182 = vmatpush1.bf16.msra.mxu0 %v763
    %2183 = vmatprep.subr.bf16.mxu0 0
    %2184 = vmatpush1.bf16.msra.mxu0 %v766
    %2185 = vmatprep.subr.bf16.mxu0 0
    %2186 = vmatpush1.bf16.msra.mxu0 %v769
    %2187 = vmatprep.subr.bf16.mxu0 0
    %2188 = vmatpush1.bf16.msra.mxu0 %v772
    %2189 = vmatprep.subr.bf16.mxu0 0
    %2190 = vmatpush1.bf16.msra.mxu0 0
    %2191 = vmatprep.subr.bf16.mxu0 0
    %2192 = vmatpush1.bf16.msra.mxu0 0
    %2193 = vmatprep.subr.bf16.mxu0 0
    %2194 = vmatpush1.bf16.msra.mxu0 0
    %2195 = vmatprep.subr.bf16.mxu0 0
    %2196 = vmatpush1.bf16.msra.mxu0 0
    %2197 = vmatprep.subr.bf16.mxu0 0
    %2198 = vmatpush1.bf16.msra.mxu0 0
    %2199 = vmatprep.subr.bf16.mxu0 0
    %2200 = vmatpush1.bf16.msra.mxu0 0
    %2201 = vmatprep.subr.bf16.mxu0 0
    %2202 = vmatpush1.bf16.msra.mxu0 0
    %2203 = vmatprep.subr.bf16.mxu0 0
    %2204 = vmatpush1.bf16.msra.mxu0 0
    %2205 = vmatprep.mubr.bf16.mxu0 0
    %2206 = vmatmul.mubr.bf16.gmra.mrb[0].mxu0 %v2130
    %v2207 = vpop.f32.mrb[0].mxu0
    %v2208 = vadd.f32 %v809, %v2207
    %v2209 = vpop.f32.mrb[0].mxu0
    %v2210 = vpop.f32.mrb[0].mxu0
    %v2211 = vpop.f32.mrb[0].mxu0
    %2212 = vdwg.mxu0
    %v2213 = vpack.c.bf16 %v2125, %v2125
    %v2215 = vrot.slane %v2213, 1
    %2217 = vmatprep.subr.bf16.mxu0 %v975
    %2218 = vmatpush1.bf16.msra.mxu0 %v974
    %2219 = vmatprep.subr.bf16.mxu0 %v978
    %2220 = vmatpush1.bf16.msra.mxu0 %v977
    %2221 = vmatprep.subr.bf16.mxu0 %v981
    %2222 = vmatpush1.bf16.msra.mxu0 %v980
    %2223 = vmatprep.subr.bf16.mxu0 %v984
    %2224 = vmatpush1.bf16.msra.mxu0 %v983
    %2225 = vmatprep.subr.bf16.mxu0 %v987
    %2226 = vmatpush1.bf16.msra.mxu0 %v986
    %2227 = vmatprep.subr.bf16.mxu0 %v990
    %2228 = vmatpush1.bf16.msra.mxu0 %v989
    %2229 = vmatprep.subr.bf16.mxu0 %v993
    %2230 = vmatpush1.bf16.msra.mxu0 %v992
    %2231 = vmatprep.subr.bf16.mxu0 %v996
    %2232 = vmatpush1.bf16.msra.mxu0 %v995
    %2233 = vmatprep.subr.bf16.mxu0 0
    %2234 = vmatpush1.bf16.msra.mxu0 0
    %2235 = vmatprep.subr.bf16.mxu0 0
    %2236 = vmatpush1.bf16.msra.mxu0 0
    %2237 = vmatprep.subr.bf16.mxu0 0
    %2238 = vmatpush1.bf16.msra.mxu0 0
    %2239 = vmatprep.subr.bf16.mxu0 0
    %2240 = vmatpush1.bf16.msra.mxu0 0
    %2241 = vmatprep.subr.bf16.mxu0 0
    %2242 = vmatpush1.bf16.msra.mxu0 0
    %2243 = vmatprep.subr.bf16.mxu0 0
    %2244 = vmatpush1.bf16.msra.mxu0 0
    %2245 = vmatprep.subr.bf16.mxu0 0
    %2246 = vmatpush1.bf16.msra.mxu0 0
    %2247 = vmatprep.subr.bf16.mxu0 0
    %2248 = vmatpush1.bf16.msra.mxu0 0
    %2249 = vmatprep.mubr.bf16.mxu0 0
    %2250 = vmatmul.mubr.bf16.gmra.mrb[0].mxu0 %v2215
    %v2251 = vpop.f32.mrb[0].mxu0
    %v2252 = vadd.f32 %v1026, %v2251
    %v2253 = vpop.f32.mrb[0].mxu0
    %v2254 = vadd.f32 %v1030, %v2253
    %v2255 = vpop.f32.mrb[0].mxu0
    %v2256 = vpop.f32.mrb[0].mxu0
    %2257 = vdwg.mxu0
    %2258 = vmatprep.subr.bf16.mxu0 0
    %2259 = vmatpush1.bf16.msra.mxu0 %v976
    %2260 = vmatprep.subr.bf16.mxu0 0
    %2261 = vmatpush1.bf16.msra.mxu0 %v979
    %2262 = vmatprep.subr.bf16.mxu0 0
    %2263 = vmatpush1.bf16.msra.mxu0 %v982
    %2264 = vmatprep.subr.bf16.mxu0 0
    %2265 = vmatpush1.bf16.msra.mxu0 %v985
    %2266 = vmatprep.subr.bf16.mxu0 0
    %2267 = vmatpush1.bf16.msra.mxu0 %v988
    %2268 = vmatprep.subr.bf16.mxu0 0
    %2269 = vmatpush1.bf16.msra.mxu0 %v991
    %2270 = vmatprep.subr.bf16.mxu0 0
    %2271 = vmatpush1.bf16.msra.mxu0 %v994
    %2272 = vmatprep.subr.bf16.mxu0 0
    %2273 = vmatpush1.bf16.msra.mxu0 %v997
    %2274 = vmatprep.subr.bf16.mxu0 0
    %2275 = vmatpush1.bf16.msra.mxu0 0
    %2276 = vmatprep.subr.bf16.mxu0 0
    %2277 = vmatpush1.bf16.msra.mxu0 0
    %2278 = vmatprep.subr.bf16.mxu0 0
    %2279 = vmatpush1.bf16.msra.mxu0 0
    %2280 = vmatprep.subr.bf16.mxu0 0
    %2281 = vmatpush1.bf16.msra.mxu0 0
    %2282 = vmatprep.subr.bf16.mxu0 0
    %2283 = vmatpush1.bf16.msra.mxu0 0
    %2284 = vmatprep.subr.bf16.mxu0 0
    %2285 = vmatpush1.bf16.msra.mxu0 0
    %2286 = vmatprep.subr.bf16.mxu0 0
    %2287 = vmatpush1.bf16.msra.mxu0 0
    %2288 = vmatprep.subr.bf16.mxu0 0
    %2289 = vmatpush1.bf16.msra.mxu0 0
    %2290 = vmatprep.mubr.bf16.mxu0 0
    %2291 = vmatmul.mubr.bf16.gmra.mrb[0].mxu0 %v2215
    %v2292 = vpop.f32.mrb[0].mxu0
    %v2293 = vadd.f32 %v1034, %v2292
    %v2294 = vpop.f32.mrb[0].mxu0
    %v2295 = vpop.f32.mrb[0].mxu0
    %v2296 = vpop.f32.mrb[0].mxu0
    %2297 = vdwg.mxu0
    %v2299 = vrot.slane %v2167, 3
    %v2301 = vadd.f32 %v515, %v2299
    %v2302 = vxor.u32 %v2301, 2147483648
    %v2303 = vmul.f32 %v2302, 1.442695
    %v2304 = vpow.pop %v2303
    %v2305 = vadd.f32 %v2304, 1.0
    %v2306 = vrcp.pop %v2305
    %v2307 = vmul.f32 1.0, %v2306
    %v2309 = vrot.slane %v2169, 3
    %v2311 = vadd.f32 %v517, %v2309
    %v2312 = vxor.u32 %v2311, 2147483648
    %v2313 = vmul.f32 %v2312, 1.442695
    %v2314 = vpow.pop %v2313
    %v2315 = vadd.f32 %v2314, 1.0
    %v2316 = vrcp.pop %v2315
    %v2317 = vmul.f32 1.0, %v2316
    %v2319 = vrot.slane %v2208, 3
    %v2321 = vmul.f32 %v2307, %v2319
    %v2322 = vadd.f32 %v556, %v2321
    %v2323 = vtanh.pop %v2322
    %v2324 = vsub.f32 1.0, %v2317
    %v2325 = vmul.f32 %v2324, %v2323
    %v2327 = vrot.slane %v2092, 7
    %v2329 = vmul.f32 %v2317, %v2327
    %v2330 = vadd.f32 %v2325, %v2329
    %v2332 = vrot.slane %v2252, 7
    %v2334 = vadd.f32 %v558, %v2332
    %v2335 = vxor.u32 %v2334, 2147483648
    %v2336 = vmul.f32 %v2335, 1.442695
    %v2337 = vpow.pop %v2336
    %v2338 = vadd.f32 %v2337, 1.0
    %v2339 = vrcp.pop %v2338
    %v2340 = vmul.f32 1.0, %v2339
    %v2342 = vrot.slane %v2254, 7
    %v2344 = vadd.f32 %v597, %v2342
    %v2345 = vxor.u32 %v2344, 2147483648
    %v2346 = vmul.f32 %v2345, 1.442695
    %v2347 = vpow.pop %v2346
    %v2348 = vadd.f32 %v2347, 1.0
    %v2349 = vrcp.pop %v2348
    %v2350 = vmul.f32 1.0, %v2349
    %v2352 = vrot.slane %v2293, 7
    %v2354 = vmul.f32 %v2340, %v2352
    %v2355 = vadd.f32 %v599, %v2354
    %v2356 = vtanh.pop %v2355
    %v2357 = vsub.f32 1.0, %v2350
    %v2358 = vmul.f32 %v2357, %v2356
    %v2360 = vrot.slane %v2125, 1
    %v2362 = vmul.f32 %v2350, %v2360
    %v2363 = vadd.f32 %v2358, %v2362
    %2364 = vst [vmem:[#allocation2] sm:$0x20] %v2330
    %2365 = vst [vmem:[#allocation3] sm:$0x2] %v2363
    %v2366 = vpack.c.bf16 %v2330, %v2330
    %v2368 = vshrl.u32 %v2366, 16
    %v2370 = vrot.slane %v2368, 2
    %2372 = vmatprep.subr.bf16.mxu0 %v750
    %2373 = vmatpush1.bf16.msra.mxu0 %v749
    %2374 = vmatprep.subr.bf16.mxu0 %v753
    %2375 = vmatpush1.bf16.msra.mxu0 %v752
    %2376 = vmatprep.subr.bf16.mxu0 %v756
    %2377 = vmatpush1.bf16.msra.mxu0 %v755
    %2378 = vmatprep.subr.bf16.mxu0 %v759
    %2379 = vmatpush1.bf16.msra.mxu0 %v758
    %2380 = vmatprep.subr.bf16.mxu0 %v762
    %2381 = vmatpush1.bf16.msra.mxu0 %v761
    %2382 = vmatprep.subr.bf16.mxu0 %v765
    %2383 = vmatpush1.bf16.msra.mxu0 %v764
    %2384 = vmatprep.subr.bf16.mxu0 %v768
    %2385 = vmatpush1.bf16.msra.mxu0 %v767
    %2386 = vmatprep.subr.bf16.mxu0 %v771
    %2387 = vmatpush1.bf16.msra.mxu0 %v770
    %2388 = vmatprep.subr.bf16.mxu0 0
    %2389 = vmatpush1.bf16.msra.mxu0 0
    %2390 = vmatprep.subr.bf16.mxu0 0
    %2391 = vmatpush1.bf16.msra.mxu0 0
    %2392 = vmatprep.subr.bf16.mxu0 0
    %2393 = vmatpush1.bf16.msra.mxu0 0
    %2394 = vmatprep.subr.bf16.mxu0 0
    %2395 = vmatpush1.bf16.msra.mxu0 0
    %2396 = vmatprep.subr.bf16.mxu0 0
    %2397 = vmatpush1.bf16.msra.mxu0 0
    %2398 = vmatprep.subr.bf16.mxu0 0
    %2399 = vmatpush1.bf16.msra.mxu0 0
    %2400 = vmatprep.subr.bf16.mxu0 0
    %2401 = vmatpush1.bf16.msra.mxu0 0
    %2402 = vmatprep.subr.bf16.mxu0 0
    %2403 = vmatpush1.bf16.msra.mxu0 0
    %2404 = vmatprep.mubr.bf16.mxu0 0
    %2405 = vmatmul.mubr.bf16.gmra.mrb[0].mxu0 %v2370
    %v2406 = vpop.f32.mrb[0].mxu0
    %v2407 = vadd.f32 %v801, %v2406
    %v2408 = vpop.f32.mrb[0].mxu0
    %v2409 = vadd.f32 %v805, %v2408
    %v2410 = vpop.f32.mrb[0].mxu0
    %v2411 = vpop.f32.mrb[0].mxu0
    %2412 = vdwg.mxu0
    %2413 = vmatprep.subr.bf16.mxu0 0
    %2414 = vmatpush1.bf16.msra.mxu0 %v751
    %2415 = vmatprep.subr.bf16.mxu0 0
    %2416 = vmatpush1.bf16.msra.mxu0 %v754
    %2417 = vmatprep.subr.bf16.mxu0 0
    %2418 = vmatpush1.bf16.msra.mxu0 %v757
    %2419 = vmatprep.subr.bf16.mxu0 0
    %2420 = vmatpush1.bf16.msra.mxu0 %v760
    %2421 = vmatprep.subr.bf16.mxu0 0
    %2422 = vmatpush1.bf16.msra.mxu0 %v763
    %2423 = vmatprep.subr.bf16.mxu0 0
    %2424 = vmatpush1.bf16.msra.mxu0 %v766
    %2425 = vmatprep.subr.bf16.mxu0 0
    %2426 = vmatpush1.bf16.msra.mxu0 %v769
    %2427 = vmatprep.subr.bf16.mxu0 0
    %2428 = vmatpush1.bf16.msra.mxu0 %v772
    %2429 = vmatprep.subr.bf16.mxu0 0
    %2430 = vmatpush1.bf16.msra.mxu0 0
    %2431 = vmatprep.subr.bf16.mxu0 0
    %2432 = vmatpush1.bf16.msra.mxu0 0
    %2433 = vmatprep.subr.bf16.mxu0 0
    %2434 = vmatpush1.bf16.msra.mxu0 0
    %2435 = vmatprep.subr.bf16.mxu0 0
    %2436 = vmatpush1.bf16.msra.mxu0 0
    %2437 = vmatprep.subr.bf16.mxu0 0
    %2438 = vmatpush1.bf16.msra.mxu0 0
    %2439 = vmatprep.subr.bf16.mxu0 0
    %2440 = vmatpush1.bf16.msra.mxu0 0
    %2441 = vmatprep.subr.bf16.mxu0 0
    %2442 = vmatpush1.bf16.msra.mxu0 0
    %2443 = vmatprep.subr.bf16.mxu0 0
    %2444 = vmatpush1.bf16.msra.mxu0 0
    %2445 = vmatprep.mubr.bf16.mxu0 0
    %2446 = vmatmul.mubr.bf16.gmra.mrb[0].mxu0 %v2370
    %v2447 = vpop.f32.mrb[0].mxu0
    %v2448 = vadd.f32 %v809, %v2447
    %v2449 = vpop.f32.mrb[0].mxu0
    %v2450 = vpop.f32.mrb[0].mxu0
    %v2451 = vpop.f32.mrb[0].mxu0
    %2452 = vdwg.mxu0
    %v2453 = vpack.c.bf16 %v2363, %v2363
    %v2455 = vshrl.u32 %v2453, 16
    %2458 = vmatprep.subr.bf16.mxu0 %v975
    %2459 = vmatpush1.bf16.msra.mxu0 %v974
    %2460 = vmatprep.subr.bf16.mxu0 %v978
    %2461 = vmatpush1.bf16.msra.mxu0 %v977
    %2462 = vmatprep.subr.bf16.mxu0 %v981
    %2463 = vmatpush1.bf16.msra.mxu0 %v980
    %2464 = vmatprep.subr.bf16.mxu0 %v984
    %2465 = vmatpush1.bf16.msra.mxu0 %v983
    %2466 = vmatprep.subr.bf16.mxu0 %v987
    %2467 = vmatpush1.bf16.msra.mxu0 %v986
    %2468 = vmatprep.subr.bf16.mxu0 %v990
    %2469 = vmatpush1.bf16.msra.mxu0 %v989
    %2470 = vmatprep.subr.bf16.mxu0 %v993
    %2471 = vmatpush1.bf16.msra.mxu0 %v992
    %2472 = vmatprep.subr.bf16.mxu0 %v996
    %2473 = vmatpush1.bf16.msra.mxu0 %v995
    %2474 = vmatprep.subr.bf16.mxu0 0
    %2475 = vmatpush1.bf16.msra.mxu0 0
    %2476 = vmatprep.subr.bf16.mxu0 0
    %2477 = vmatpush1.bf16.msra.mxu0 0
    %2478 = vmatprep.subr.bf16.mxu0 0
    %2479 = vmatpush1.bf16.msra.mxu0 0
    %2480 = vmatprep.subr.bf16.mxu0 0
    %2481 = vmatpush1.bf16.msra.mxu0 0
    %2482 = vmatprep.subr.bf16.mxu0 0
    %2483 = vmatpush1.bf16.msra.mxu0 0
    %2484 = vmatprep.subr.bf16.mxu0 0
    %2485 = vmatpush1.bf16.msra.mxu0 0
    %2486 = vmatprep.subr.bf16.mxu0 0
    %2487 = vmatpush1.bf16.msra.mxu0 0
    %2488 = vmatprep.subr.bf16.mxu0 0
    %2489 = vmatpush1.bf16.msra.mxu0 0
    %2490 = vmatprep.mubr.bf16.mxu0 0
    %2491 = vmatmul.mubr.bf16.gmra.mrb[0].mxu0 %v2455
    %v2492 = vpop.f32.mrb[0].mxu0
    %v2493 = vadd.f32 %v1026, %v2492
    %v2494 = vpop.f32.mrb[0].mxu0
    %v2495 = vadd.f32 %v1030, %v2494
    %v2496 = vpop.f32.mrb[0].mxu0
    %v2497 = vpop.f32.mrb[0].mxu0
    %2498 = vdwg.mxu0
    %2499 = vmatprep.subr.bf16.mxu0 0
    %2500 = vmatpush1.bf16.msra.mxu0 %v976
    %2501 = vmatprep.subr.bf16.mxu0 0
    %2502 = vmatpush1.bf16.msra.mxu0 %v979
    %2503 = vmatprep.subr.bf16.mxu0 0
    %2504 = vmatpush1.bf16.msra.mxu0 %v982
    %2505 = vmatprep.subr.bf16.mxu0 0
    %2506 = vmatpush1.bf16.msra.mxu0 %v985
    %2507 = vmatprep.subr.bf16.mxu0 0
    %2508 = vmatpush1.bf16.msra.mxu0 %v988
    %2509 = vmatprep.subr.bf16.mxu0 0
    %2510 = vmatpush1.bf16.msra.mxu0 %v991
    %2511 = vmatprep.subr.bf16.mxu0 0
    %2512 = vmatpush1.bf16.msra.mxu0 %v994
    %2513 = vmatprep.subr.bf16.mxu0 0
    %2514 = vmatpush1.bf16.msra.mxu0 %v997
    %2515 = vmatprep.subr.bf16.mxu0 0
    %2516 = vmatpush1.bf16.msra.mxu0 0
    %2517 = vmatprep.subr.bf16.mxu0 0
    %2518 = vmatpush1.bf16.msra.mxu0 0
    %2519 = vmatprep.subr.bf16.mxu0 0
    %2520 = vmatpush1.bf16.msra.mxu0 0
    %2521 = vmatprep.subr.bf16.mxu0 0
    %2522 = vmatpush1.bf16.msra.mxu0 0
    %2523 = vmatprep.subr.bf16.mxu0 0
    %2524 = vmatpush1.bf16.msra.mxu0 0
    %2525 = vmatprep.subr.bf16.mxu0 0
    %2526 = vmatpush1.bf16.msra.mxu0 0
    %2527 = vmatprep.subr.bf16.mxu0 0
    %2528 = vmatpush1.bf16.msra.mxu0 0
    %2529 = vmatprep.subr.bf16.mxu0 0
    %2530 = vmatpush1.bf16.msra.mxu0 0
    %2531 = vmatprep.mubr.bf16.mxu0 0
    %2532 = vmatmul.mubr.bf16.gmra.mrb[0].mxu0 %v2455
    %v2533 = vpop.f32.mrb[0].mxu0
    %v2534 = vadd.f32 %v1034, %v2533
    %v2535 = vpop.f32.mrb[0].mxu0
    %v2536 = vpop.f32.mrb[0].mxu0
    %v2537 = vpop.f32.mrb[0].mxu0
    %2538 = vdwg.mxu0
    %v2540 = vrot.slane %v2407, 2
    %v2542 = vadd.f32 %v515, %v2540
    %v2543 = vxor.u32 %v2542, 2147483648
    %v2544 = vmul.f32 %v2543, 1.442695
    %v2545 = vpow.pop %v2544
    %v2546 = vadd.f32 %v2545, 1.0
    %v2547 = vrcp.pop %v2546
    %v2548 = vmul.f32 1.0, %v2547
    %v2550 = vrot.slane %v2409, 2
    %v2552 = vadd.f32 %v517, %v2550
    %v2553 = vxor.u32 %v2552, 2147483648
    %v2554 = vmul.f32 %v2553, 1.442695
    %v2555 = vpow.pop %v2554
    %v2556 = vadd.f32 %v2555, 1.0
    %v2557 = vrcp.pop %v2556
    %v2558 = vmul.f32 1.0, %v2557
    %v2560 = vrot.slane %v2448, 2
    %v2562 = vmul.f32 %v2548, %v2560
    %v2563 = vadd.f32 %v556, %v2562
    %v2564 = vtanh.pop %v2563
    %v2565 = vsub.f32 1.0, %v2558
    %v2566 = vmul.f32 %v2565, %v2564
    %v2568 = vrot.slane %v2330, 7
    %v2570 = vmul.f32 %v2558, %v2568
    %v2571 = vadd.f32 %v2566, %v2570
    %v2572 = vadd.f32 %v558, %v2493
    %v2573 = vxor.u32 %v2572, 2147483648
    %v2574 = vmul.f32 %v2573, 1.442695
    %v2575 = vpow.pop %v2574
    %v2576 = vadd.f32 %v2575, 1.0
    %v2577 = vrcp.pop %v2576
    %v2578 = vmul.f32 1.0, %v2577
    %v2579 = vadd.f32 %v597, %v2495
    %v2580 = vxor.u32 %v2579, 2147483648
    %v2581 = vmul.f32 %v2580, 1.442695
    %v2582 = vpow.pop %v2581
    %v2583 = vadd.f32 %v2582, 1.0
    %v2584 = vrcp.pop %v2583
    %v2585 = vmul.f32 1.0, %v2584
    %v2586 = vmul.f32 %v2578, %v2534
    %v2587 = vadd.f32 %v599, %v2586
    %v2588 = vtanh.pop %v2587
    %v2589 = vsub.f32 1.0, %v2585
    %v2590 = vmul.f32 %v2589, %v2588
    %v2592 = vrot.slane %v2363, 1
    %v2594 = vmul.f32 %v2585, %v2592
    %v2595 = vadd.f32 %v2590, %v2594
    %2596 = vst [vmem:[#allocation2] sm:$0x40] %v2571
    %2597 = vst [vmem:[#allocation3] sm:$0x1] %v2595
    %v2598 = vld [vmem:[#allocation2] sm:$0x7f]
    %v2599 = vld [vmem:[#allocation3] sm:$0x7f]
    %v2600 = vadd.f32 %v2598, %v2599
    %v2601 = vlaneseq
    %v2602 = vand.u32 %v2601, 127
    %v2604 = vrot.slane %v2571, 6
    loop: start=0, step=1, limit=10
    $region90: #{tpu_custom_call.1} parent=1 // loop_pre_header
      _
    $region91: #{tpu_custom_call.1} parent=1 // loop_header
      %s2607 = sphi 0, %s2611
      %p2608 = scmp.ge.s32.totalorder %s2607, 10
      %v2612 = vphi %v2604, %v3476
      %s2613 = sphi 1, %s3953
    $region92: #{tpu_custom_call.1} parent=1 // loop_header_branch
      %2610 = sbr.rel (%p2608) target = $region96
    $region93: #{tpu_custom_call.1} parent=1 // loop_body
      %v2614 = vstv %s2613
      %vm2615 = vcmp.eq.s32.totalorder %v2602, %v2614
      %v2616 = vsel %vm2615, 1, 0
      %v2617 = vcvt.s32.f32 %v2616
      %v2618 = vpack.c.bf16 %v2617, %v2617
      %v2619 = vld [vmem:[#allocation7] sm:$0xf]
      %v2620 = vld [vmem:[#allocation7 + $0x4] sm:$0xf]
      %v2621 = vld [vmem:[#allocation7 + $0x8] sm:$0xf]
      %v2622 = vld [vmem:[#allocation7 + $0xc] sm:$0xf]
      %v2623 = vld [vmem:[#allocation7 + $0x10] sm:$0xf]
      %v2624 = vld [vmem:[#allocation7 + $0x14] sm:$0xf]
      %v2625 = vld [vmem:[#allocation7 + $0x18] sm:$0xf]
      %v2626 = vld [vmem:[#allocation7 + $0x1c] sm:$0xf]
      %v2627 = vld [vmem:[#allocation7 + $0x20] sm:$0xf]
      %v2628 = vld [vmem:[#allocation7 + $0x24] sm:$0xf]
      %v2629 = vld [vmem:[#allocation7 + $0x28] sm:$0xf]
      %v2630 = vld [vmem:[#allocation7 + $0x2c] sm:$0xf]
      %v2631 = vld [vmem:[#allocation7 + $0x30] sm:$0xf]
      %v2632 = vld [vmem:[#allocation7 + $0x34] sm:$0xf]
      %v2633 = vld [vmem:[#allocation7 + $0x38] sm:$0xf]
      %v2634 = vld [vmem:[#allocation7 + $0x3c] sm:$0xf]
      %v2651 = vunpack.c.l.b16 %v2619
      %v2652 = vunpack.c.l.b16 %v2620
      %v2653 = vunpack.c.l.b16 %v2621
      %v2654 = vunpack.c.l.b16 %v2622
      %v2655 = vunpack.c.l.b16 %v2623
      %v2656 = vunpack.c.l.b16 %v2624
      %v2657 = vunpack.c.l.b16 %v2625
      %v2658 = vunpack.c.l.b16 %v2626
      %v2659 = vunpack.c.l.b16 %v2627
      %v2660 = vunpack.c.l.b16 %v2628
      %v2661 = vunpack.c.l.b16 %v2629
      %v2662 = vunpack.c.l.b16 %v2630
      %v2663 = vunpack.c.l.b16 %v2631
      %v2664 = vunpack.c.l.b16 %v2632
      %v2665 = vunpack.c.l.b16 %v2633
      %v2666 = vunpack.c.l.b16 %v2634
      %v2667 = vpack.c.b16 %v2652, %v2651
      %v2668 = vpack.c.b16 %v2654, %v2653
      %v2669 = vpack.c.b16 %v2656, %v2655
      %v2670 = vpack.c.b16 %v2658, %v2657
      %v2671 = vpack.c.b16 %v2660, %v2659
      %v2672 = vpack.c.b16 %v2662, %v2661
      %v2673 = vpack.c.b16 %v2664, %v2663
      %v2674 = vpack.c.b16 %v2666, %v2665
      %2683 = vmatprep.subr.bf16.mxu0 0
      %2684 = vmatpush1.bf16.msra.mxu0 %v2667
      %2685 = vmatprep.subr.bf16.mxu0 0
      %2686 = vmatpush1.bf16.msra.mxu0 %v2668
      %2687 = vmatprep.subr.bf16.mxu0 0
      %2688 = vmatpush1.bf16.msra.mxu0 %v2669
      %2689 = vmatprep.subr.bf16.mxu0 0
      %2690 = vmatpush1.bf16.msra.mxu0 %v2670
      %2691 = vmatprep.subr.bf16.mxu0 0
      %2692 = vmatpush1.bf16.msra.mxu0 %v2671
      %2693 = vmatprep.subr.bf16.mxu0 0
      %2694 = vmatpush1.bf16.msra.mxu0 %v2672
      %2695 = vmatprep.subr.bf16.mxu0 0
      %2696 = vmatpush1.bf16.msra.mxu0 %v2673
      %2697 = vmatprep.subr.bf16.mxu0 0
      %2698 = vmatpush1.bf16.msra.mxu0 %v2674
      %2699 = vmatprep.subr.bf16.mxu0 0
      %2700 = vmatpush1.bf16.msra.mxu0 0
      %2701 = vmatprep.subr.bf16.mxu0 0
      %2702 = vmatpush1.bf16.msra.mxu0 0
      %2703 = vmatprep.subr.bf16.mxu0 0
      %2704 = vmatpush1.bf16.msra.mxu0 0
      %2705 = vmatprep.subr.bf16.mxu0 0
      %2706 = vmatpush1.bf16.msra.mxu0 0
      %2707 = vmatprep.subr.bf16.mxu0 0
      %2708 = vmatpush1.bf16.msra.mxu0 0
      %2709 = vmatprep.subr.bf16.mxu0 0
      %2710 = vmatpush1.bf16.msra.mxu0 0
      %2711 = vmatprep.subr.bf16.mxu0 0
      %2712 = vmatpush1.bf16.msra.mxu0 0
      %2713 = vmatprep.subr.bf16.mxu0 0
      %2714 = vmatpush1.bf16.msra.mxu0 0
      %2715 = vmatprep.mubr.bf16.mxu0 0
      %2716 = vmatmul.mubr.bf16.gmra.mrb[0].mxu0 %v2618
      %v2717 = vpop.f32.mrb[0].mxu0
      %v2718 = vadd.f32 0.0, %v2717
      %v2719 = vpop.f32.mrb[0].mxu0
      %v2720 = vpop.f32.mrb[0].mxu0
      %v2721 = vpop.f32.mrb[0].mxu0
      %2722 = vdwg.mxu0
      %v2723 = vpack.c.bf16 %v2718, %v2718
      %v2724 = vpack.c.bf16 %v2612, %v2612
      %v2725 = vld [vmem:[#allocation13] sm:$0xff]
      %v2726 = vld [vmem:[#allocation13 + $0x8] sm:$0xff]
      %v2727 = vld [vmem:[#allocation13 + $0x10] sm:$0xff]
      %v2728 = vld [vmem:[#allocation13 + $0x18] sm:$0xff]
      %v2729 = vld [vmem:[#allocation13 + $0x20] sm:$0xff]
      %v2730 = vld [vmem:[#allocation13 + $0x28] sm:$0xff]
      %v2731 = vld [vmem:[#allocation13 + $0x30] sm:$0xff]
      %v2732 = vld [vmem:[#allocation13 + $0x38] sm:$0xff]
      %v2733 = vld [vmem:[#allocation13 + $0x40] sm:$0xff]
      %v2734 = vld [vmem:[#allocation13 + $0x48] sm:$0xff]
      %v2735 = vld [vmem:[#allocation13 + $0x50] sm:$0xff]
      %v2736 = vld [vmem:[#allocation13 + $0x58] sm:$0xff]
      %v2737 = vld [vmem:[#allocation13 + $0x60] sm:$0xff]
      %v2738 = vld [vmem:[#allocation13 + $0x68] sm:$0xff]
      %v2739 = vld [vmem:[#allocation13 + $0x70] sm:$0xff]
      %v2740 = vld [vmem:[#allocation13 + $0x78] sm:$0xff]
      %v2741 = vld [vmem:[#allocation13 + $0x80] sm:$0xff]
      %v2742 = vld [vmem:[#allocation13 + $0x88] sm:$0xff]
      %v2743 = vld [vmem:[#allocation13 + $0x90] sm:$0xff]
      %v2744 = vld [vmem:[#allocation13 + $0x98] sm:$0xff]
      %v2745 = vld [vmem:[#allocation13 + $0xa0] sm:$0xff]
      %v2746 = vld [vmem:[#allocation13 + $0xa8] sm:$0xff]
      %v2747 = vld [vmem:[#allocation13 + $0xb0] sm:$0xff]
      %v2748 = vld [vmem:[#allocation13 + $0xb8] sm:$0xff]
      %v2749 = vld [vmem:[#allocation13 + $0xc0] sm:$0xff]
      %v2750 = vld [vmem:[#allocation13 + $0xc8] sm:$0xff]
      %v2751 = vld [vmem:[#allocation13 + $0xd0] sm:$0xff]
      %v2752 = vld [vmem:[#allocation13 + $0xd8] sm:$0xff]
      %v2753 = vld [vmem:[#allocation13 + $0xe0] sm:$0xff]
      %v2754 = vld [vmem:[#allocation13 + $0xe8] sm:$0xff]
      %v2755 = vld [vmem:[#allocation13 + $0xf0] sm:$0xff]
      %v2756 = vld [vmem:[#allocation13 + $0xf8] sm:$0xff]
      %v2757 = vld [vmem:[#allocation13 + $0x100] sm:$0xff]
      %v2758 = vld [vmem:[#allocation13 + $0x108] sm:$0xff]
      %v2759 = vld [vmem:[#allocation13 + $0x110] sm:$0xff]
      %v2760 = vld [vmem:[#allocation13 + $0x118] sm:$0xff]
      %v2761 = vld [vmem:[#allocation13 + $0x120] sm:$0xff]
      %v2762 = vld [vmem:[#allocation13 + $0x128] sm:$0xff]
      %v2763 = vld [vmem:[#allocation13 + $0x130] sm:$0xff]
      %v2764 = vld [vmem:[#allocation13 + $0x138] sm:$0xff]
      %v2765 = vld [vmem:[#allocation13 + $0x140] sm:$0xff]
      %v2766 = vld [vmem:[#allocation13 + $0x148] sm:$0xff]
      %v2767 = vld [vmem:[#allocation13 + $0x150] sm:$0xff]
      %v2768 = vld [vmem:[#allocation13 + $0x158] sm:$0xff]
      %v2769 = vld [vmem:[#allocation13 + $0x160] sm:$0xff]
      %v2770 = vld [vmem:[#allocation13 + $0x168] sm:$0xff]
      %v2771 = vld [vmem:[#allocation13 + $0x170] sm:$0xff]
      %v2772 = vld [vmem:[#allocation13 + $0x178] sm:$0xff]
      %v2773 = vld [vmem:[#allocation13 + $0x180] sm:$0xff]
      %v2774 = vld [vmem:[#allocation13 + $0x188] sm:$0xff]
      %v2775 = vld [vmem:[#allocation13 + $0x190] sm:$0xff]
      %v2776 = vld [vmem:[#allocation13 + $0x198] sm:$0xff]
      %v2777 = vld [vmem:[#allocation13 + $0x1a0] sm:$0xff]
      %v2778 = vld [vmem:[#allocation13 + $0x1a8] sm:$0xff]
      %v2779 = vld [vmem:[#allocation13 + $0x1b0] sm:$0xff]
      %v2780 = vld [vmem:[#allocation13 + $0x1b8] sm:$0xff]
      %v2781 = vld [vmem:[#allocation13 + $0x1c0] sm:$0xff]
      %v2782 = vld [vmem:[#allocation13 + $0x1c8] sm:$0xff]
      %v2783 = vld [vmem:[#allocation13 + $0x1d0] sm:$0xff]
      %v2784 = vld [vmem:[#allocation13 + $0x1d8] sm:$0xff]
      %v2785 = vld [vmem:[#allocation13 + $0x1e0] sm:$0xff]
      %v2786 = vld [vmem:[#allocation13 + $0x1e8] sm:$0xff]
      %v2787 = vld [vmem:[#allocation13 + $0x1f0] sm:$0xff]
      %v2788 = vld [vmem:[#allocation13 + $0x1f8] sm:$0xff]
      %v2789 = vld [vmem:[#allocation13 + $0x200] sm:$0xff]
      %v2790 = vld [vmem:[#allocation13 + $0x208] sm:$0xff]
      %v2791 = vld [vmem:[#allocation13 + $0x210] sm:$0xff]
      %v2792 = vld [vmem:[#allocation13 + $0x218] sm:$0xff]
      %v2793 = vld [vmem:[#allocation13 + $0x220] sm:$0xff]
      %v2794 = vld [vmem:[#allocation13 + $0x228] sm:$0xff]
      %v2795 = vld [vmem:[#allocation13 + $0x230] sm:$0xff]
      %v2796 = vld [vmem:[#allocation13 + $0x238] sm:$0xff]
      %v2797 = vld [vmem:[#allocation13 + $0x240] sm:$0xff]
      %v2798 = vld [vmem:[#allocation13 + $0x248] sm:$0xff]
      %v2799 = vld [vmem:[#allocation13 + $0x250] sm:$0xff]
      %v2800 = vld [vmem:[#allocation13 + $0x258] sm:$0xff]
      %v2801 = vld [vmem:[#allocation13 + $0x260] sm:$0xff]
      %v2802 = vld [vmem:[#allocation13 + $0x268] sm:$0xff]
      %v2803 = vld [vmem:[#allocation13 + $0x270] sm:$0xff]
      %v2804 = vld [vmem:[#allocation13 + $0x278] sm:$0xff]
      %v2805 = vld [vmem:[#allocation13 + $0x280] sm:$0xff]
      %v2806 = vld [vmem:[#allocation13 + $0x288] sm:$0xff]
      %v2807 = vld [vmem:[#allocation13 + $0x290] sm:$0xff]
      %v2808 = vld [vmem:[#allocation13 + $0x298] sm:$0xff]
      %v2809 = vld [vmem:[#allocation13 + $0x2a0] sm:$0xff]
      %v2810 = vld [vmem:[#allocation13 + $0x2a8] sm:$0xff]
      %v2811 = vld [vmem:[#allocation13 + $0x2b0] sm:$0xff]
      %v2812 = vld [vmem:[#allocation13 + $0x2b8] sm:$0xff]
      %v2813 = vld [vmem:[#allocation13 + $0x2c0] sm:$0xff]
      %v2814 = vld [vmem:[#allocation13 + $0x2c8] sm:$0xff]
      %v2815 = vld [vmem:[#allocation13 + $0x2d0] sm:$0xff]
      %v2816 = vld [vmem:[#allocation13 + $0x2d8] sm:$0xff]
      %v2817 = vld [vmem:[#allocation13 + $0x2e0] sm:$0xff]
      %v2818 = vld [vmem:[#allocation13 + $0x2e8] sm:$0xff]
      %v2819 = vld [vmem:[#allocation13 + $0x2f0] sm:$0xff]
      %v2820 = vld [vmem:[#allocation13 + $0x2f8] sm:$0xff]
      %v2821 = vld [vmem:[%s9] sm:$0x3f]
      %v2918 = vunpack.c.l.b16 %v2725
      %v2919 = vunpack.c.h.b16 %v2725
      %v2920 = vunpack.c.l.b16 %v2726
      %v2921 = vunpack.c.h.b16 %v2726
      %v2922 = vunpack.c.l.b16 %v2727
      %v2923 = vunpack.c.h.b16 %v2727
      %v2924 = vunpack.c.l.b16 %v2728
      %v2925 = vunpack.c.h.b16 %v2728
      %v2926 = vunpack.c.l.b16 %v2729
      %v2927 = vunpack.c.h.b16 %v2729
      %v2928 = vunpack.c.l.b16 %v2730
      %v2929 = vunpack.c.h.b16 %v2730
      %v2930 = vunpack.c.l.b16 %v2731
      %v2931 = vunpack.c.h.b16 %v2731
      %v2932 = vunpack.c.l.b16 %v2732
      %v2933 = vunpack.c.h.b16 %v2732
      %v2934 = vunpack.c.l.b16 %v2733
      %v2935 = vunpack.c.h.b16 %v2733
      %v2936 = vunpack.c.l.b16 %v2734
      %v2937 = vunpack.c.h.b16 %v2734
      %v2938 = vunpack.c.l.b16 %v2735
      %v2939 = vunpack.c.h.b16 %v2735
      %v2940 = vunpack.c.l.b16 %v2736
      %v2941 = vunpack.c.h.b16 %v2736
      %v2942 = vunpack.c.l.b16 %v2737
      %v2943 = vunpack.c.h.b16 %v2737
      %v2944 = vunpack.c.l.b16 %v2738
      %v2945 = vunpack.c.h.b16 %v2738
      %v2946 = vunpack.c.l.b16 %v2739
      %v2947 = vunpack.c.h.b16 %v2739
      %v2948 = vunpack.c.l.b16 %v2740
      %v2949 = vunpack.c.h.b16 %v2740
      %v2950 = vunpack.c.l.b16 %v2741
      %v2951 = vunpack.c.h.b16 %v2741
      %v2952 = vunpack.c.l.b16 %v2742
      %v2953 = vunpack.c.h.b16 %v2742
      %v2954 = vunpack.c.l.b16 %v2743
      %v2955 = vunpack.c.h.b16 %v2743
      %v2956 = vunpack.c.l.b16 %v2744
      %v2957 = vunpack.c.h.b16 %v2744
      %v2958 = vunpack.c.l.b16 %v2745
      %v2959 = vunpack.c.h.b16 %v2745
      %v2960 = vunpack.c.l.b16 %v2746
      %v2961 = vunpack.c.h.b16 %v2746
      %v2962 = vunpack.c.l.b16 %v2747
      %v2963 = vunpack.c.h.b16 %v2747
      %v2964 = vunpack.c.l.b16 %v2748
      %v2965 = vunpack.c.h.b16 %v2748
      %v2966 = vunpack.c.l.b16 %v2749
      %v2967 = vunpack.c.h.b16 %v2749
      %v2968 = vunpack.c.l.b16 %v2750
      %v2969 = vunpack.c.h.b16 %v2750
      %v2970 = vunpack.c.l.b16 %v2751
      %v2971 = vunpack.c.h.b16 %v2751
      %v2972 = vunpack.c.l.b16 %v2752
      %v2973 = vunpack.c.h.b16 %v2752
      %v2974 = vunpack.c.l.b16 %v2753
      %v2975 = vunpack.c.h.b16 %v2753
      %v2976 = vunpack.c.l.b16 %v2754
      %v2977 = vunpack.c.h.b16 %v2754
      %v2978 = vunpack.c.l.b16 %v2755
      %v2979 = vunpack.c.h.b16 %v2755
      %v2980 = vunpack.c.l.b16 %v2756
      %v2981 = vunpack.c.h.b16 %v2756
      %v2982 = vunpack.c.l.b16 %v2757
      %v2983 = vunpack.c.h.b16 %v2757
      %v2984 = vunpack.c.l.b16 %v2758
      %v2985 = vunpack.c.h.b16 %v2758
      %v2986 = vunpack.c.l.b16 %v2759
      %v2987 = vunpack.c.h.b16 %v2759
      %v2988 = vunpack.c.l.b16 %v2760
      %v2989 = vunpack.c.h.b16 %v2760
      %v2990 = vunpack.c.l.b16 %v2761
      %v2991 = vunpack.c.h.b16 %v2761
      %v2992 = vunpack.c.l.b16 %v2762
      %v2993 = vunpack.c.h.b16 %v2762
      %v2994 = vunpack.c.l.b16 %v2763
      %v2995 = vunpack.c.h.b16 %v2763
      %v2996 = vunpack.c.l.b16 %v2764
      %v2997 = vunpack.c.h.b16 %v2764
      %v2998 = vunpack.c.l.b16 %v2765
      %v2999 = vunpack.c.h.b16 %v2765
      %v3000 = vunpack.c.l.b16 %v2766
      %v3001 = vunpack.c.h.b16 %v2766
      %v3002 = vunpack.c.l.b16 %v2767
      %v3003 = vunpack.c.h.b16 %v2767
      %v3004 = vunpack.c.l.b16 %v2768
      %v3005 = vunpack.c.h.b16 %v2768
      %v3006 = vunpack.c.l.b16 %v2769
      %v3007 = vunpack.c.h.b16 %v2769
      %v3008 = vunpack.c.l.b16 %v2770
      %v3009 = vunpack.c.h.b16 %v2770
      %v3010 = vunpack.c.l.b16 %v2771
      %v3011 = vunpack.c.h.b16 %v2771
      %v3012 = vunpack.c.l.b16 %v2772
      %v3013 = vunpack.c.h.b16 %v2772
      %v3014 = vunpack.c.l.b16 %v2773
      %v3015 = vunpack.c.h.b16 %v2773
      %v3016 = vunpack.c.l.b16 %v2774
      %v3017 = vunpack.c.h.b16 %v2774
      %v3018 = vunpack.c.l.b16 %v2775
      %v3019 = vunpack.c.h.b16 %v2775
      %v3020 = vunpack.c.l.b16 %v2776
      %v3021 = vunpack.c.h.b16 %v2776
      %v3022 = vunpack.c.l.b16 %v2777
      %v3023 = vunpack.c.h.b16 %v2777
      %v3024 = vunpack.c.l.b16 %v2778
      %v3025 = vunpack.c.h.b16 %v2778
      %v3026 = vunpack.c.l.b16 %v2779
      %v3027 = vunpack.c.h.b16 %v2779
      %v3028 = vunpack.c.l.b16 %v2780
      %v3029 = vunpack.c.h.b16 %v2780
      %v3030 = vunpack.c.l.b16 %v2781
      %v3031 = vunpack.c.h.b16 %v2781
      %v3032 = vunpack.c.l.b16 %v2782
      %v3033 = vunpack.c.h.b16 %v2782
      %v3034 = vunpack.c.l.b16 %v2783
      %v3035 = vunpack.c.h.b16 %v2783
      %v3036 = vunpack.c.l.b16 %v2784
      %v3037 = vunpack.c.h.b16 %v2784
      %v3038 = vunpack.c.l.b16 %v2785
      %v3039 = vunpack.c.h.b16 %v2785
      %v3040 = vunpack.c.l.b16 %v2786
      %v3041 = vunpack.c.h.b16 %v2786
      %v3042 = vunpack.c.l.b16 %v2787
      %v3043 = vunpack.c.h.b16 %v2787
      %v3044 = vunpack.c.l.b16 %v2788
      %v3045 = vunpack.c.h.b16 %v2788
      %v3046 = vunpack.c.l.b16 %v2789
      %v3047 = vunpack.c.h.b16 %v2789
      %v3048 = vunpack.c.l.b16 %v2790
      %v3049 = vunpack.c.h.b16 %v2790
      %v3050 = vunpack.c.l.b16 %v2791
      %v3051 = vunpack.c.h.b16 %v2791
      %v3052 = vunpack.c.l.b16 %v2792
      %v3053 = vunpack.c.h.b16 %v2792
      %v3054 = vunpack.c.l.b16 %v2793
      %v3055 = vunpack.c.h.b16 %v2793
      %v3056 = vunpack.c.l.b16 %v2794
      %v3057 = vunpack.c.h.b16 %v2794
      %v3058 = vunpack.c.l.b16 %v2795
      %v3059 = vunpack.c.h.b16 %v2795
      %v3060 = vunpack.c.l.b16 %v2796
      %v3061 = vunpack.c.h.b16 %v2796
      %v3062 = vunpack.c.l.b16 %v2797
      %v3063 = vunpack.c.h.b16 %v2797
      %v3064 = vunpack.c.l.b16 %v2798
      %v3065 = vunpack.c.h.b16 %v2798
      %v3066 = vunpack.c.l.b16 %v2799
      %v3067 = vunpack.c.h.b16 %v2799
      %v3068 = vunpack.c.l.b16 %v2800
      %v3069 = vunpack.c.h.b16 %v2800
      %v3070 = vunpack.c.l.b16 %v2801
      %v3071 = vunpack.c.h.b16 %v2801
      %v3072 = vunpack.c.l.b16 %v2802
      %v3073 = vunpack.c.h.b16 %v2802
      %v3074 = vunpack.c.l.b16 %v2803
      %v3075 = vunpack.c.h.b16 %v2803
      %v3076 = vunpack.c.l.b16 %v2804
      %v3077 = vunpack.c.h.b16 %v2804
      %v3078 = vunpack.c.l.b16 %v2805
      %v3079 = vunpack.c.h.b16 %v2805
      %v3080 = vunpack.c.l.b16 %v2806
      %v3081 = vunpack.c.h.b16 %v2806
      %v3082 = vunpack.c.l.b16 %v2807
      %v3083 = vunpack.c.h.b16 %v2807
      %v3084 = vunpack.c.l.b16 %v2808
      %v3085 = vunpack.c.h.b16 %v2808
      %v3086 = vunpack.c.l.b16 %v2809
      %v3087 = vunpack.c.h.b16 %v2809
      %v3088 = vunpack.c.l.b16 %v2810
      %v3089 = vunpack.c.h.b16 %v2810
      %v3090 = vunpack.c.l.b16 %v2811
      %v3091 = vunpack.c.h.b16 %v2811
      %v3092 = vunpack.c.l.b16 %v2812
      %v3093 = vunpack.c.h.b16 %v2812
      %v3094 = vunpack.c.l.b16 %v2813
      %v3095 = vunpack.c.h.b16 %v2813
      %v3096 = vunpack.c.l.b16 %v2814
      %v3097 = vunpack.c.h.b16 %v2814
      %v3098 = vunpack.c.l.b16 %v2815
      %v3099 = vunpack.c.h.b16 %v2815
      %v3100 = vunpack.c.l.b16 %v2816
      %v3101 = vunpack.c.h.b16 %v2816
      %v3102 = vunpack.c.l.b16 %v2817
      %v3103 = vunpack.c.h.b16 %v2817
      %v3104 = vunpack.c.l.b16 %v2818
      %v3105 = vunpack.c.h.b16 %v2818
      %v3106 = vunpack.c.l.b16 %v2819
      %v3107 = vunpack.c.h.b16 %v2819
      %v3108 = vunpack.c.l.b16 %v2820
      %v3109 = vunpack.c.h.b16 %v2820
      %v3110 = vpack.c.b16 %v2924, %v2918
      %v3111 = vpack.c.b16 %v2925, %v2919
      %v3112 = vpack.c.b16 %v2926, %v2920
      %v3113 = vpack.c.b16 %v2927, %v2921
      %v3114 = vpack.c.b16 %v2928, %v2922
      %v3115 = vpack.c.b16 %v2929, %v2923
      %v3116 = vpack.c.b16 %v2936, %v2930
      %v3117 = vpack.c.b16 %v2937, %v2931
      %v3118 = vpack.c.b16 %v2938, %v2932
      %v3119 = vpack.c.b16 %v2939, %v2933
      %v3120 = vpack.c.b16 %v2940, %v2934
      %v3121 = vpack.c.b16 %v2941, %v2935
      %v3122 = vpack.c.b16 %v2948, %v2942
      %v3123 = vpack.c.b16 %v2949, %v2943
      %v3124 = vpack.c.b16 %v2950, %v2944
      %v3125 = vpack.c.b16 %v2951, %v2945
      %v3126 = vpack.c.b16 %v2952, %v2946
      %v3127 = vpack.c.b16 %v2953, %v2947
      %v3128 = vpack.c.b16 %v2960, %v2954
      %v3129 = vpack.c.b16 %v2961, %v2955
      %v3130 = vpack.c.b16 %v2962, %v2956
      %v3131 = vpack.c.b16 %v2963, %v2957
      %v3132 = vpack.c.b16 %v2964, %v2958
      %v3133 = vpack.c.b16 %v2965, %v2959
      %v3134 = vpack.c.b16 %v2972, %v2966
      %v3135 = vpack.c.b16 %v2973, %v2967
      %v3136 = vpack.c.b16 %v2974, %v2968
      %v3137 = vpack.c.b16 %v2975, %v2969
      %v3138 = vpack.c.b16 %v2976, %v2970
      %v3139 = vpack.c.b16 %v2977, %v2971
      %v3140 = vpack.c.b16 %v2984, %v2978
      %v3141 = vpack.c.b16 %v2985, %v2979
      %v3142 = vpack.c.b16 %v2986, %v2980
      %v3143 = vpack.c.b16 %v2987, %v2981
      %v3144 = vpack.c.b16 %v2988, %v2982
      %v3145 = vpack.c.b16 %v2989, %v2983
      %v3146 = vpack.c.b16 %v2996, %v2990
      %v3147 = vpack.c.b16 %v2997, %v2991
      %v3148 = vpack.c.b16 %v2998, %v2992
      %v3149 = vpack.c.b16 %v2999, %v2993
      %v3150 = vpack.c.b16 %v3000, %v2994
      %v3151 = vpack.c.b16 %v3001, %v2995
      %v3152 = vpack.c.b16 %v3008, %v3002
      %v3153 = vpack.c.b16 %v3009, %v3003
      %v3154 = vpack.c.b16 %v3010, %v3004
      %v3155 = vpack.c.b16 %v3011, %v3005
      %v3156 = vpack.c.b16 %v3012, %v3006
      %v3157 = vpack.c.b16 %v3013, %v3007
      %v3158 = vpack.c.b16 %v3020, %v3014
      %v3159 = vpack.c.b16 %v3021, %v3015
      %v3160 = vpack.c.b16 %v3022, %v3016
      %v3161 = vpack.c.b16 %v3023, %v3017
      %v3162 = vpack.c.b16 %v3024, %v3018
      %v3163 = vpack.c.b16 %v3025, %v3019
      %v3164 = vpack.c.b16 %v3032, %v3026
      %v3165 = vpack.c.b16 %v3033, %v3027
      %v3166 = vpack.c.b16 %v3034, %v3028
      %v3167 = vpack.c.b16 %v3035, %v3029
      %v3168 = vpack.c.b16 %v3036, %v3030
      %v3169 = vpack.c.b16 %v3037, %v3031
      %v3170 = vpack.c.b16 %v3044, %v3038
      %v3171 = vpack.c.b16 %v3045, %v3039
      %v3172 = vpack.c.b16 %v3046, %v3040
      %v3173 = vpack.c.b16 %v3047, %v3041
      %v3174 = vpack.c.b16 %v3048, %v3042
      %v3175 = vpack.c.b16 %v3049, %v3043
      %v3176 = vpack.c.b16 %v3056, %v3050
      %v3177 = vpack.c.b16 %v3057, %v3051
      %v3178 = vpack.c.b16 %v3058, %v3052
      %v3179 = vpack.c.b16 %v3059, %v3053
      %v3180 = vpack.c.b16 %v3060, %v3054
      %v3181 = vpack.c.b16 %v3061, %v3055
      %v3182 = vpack.c.b16 %v3068, %v3062
      %v3183 = vpack.c.b16 %v3069, %v3063
      %v3184 = vpack.c.b16 %v3070, %v3064
      %v3185 = vpack.c.b16 %v3071, %v3065
      %v3186 = vpack.c.b16 %v3072, %v3066
      %v3187 = vpack.c.b16 %v3073, %v3067
      %v3188 = vpack.c.b16 %v3080, %v3074
      %v3189 = vpack.c.b16 %v3081, %v3075
      %v3190 = vpack.c.b16 %v3082, %v3076
      %v3191 = vpack.c.b16 %v3083, %v3077
      %v3192 = vpack.c.b16 %v3084, %v3078
      %v3193 = vpack.c.b16 %v3085, %v3079
      %v3194 = vpack.c.b16 %v3092, %v3086
      %v3195 = vpack.c.b16 %v3093, %v3087
      %v3196 = vpack.c.b16 %v3094, %v3088
      %v3197 = vpack.c.b16 %v3095, %v3089
      %v3198 = vpack.c.b16 %v3096, %v3090
      %v3199 = vpack.c.b16 %v3097, %v3091
      %v3200 = vpack.c.b16 %v3104, %v3098
      %v3201 = vpack.c.b16 %v3105, %v3099
      %v3202 = vpack.c.b16 %v3106, %v3100
      %v3203 = vpack.c.b16 %v3107, %v3101
      %v3204 = vpack.c.b16 %v3108, %v3102
      %v3205 = vpack.c.b16 %v3109, %v3103
      %v3303 = vlaneseq
      %v3304 = vshrl.u32 %v3303, 7
      %v3305 = vsub.s32 0, %v3304
      %v3306 = vrot.slane %v2821, %v3305
      %v3307 = vlaneseq
      %v3308 = vshrl.u32 %v3307, 7
      %v3309 = vsub.s32 1, %v3308
      %v3310 = vrot.slane %v2821, %v3309
      %v3311 = vlaneseq
      %v3312 = vshrl.u32 %v3311, 7
      %v3313 = vsub.s32 2, %v3312
      %v3314 = vrot.slane %v2821, %v3313
      %v3315 = vlaneseq
      %v3316 = vshrl.u32 %v3315, 7
      %v3317 = vsub.s32 3, %v3316
      %v3318 = vrot.slane %v2821, %v3317
      %v3319 = vlaneseq
      %v3320 = vshrl.u32 %v3319, 7
      %v3321 = vsub.s32 4, %v3320
      %v3322 = vrot.slane %v2821, %v3321
      %v3323 = vlaneseq
      %v3324 = vshrl.u32 %v3323, 7
      %v3325 = vsub.s32 5, %v3324
      %v3326 = vrot.slane %v2821, %v3325
      %3333 = vmatprep.subr.bf16.mxu0 %v3111
      %3334 = vmatpush1.bf16.msra.mxu0 %v3110
      %3335 = vmatprep.subr.bf16.mxu0 %v3117
      %3336 = vmatpush1.bf16.msra.mxu0 %v3116
      %3337 = vmatprep.subr.bf16.mxu0 %v3123
      %3338 = vmatpush1.bf16.msra.mxu0 %v3122
      %3339 = vmatprep.subr.bf16.mxu0 %v3129
      %3340 = vmatpush1.bf16.msra.mxu0 %v3128
      %3341 = vmatprep.subr.bf16.mxu0 %v3135
      %3342 = vmatpush1.bf16.msra.mxu0 %v3134
      %3343 = vmatprep.subr.bf16.mxu0 %v3141
      %3344 = vmatpush1.bf16.msra.mxu0 %v3140
      %3345 = vmatprep.subr.bf16.mxu0 %v3147
      %3346 = vmatpush1.bf16.msra.mxu0 %v3146
      %3347 = vmatprep.subr.bf16.mxu0 %v3153
      %3348 = vmatpush1.bf16.msra.mxu0 %v3152
      %3349 = vmatprep.subr.bf16.mxu0 %v3159
      %3350 = vmatpush1.bf16.msra.mxu0 %v3158
      %3351 = vmatprep.subr.bf16.mxu0 %v3165
      %3352 = vmatpush1.bf16.msra.mxu0 %v3164
      %3353 = vmatprep.subr.bf16.mxu0 %v3171
      %3354 = vmatpush1.bf16.msra.mxu0 %v3170
      %3355 = vmatprep.subr.bf16.mxu0 %v3177
      %3356 = vmatpush1.bf16.msra.mxu0 %v3176
      %3357 = vmatprep.subr.bf16.mxu0 %v3183
      %3358 = vmatpush1.bf16.msra.mxu0 %v3182
      %3359 = vmatprep.subr.bf16.mxu0 %v3189
      %3360 = vmatpush1.bf16.msra.mxu0 %v3188
      %3361 = vmatprep.subr.bf16.mxu0 %v3195
      %3362 = vmatpush1.bf16.msra.mxu0 %v3194
      %3363 = vmatprep.subr.bf16.mxu0 %v3201
      %3364 = vmatpush1.bf16.msra.mxu0 %v3200
      %3365 = vmatprep.mubr.bf16.mxu0 %v2724
      %3366 = vmatmul.mubr.bf16.gmra.mrb[0].mxu0 %v2723
      %v3367 = vpop.f32.mrb[0].mxu0
      %v3368 = vadd.f32 %v3306, %v3367
      %v3369 = vpop.f32.mrb[0].mxu0
      %v3370 = vadd.f32 %v3310, %v3369
      %v3371 = vpop.f32.mrb[0].mxu0
      %v3372 = vpop.f32.mrb[0].mxu0
      %3373 = vdwg.mxu0
      %3374 = vmatprep.subr.bf16.mxu0 %v3113
      %3375 = vmatpush1.bf16.msra.mxu0 %v3112
      %3376 = vmatprep.subr.bf16.mxu0 %v3119
      %3377 = vmatpush1.bf16.msra.mxu0 %v3118
      %3378 = vmatprep.subr.bf16.mxu0 %v3125
      %3379 = vmatpush1.bf16.msra.mxu0 %v3124
      %3380 = vmatprep.subr.bf16.mxu0 %v3131
      %3381 = vmatpush1.bf16.msra.mxu0 %v3130
      %3382 = vmatprep.subr.bf16.mxu0 %v3137
      %3383 = vmatpush1.bf16.msra.mxu0 %v3136
      %3384 = vmatprep.subr.bf16.mxu0 %v3143
      %3385 = vmatpush1.bf16.msra.mxu0 %v3142
      %3386 = vmatprep.subr.bf16.mxu0 %v3149
      %3387 = vmatpush1.bf16.msra.mxu0 %v3148
      %3388 = vmatprep.subr.bf16.mxu0 %v3155
      %3389 = vmatpush1.bf16.msra.mxu0 %v3154
      %3390 = vmatprep.subr.bf16.mxu0 %v3161
      %3391 = vmatpush1.bf16.msra.mxu0 %v3160
      %3392 = vmatprep.subr.bf16.mxu0 %v3167
      %3393 = vmatpush1.bf16.msra.mxu0 %v3166
      %3394 = vmatprep.subr.bf16.mxu0 %v3173
      %3395 = vmatpush1.bf16.msra.mxu0 %v3172
      %3396 = vmatprep.subr.bf16.mxu0 %v3179
      %3397 = vmatpush1.bf16.msra.mxu0 %v3178
      %3398 = vmatprep.subr.bf16.mxu0 %v3185
      %3399 = vmatpush1.bf16.msra.mxu0 %v3184
      %3400 = vmatprep.subr.bf16.mxu0 %v3191
      %3401 = vmatpush1.bf16.msra.mxu0 %v3190
      %3402 = vmatprep.subr.bf16.mxu0 %v3197
      %3403 = vmatpush1.bf16.msra.mxu0 %v3196
      %3404 = vmatprep.subr.bf16.mxu0 %v3203
      %3405 = vmatpush1.bf16.msra.mxu0 %v3202
      %3406 = vmatprep.mubr.bf16.mxu0 %v2724
      %3407 = vmatmul.mubr.bf16.gmra.mrb[0].mxu0 %v2723
      %v3408 = vpop.f32.mrb[0].mxu0
      %v3409 = vadd.f32 %v3314, %v3408
      %v3410 = vpop.f32.mrb[0].mxu0
      %v3411 = vadd.f32 %v3318, %v3410
      %v3412 = vpop.f32.mrb[0].mxu0
      %v3413 = vpop.f32.mrb[0].mxu0
      %3414 = vdwg.mxu0
      %3415 = vmatprep.subr.bf16.mxu0 %v3115
      %3416 = vmatpush1.bf16.msra.mxu0 %v3114
      %3417 = vmatprep.subr.bf16.mxu0 %v3121
      %3418 = vmatpush1.bf16.msra.mxu0 %v3120
      %3419 = vmatprep.subr.bf16.mxu0 %v3127
      %3420 = vmatpush1.bf16.msra.mxu0 %v3126
      %3421 = vmatprep.subr.bf16.mxu0 %v3133
      %3422 = vmatpush1.bf16.msra.mxu0 %v3132
      %3423 = vmatprep.subr.bf16.mxu0 %v3139
      %3424 = vmatpush1.bf16.msra.mxu0 %v3138
      %3425 = vmatprep.subr.bf16.mxu0 %v3145
      %3426 = vmatpush1.bf16.msra.mxu0 %v3144
      %3427 = vmatprep.subr.bf16.mxu0 %v3151
      %3428 = vmatpush1.bf16.msra.mxu0 %v3150
      %3429 = vmatprep.subr.bf16.mxu0 %v3157
      %3430 = vmatpush1.bf16.msra.mxu0 %v3156
      %3431 = vmatprep.subr.bf16.mxu0 %v3163
      %3432 = vmatpush1.bf16.msra.mxu0 %v3162
      %3433 = vmatprep.subr.bf16.mxu0 %v3169
      %3434 = vmatpush1.bf16.msra.mxu0 %v3168
      %3435 = vmatprep.subr.bf16.mxu0 %v3175
      %3436 = vmatpush1.bf16.msra.mxu0 %v3174
      %3437 = vmatprep.subr.bf16.mxu0 %v3181
      %3438 = vmatpush1.bf16.msra.mxu0 %v3180
      %3439 = vmatprep.subr.bf16.mxu0 %v3187
      %3440 = vmatpush1.bf16.msra.mxu0 %v3186
      %3441 = vmatprep.subr.bf16.mxu0 %v3193
      %3442 = vmatpush1.bf16.msra.mxu0 %v3192
      %3443 = vmatprep.subr.bf16.mxu0 %v3199
      %3444 = vmatpush1.bf16.msra.mxu0 %v3198
      %3445 = vmatprep.subr.bf16.mxu0 %v3205
      %3446 = vmatpush1.bf16.msra.mxu0 %v3204
      %3447 = vmatprep.mubr.bf16.mxu0 %v2724
      %3448 = vmatmul.mubr.bf16.gmra.mrb[0].mxu0 %v2723
      %v3449 = vpop.f32.mrb[0].mxu0
      %v3450 = vadd.f32 %v3322, %v3449
      %v3451 = vpop.f32.mrb[0].mxu0
      %v3452 = vadd.f32 %v3326, %v3451
      %v3453 = vpop.f32.mrb[0].mxu0
      %v3454 = vpop.f32.mrb[0].mxu0
      %3455 = vdwg.mxu0
      %v3456 = vadd.f32 %v3368, %v3411
      %v3457 = vxor.u32 %v3456, 2147483648
      %v3458 = vmul.f32 %v3457, 1.442695
      %v3459 = vpow.pop %v3458
      %v3460 = vadd.f32 %v3459, 1.0
      %v3461 = vrcp.pop %v3460
      %v3462 = vmul.f32 1.0, %v3461
      %v3463 = vadd.f32 %v3370, %v3450
      %v3464 = vxor.u32 %v3463, 2147483648
      %v3465 = vmul.f32 %v3464, 1.442695
      %v3466 = vpow.pop %v3465
      %v3467 = vadd.f32 %v3466, 1.0
      %v3468 = vrcp.pop %v3467
      %v3469 = vmul.f32 1.0, %v3468
      %v3470 = vmul.f32 %v3462, %v3452
      %v3471 = vadd.f32 %v3409, %v3470
      %v3472 = vtanh.pop %v3471
      %v3473 = vsub.f32 1.0, %v3469
      %v3474 = vmul.f32 %v3473, %v3472
      %v3475 = vmul.f32 %v3469, %v2612
      %v3476 = vadd.f32 %v3474, %v3475
      %3477 = vmatprep.subr.mxu0 0.0
      %3478 = vmatpush1.xpose.msra.mxu0 %v2600
      %3479 = vmatprep.subr.mxu0 0.0
      %3480 = vmatpush1.xpose.msra.mxu0 0.0
      %3481 = vmatprep.subr.mxu0 0.0
      %3482 = vmatpush1.xpose.msra.mxu0 0.0
      %3483 = vmatprep.subr.mxu0 0.0
      %3484 = vmatpush1.xpose.msra.mxu0 0.0
      %3485 = vmatprep.subr.mxu0 0.0
      %3486 = vmatpush1.xpose.msra.mxu0 0.0
      %3487 = vmatprep.subr.mxu0 0.0
      %3488 = vmatpush1.xpose.msra.mxu0 0.0
      %3489 = vmatprep.subr.mxu0 0.0
      %3490 = vmatpush1.xpose.msra.mxu0 0.0
      %3491 = vmatprep.subr.mxu0 0.0
      %3492 = vmatpush1.xpose.msra.mxu0 0.0
      %3493 = vmatprep.subr.mxu0 0.0
      %3494 = vmatpush1.xpose.msra.mxu0 0.0
      %3495 = vmatprep.subr.mxu0 0.0
      %3496 = vmatpush1.xpose.msra.mxu0 0.0
      %3497 = vmatprep.subr.mxu0 0.0
      %3498 = vmatpush1.xpose.msra.mxu0 0.0
      %3499 = vmatprep.subr.mxu0 0.0
      %3500 = vmatpush1.xpose.msra.mxu0 0.0
      %3501 = vmatprep.subr.mxu0 0.0
      %3502 = vmatpush1.xpose.msra.mxu0 0.0
      %3503 = vmatprep.subr.mxu0 0.0
      %3504 = vmatpush1.xpose.msra.mxu0 0.0
      %3505 = vmatprep.subr.mxu0 0.0
      %3506 = vmatpush1.xpose.msra.mxu0 0.0
      %3507 = vmatprep.subr.mxu0 0.0
      %3508 = vmatpush1.xpose.msra.mxu0 0.0
      %3509 = vmatprep.subr.mxu0 0.0
      %3510 = vmatpush1.xpose.msra.mxu0 0.0
      %3511 = vmatprep.subr.mxu0 0.0
      %3512 = vmatpush1.xpose.msra.mxu0 0.0
      %3513 = vmatprep.subr.mxu0 0.0
      %3514 = vmatpush1.xpose.msra.mxu0 0.0
      %3515 = vmatprep.subr.mxu0 0.0
      %3516 = vmatpush1.xpose.msra.mxu0 0.0
      %3517 = vmatprep.subr.mxu0 0.0
      %3518 = vmatpush1.xpose.msra.mxu0 0.0
      %3519 = vmatprep.subr.mxu0 0.0
      %3520 = vmatpush1.xpose.msra.mxu0 0.0
      %3521 = vmatprep.subr.mxu0 0.0
      %3522 = vmatpush1.xpose.msra.mxu0 0.0
      %3523 = vmatprep.subr.mxu0 0.0
      %3524 = vmatpush1.xpose.msra.mxu0 0.0
      %3525 = vmatprep.subr.mxu0 0.0
      %3526 = vmatpush1.xpose.msra.mxu0 0.0
      %3527 = vmatprep.subr.mxu0 0.0
      %3528 = vmatpush1.xpose.msra.mxu0 0.0
      %3529 = vmatprep.subr.mxu0 0.0
      %3530 = vmatpush1.xpose.msra.mxu0 0.0
      %3531 = vmatprep.subr.mxu0 0.0
      %3532 = vmatpush1.xpose.msra.mxu0 0.0
      %3533 = vmatprep.subr.mxu0 0.0
      %3534 = vmatpush1.xpose.msra.mxu0 0.0
      %3535 = vmatprep.subr.mxu0 0.0
      %3536 = vmatpush1.xpose.msra.mxu0 0.0
      %3537 = vmatprep.subr.mxu0 0.0
      %3538 = vmatpush1.xpose.msra.mxu0 0.0
      %3539 = vmatprep.subr.mxu0 0.0
      %3540 = vmatpush1.xpose.msra.mxu0 0.0
      %3541 = vmatprep.mubr.f32.mxu0 0.0
      %3542 = vmatmul.mubr.f32.gmra.mrb[0].mxu0 %v3476
      %v3543 = vpop.f32.mrb[0].mxu0
      %v3544 = vadd.f32 0.0, %v3543
      %v3545 = vpop.f32.mrb[0].mxu0
      %3546 = vdwg.mxu0
      %vm3547 = vcmask 49152
      %v3548 = vsel %vm3547, %v3544, -inf
      %3549 = vmax.xlane.f32.xlu0 %v3548
      %v3550 = vpop.xlane.xlu0 %3549
      %v3551 = vsub.f32 %v3544, %v3550
      %v3552 = vmul.f32 %v3551, 1.442695
      %v3553 = vpow.pop %v3552
      %v3554 = vsel %vm3547, %v3553, 0.0
      %3555 = vadd.xlane.f32.xlu0 %v3554
      %v3556 = vpop.xlane.xlu0 %3555
      %v3557 = vrcp.pop %v3556
      %v3558 = vmul.f32 %v3553, %v3557
      %vm3559 = vcmask 56320
      %v3561 = vsel %vm3559, %v3558, 0
      %vm3563 = vcmask 1046528
      %v3565 = vsel %vm3563, %v2600, 0
      %3567 = vmatprep.subr.mxu0 0.0
      %3568 = vmatpush1.msra.mxu0 %v3565
      %3569 = vmatprep.subr.mxu0 0.0
      %3570 = vmatpush1.msra.mxu0 0.0
      %3571 = vmatprep.subr.mxu0 0.0
      %3572 = vmatpush1.msra.mxu0 0.0
      %3573 = vmatprep.subr.mxu0 0.0
      %3574 = vmatpush1.msra.mxu0 0.0
      %3575 = vmatprep.subr.mxu0 0.0
      %3576 = vmatpush1.msra.mxu0 0.0
      %3577 = vmatprep.subr.mxu0 0.0
      %3578 = vmatpush1.msra.mxu0 0.0
      %3579 = vmatprep.subr.mxu0 0.0
      %3580 = vmatpush1.msra.mxu0 0.0
      %3581 = vmatprep.subr.mxu0 0.0
      %3582 = vmatpush1.msra.mxu0 0.0
      %3583 = vmatprep.subr.mxu0 0.0
      %3584 = vmatpush1.msra.mxu0 0.0
      %3585 = vmatprep.subr.mxu0 0.0
      %3586 = vmatpush1.msra.mxu0 0.0
      %3587 = vmatprep.subr.mxu0 0.0
      %3588 = vmatpush1.msra.mxu0 0.0
      %3589 = vmatprep.subr.mxu0 0.0
      %3590 = vmatpush1.msra.mxu0 0.0
      %3591 = vmatprep.subr.mxu0 0.0
      %3592 = vmatpush1.msra.mxu0 0.0
      %3593 = vmatprep.subr.mxu0 0.0
      %3594 = vmatpush1.msra.mxu0 0.0
      %3595 = vmatprep.subr.mxu0 0.0
      %3596 = vmatpush1.msra.mxu0 0.0
      %3597 = vmatprep.subr.mxu0 0.0
      %3598 = vmatpush1.msra.mxu0 0.0
      %3599 = vmatprep.subr.mxu0 0.0
      %3600 = vmatpush1.msra.mxu0 0.0
      %3601 = vmatprep.subr.mxu0 0.0
      %3602 = vmatpush1.msra.mxu0 0.0
      %3603 = vmatprep.subr.mxu0 0.0
      %3604 = vmatpush1.msra.mxu0 0.0
      %3605 = vmatprep.subr.mxu0 0.0
      %3606 = vmatpush1.msra.mxu0 0.0
      %3607 = vmatprep.subr.mxu0 0.0
      %3608 = vmatpush1.msra.mxu0 0.0
      %3609 = vmatprep.subr.mxu0 0.0
      %3610 = vmatpush1.msra.mxu0 0.0
      %3611 = vmatprep.subr.mxu0 0.0
      %3612 = vmatpush1.msra.mxu0 0.0
      %3613 = vmatprep.subr.mxu0 0.0
      %3614 = vmatpush1.msra.mxu0 0.0
      %3615 = vmatprep.subr.mxu0 0.0
      %3616 = vmatpush1.msra.mxu0 0.0
      %3617 = vmatprep.subr.mxu0 0.0
      %3618 = vmatpush1.msra.mxu0 0.0
      %3619 = vmatprep.subr.mxu0 0.0
      %3620 = vmatpush1.msra.mxu0 0.0
      %3621 = vmatprep.subr.mxu0 0.0
      %3622 = vmatpush1.msra.mxu0 0.0
      %3623 = vmatprep.subr.mxu0 0.0
      %3624 = vmatpush1.msra.mxu0 0.0
      %3625 = vmatprep.subr.mxu0 0.0
      %3626 = vmatpush1.msra.mxu0 0.0
      %3627 = vmatprep.subr.mxu0 0.0
      %3628 = vmatpush1.msra.mxu0 0.0
      %3629 = vmatprep.subr.mxu0 0.0
      %3630 = vmatpush1.msra.mxu0 0.0
      %3631 = vmatprep.mubr.f32.mxu0 0.0
      %3632 = vmatmul.mubr.f32.gmra.mrb[0].mxu0 %v3561
      %v3633 = vpop.f32.mrb[0].mxu0
      %v3634 = vadd.f32 0.0, %v3633
      %v3635 = vpop.f32.mrb[0].mxu0
      %3636 = vdwg.mxu0
      %v3637 = vpack.c.bf16 %v3476, %v3476
      %v3638 = vpack.c.bf16 %v3634, %v3634
      %v3639 = vld [vmem:[#allocation15] sm:$0xf]
      %v3640 = vld [vmem:[#allocation15 + $0x4] sm:$0xf]
      %v3641 = vld [vmem:[#allocation15 + $0x8] sm:$0xf]
      %v3642 = vld [vmem:[#allocation15 + $0xc] sm:$0xf]
      %v3643 = vld [vmem:[#allocation15 + $0x10] sm:$0xf]
      %v3644 = vld [vmem:[#allocation15 + $0x14] sm:$0xf]
      %v3645 = vld [vmem:[#allocation15 + $0x18] sm:$0xf]
      %v3646 = vld [vmem:[#allocation15 + $0x1c] sm:$0xf]
      %v3647 = vld [vmem:[#allocation15 + $0x20] sm:$0xf]
      %v3648 = vld [vmem:[#allocation15 + $0x24] sm:$0xf]
      %v3649 = vld [vmem:[#allocation15 + $0x28] sm:$0xf]
      %v3650 = vld [vmem:[#allocation15 + $0x2c] sm:$0xf]
      %v3651 = vld [vmem:[#allocation15 + $0x30] sm:$0xf]
      %v3652 = vld [vmem:[#allocation15 + $0x34] sm:$0xf]
      %v3653 = vld [vmem:[#allocation15 + $0x38] sm:$0xf]
      %v3654 = vld [vmem:[#allocation15 + $0x3c] sm:$0xf]
      %v3655 = vld [vmem:[#allocation15 + $0x40] sm:$0xf]
      %v3656 = vld [vmem:[#allocation15 + $0x44] sm:$0xf]
      %v3657 = vld [vmem:[#allocation15 + $0x48] sm:$0xf]
      %v3658 = vld [vmem:[#allocation15 + $0x4c] sm:$0xf]
      %v3659 = vld [vmem:[#allocation15 + $0x50] sm:$0xf]
      %v3660 = vld [vmem:[#allocation15 + $0x54] sm:$0xf]
      %v3661 = vld [vmem:[#allocation15 + $0x58] sm:$0xf]
      %v3662 = vld [vmem:[#allocation15 + $0x5c] sm:$0xf]
      %v3663 = vld [vmem:[#allocation15 + $0x60] sm:$0xf]
      %v3664 = vld [vmem:[#allocation15 + $0x64] sm:$0xf]
      %v3665 = vld [vmem:[#allocation15 + $0x68] sm:$0xf]
      %v3666 = vld [vmem:[#allocation15 + $0x6c] sm:$0xf]
      %v3667 = vld [vmem:[#allocation15 + $0x70] sm:$0xf]
      %v3668 = vld [vmem:[#allocation15 + $0x74] sm:$0xf]
      %v3669 = vld [vmem:[#allocation15 + $0x78] sm:$0xf]
      %v3670 = vld [vmem:[#allocation15 + $0x7c] sm:$0xf]
      %v3671 = vld [vmem:[%s11] sm:$0x1]
      %v3704 = vunpack.c.l.b16 %v3639
      %v3705 = vunpack.c.l.b16 %v3640
      %v3706 = vunpack.c.l.b16 %v3641
      %v3707 = vunpack.c.l.b16 %v3642
      %v3708 = vunpack.c.l.b16 %v3643
      %v3709 = vunpack.c.l.b16 %v3644
      %v3710 = vunpack.c.l.b16 %v3645
      %v3711 = vunpack.c.l.b16 %v3646
      %v3712 = vunpack.c.l.b16 %v3647
      %v3713 = vunpack.c.l.b16 %v3648
      %v3714 = vunpack.c.l.b16 %v3649
      %v3715 = vunpack.c.l.b16 %v3650
      %v3716 = vunpack.c.l.b16 %v3651
      %v3717 = vunpack.c.l.b16 %v3652
      %v3718 = vunpack.c.l.b16 %v3653
      %v3719 = vunpack.c.l.b16 %v3654
      %v3720 = vunpack.c.l.b16 %v3655
      %v3721 = vunpack.c.l.b16 %v3656
      %v3722 = vunpack.c.l.b16 %v3657
      %v3723 = vunpack.c.l.b16 %v3658
      %v3724 = vunpack.c.l.b16 %v3659
      %v3725 = vunpack.c.l.b16 %v3660
      %v3726 = vunpack.c.l.b16 %v3661
      %v3727 = vunpack.c.l.b16 %v3662
      %v3728 = vunpack.c.l.b16 %v3663
      %v3729 = vunpack.c.l.b16 %v3664
      %v3730 = vunpack.c.l.b16 %v3665
      %v3731 = vunpack.c.l.b16 %v3666
      %v3732 = vunpack.c.l.b16 %v3667
      %v3733 = vunpack.c.l.b16 %v3668
      %v3734 = vunpack.c.l.b16 %v3669
      %v3735 = vunpack.c.l.b16 %v3670
      %v3736 = vpack.c.b16 %v3705, %v3704
      %v3737 = vpack.c.b16 %v3707, %v3706
      %v3738 = vpack.c.b16 %v3709, %v3708
      %v3739 = vpack.c.b16 %v3711, %v3710
      %v3740 = vpack.c.b16 %v3713, %v3712
      %v3741 = vpack.c.b16 %v3715, %v3714
      %v3742 = vpack.c.b16 %v3717, %v3716
      %v3743 = vpack.c.b16 %v3719, %v3718
      %v3744 = vpack.c.b16 %v3721, %v3720
      %v3745 = vpack.c.b16 %v3723, %v3722
      %v3746 = vpack.c.b16 %v3725, %v3724
      %v3747 = vpack.c.b16 %v3727, %v3726
      %v3748 = vpack.c.b16 %v3729, %v3728
      %v3749 = vpack.c.b16 %v3731, %v3730
      %v3750 = vpack.c.b16 %v3733, %v3732
      %v3751 = vpack.c.b16 %v3735, %v3734
      %3768 = vmatprep.subr.bf16.mxu0 0
      %3769 = vmatpush1.bf16.msra.mxu0 %v3736
      %3770 = vmatprep.subr.bf16.mxu0 0
      %3771 = vmatpush1.bf16.msra.mxu0 %v3737
      %3772 = vmatprep.subr.bf16.mxu0 0
      %3773 = vmatpush1.bf16.msra.mxu0 %v3738
      %3774 = vmatprep.subr.bf16.mxu0 0
      %3775 = vmatpush1.bf16.msra.mxu0 %v3739
      %3776 = vmatprep.subr.bf16.mxu0 0
      %3777 = vmatpush1.bf16.msra.mxu0 %v3740
      %3778 = vmatprep.subr.bf16.mxu0 0
      %3779 = vmatpush1.bf16.msra.mxu0 %v3741
      %3780 = vmatprep.subr.bf16.mxu0 0
      %3781 = vmatpush1.bf16.msra.mxu0 %v3742
      %3782 = vmatprep.subr.bf16.mxu0 0
      %3783 = vmatpush1.bf16.msra.mxu0 %v3743
      %3784 = vmatprep.subr.bf16.mxu0 0
      %3785 = vmatpush1.bf16.msra.mxu0 %v3744
      %3786 = vmatprep.subr.bf16.mxu0 0
      %3787 = vmatpush1.bf16.msra.mxu0 %v3745
      %3788 = vmatprep.subr.bf16.mxu0 0
      %3789 = vmatpush1.bf16.msra.mxu0 %v3746
      %3790 = vmatprep.subr.bf16.mxu0 0
      %3791 = vmatpush1.bf16.msra.mxu0 %v3747
      %3792 = vmatprep.subr.bf16.mxu0 0
      %3793 = vmatpush1.bf16.msra.mxu0 %v3748
      %3794 = vmatprep.subr.bf16.mxu0 0
      %3795 = vmatpush1.bf16.msra.mxu0 %v3749
      %3796 = vmatprep.subr.bf16.mxu0 0
      %3797 = vmatpush1.bf16.msra.mxu0 %v3750
      %3798 = vmatprep.subr.bf16.mxu0 0
      %3799 = vmatpush1.bf16.msra.mxu0 %v3751
      %3800 = vmatprep.mubr.bf16.mxu0 %v3638
      %3801 = vmatmul.mubr.bf16.gmra.mrb[0].mxu0 %v3637
      %v3802 = vpop.f32.mrb[0].mxu0
      %v3803 = vadd.f32 %v3671, %v3802
      %v3804 = vpop.f32.mrb[0].mxu0
      %v3805 = vpop.f32.mrb[0].mxu0
      %v3806 = vpop.f32.mrb[0].mxu0
      %3807 = vdwg.mxu0
      %v3808 = vtanh.pop %v3803
      %v3809 = vpack.c.bf16 %v3808, %v3808
      %v3810 = vld [vmem:[#allocation16] sm:$0xf]
      %v3811 = vld [vmem:[#allocation16 + $0x4] sm:$0xf]
      %v3812 = vld [vmem:[#allocation16 + $0x8] sm:$0xf]
      %v3813 = vld [vmem:[#allocation16 + $0xc] sm:$0xf]
      %v3814 = vld [vmem:[#allocation16 + $0x10] sm:$0xf]
      %v3815 = vld [vmem:[#allocation16 + $0x14] sm:$0xf]
      %v3816 = vld [vmem:[#allocation16 + $0x18] sm:$0xf]
      %v3817 = vld [vmem:[#allocation16 + $0x1c] sm:$0xf]
      %v3818 = vld [vmem:[#allocation16 + $0x20] sm:$0xf]
      %v3819 = vld [vmem:[#allocation16 + $0x24] sm:$0xf]
      %v3820 = vld [vmem:[#allocation16 + $0x28] sm:$0xf]
      %v3821 = vld [vmem:[#allocation16 + $0x2c] sm:$0xf]
      %v3822 = vld [vmem:[#allocation16 + $0x30] sm:$0xf]
      %v3823 = vld [vmem:[#allocation16 + $0x34] sm:$0xf]
      %v3824 = vld [vmem:[#allocation16 + $0x38] sm:$0xf]
      %v3825 = vld [vmem:[#allocation16 + $0x3c] sm:$0xf]
      %v3826 = vld [vmem:[%s13] sm:$0x1]
      %v3843 = vunpack.c.l.b16 %v3810
      %v3844 = vunpack.c.l.b16 %v3811
      %v3845 = vunpack.c.l.b16 %v3812
      %v3846 = vunpack.c.l.b16 %v3813
      %v3847 = vunpack.c.l.b16 %v3814
      %v3848 = vunpack.c.l.b16 %v3815
      %v3849 = vunpack.c.l.b16 %v3816
      %v3850 = vunpack.c.l.b16 %v3817
      %v3851 = vunpack.c.l.b16 %v3818
      %v3852 = vunpack.c.l.b16 %v3819
      %v3853 = vunpack.c.l.b16 %v3820
      %v3854 = vunpack.c.l.b16 %v3821
      %v3855 = vunpack.c.l.b16 %v3822
      %v3856 = vunpack.c.l.b16 %v3823
      %v3857 = vunpack.c.l.b16 %v3824
      %v3858 = vunpack.c.l.b16 %v3825
      %v3859 = vpack.c.b16 %v3844, %v3843
      %v3860 = vpack.c.b16 %v3846, %v3845
      %v3861 = vpack.c.b16 %v3848, %v3847
      %v3862 = vpack.c.b16 %v3850, %v3849
      %v3863 = vpack.c.b16 %v3852, %v3851
      %v3864 = vpack.c.b16 %v3854, %v3853
      %v3865 = vpack.c.b16 %v3856, %v3855
      %v3866 = vpack.c.b16 %v3858, %v3857
      %3875 = vmatprep.subr.bf16.mxu0 0
      %3876 = vmatpush1.bf16.msra.mxu0 %v3859
      %3877 = vmatprep.subr.bf16.mxu0 0
      %3878 = vmatpush1.bf16.msra.mxu0 %v3860
      %3879 = vmatprep.subr.bf16.mxu0 0
      %3880 = vmatpush1.bf16.msra.mxu0 %v3861
      %3881 = vmatprep.subr.bf16.mxu0 0
      %3882 = vmatpush1.bf16.msra.mxu0 %v3862
      %3883 = vmatprep.subr.bf16.mxu0 0
      %3884 = vmatpush1.bf16.msra.mxu0 %v3863
      %3885 = vmatprep.subr.bf16.mxu0 0
      %3886 = vmatpush1.bf16.msra.mxu0 %v3864
      %3887 = vmatprep.subr.bf16.mxu0 0
      %3888 = vmatpush1.bf16.msra.mxu0 %v3865
      %3889 = vmatprep.subr.bf16.mxu0 0
      %3890 = vmatpush1.bf16.msra.mxu0 %v3866
      %3891 = vmatprep.subr.bf16.mxu0 0
      %3892 = vmatpush1.bf16.msra.mxu0 0
      %3893 = vmatprep.subr.bf16.mxu0 0
      %3894 = vmatpush1.bf16.msra.mxu0 0
      %3895 = vmatprep.subr.bf16.mxu0 0
      %3896 = vmatpush1.bf16.msra.mxu0 0
      %3897 = vmatprep.subr.bf16.mxu0 0
      %3898 = vmatpush1.bf16.msra.mxu0 0
      %3899 = vmatprep.subr.bf16.mxu0 0
      %3900 = vmatpush1.bf16.msra.mxu0 0
      %3901 = vmatprep.subr.bf16.mxu0 0
      %3902 = vmatpush1.bf16.msra.mxu0 0
      %3903 = vmatprep.subr.bf16.mxu0 0
      %3904 = vmatpush1.bf16.msra.mxu0 0
      %3905 = vmatprep.subr.bf16.mxu0 0
      %3906 = vmatpush1.bf16.msra.mxu0 0
      %3907 = vmatprep.mubr.bf16.mxu0 0
      %3908 = vmatmul.mubr.bf16.gmra.mrb[0].mxu0 %v3809
      %v3909 = vpop.f32.mrb[0].mxu0
      %v3910 = vadd.f32 %v3826, %v3909
      %v3911 = vpop.f32.mrb[0].mxu0
      %v3912 = vpop.f32.mrb[0].mxu0
      %v3913 = vpop.f32.mrb[0].mxu0
      %3914 = vdwg.mxu0
      %vm3915 = vcmask 1040384
      %v3916 = vsel %vm3915, %v3910, -inf
      %3917 = vmax.xlane.f32.xlu0 %v3916
      %v3918 = vpop.xlane.xlu0 %3917
      %v3919 = vrot.slane %v3918, 4
      %v3920 = vmax.f32 %v3918, %v3919
      %v3921 = vrot.slane %v3920, 2
      %v3922 = vmax.f32 %v3920, %v3921
      %v3923 = vrot.slane %v3922, 1
      %v3924 = vmax.f32 %v3922, %v3923
      %s3925 = vtos %v3924
      %v3926 = vstv %s3925
      %vm3927 = vcmp.eq.f32.partialorder %v3910, %v3926
      %v3928 = vsel %vm3927, %v2602, 128
      %v3929 = vsel %vm3915, %v3928, 2147483647
      %v3930 = vand.u32 %v3929, 65535
      %v3931 = vshra.s32 %v3929, 16
      %v3932 = vcvt.s32.f32 %v3930
      %v3933 = vcvt.s32.f32 %v3931
      %3934 = vmin.xlane.f32.xlu0 %v3933
      %v3935 = vpop.xlane.xlu0 %3934
      %vm3936 = vcmp.eq.f32.partialorder %v3933, %v3935
      %v3937 = vsel %vm3936, %v3932, inf
      %3938 = vmin.xlane.f32.xlu0 %v3937
      %v3939 = vpop.xlane.xlu0 %3938
      %v3940 = vcvt.f32.s32 %v3939
      %v3941 = vcvt.f32.s32 %v3935
      %v3942 = vshll.u32 %v3941, 16
      %v3943 = vadd.s32 %v3942, %v3940
      %v3944 = vrot.slane %v3943, 4
      %vm3945 = vcmp.lt.s32.totalorder %v3943, %v3944
      %v3946 = vsel %vm3945, %v3943, %v3944
      %v3947 = vrot.slane %v3946, 2
      %vm3948 = vcmp.lt.s32.totalorder %v3946, %v3947
      %v3949 = vsel %vm3948, %v3946, %v3947
      %v3950 = vrot.slane %v3949, 1
      %vm3951 = vcmp.lt.s32.totalorder %v3949, %v3950
      %v3952 = vsel %vm3951, %v3949, %v3950
      %s3953 = vtos %v3952
      %v3954 = vsub.f32 %v3910, %v3926
      %v3955 = vmul.f32 %v3954, 1.442695
      %v3956 = vpow.pop %v3955
      %v3957 = vsel %vm3915, %v3956, 0.0
      %3958 = vadd.xlane.f32.xlu0 %v3957
      %v3959 = vpop.xlane.xlu0 %3958
      %v3960 = vrcp.pop %v3959
      %s3961 = vtos %v3960
      %s3962 = scalar_lea.smem [#allocation18], %s2607
      %3963 = sst [smem:[%s3962]] %s3953
      %s3964 = scalar_lea.smem [#allocation19], %s2607
      %3965 = sst [smem:[%s3964]] %s3961
    $region94: #{tpu_custom_call.1} parent=1 // loop_footer
      %s2611 = sadd.s32 1, %s2607
    $region95: #{tpu_custom_call.1} parent=1 // loop_footer_branch
      %2606 = sbr.rel target = $region91
    $region96: #{tpu_custom_call.1} parent=1 // loop_exit
      _
    // Predicated region
    $region97: #{tpu_custom_call.1} parent=1 // pred_check
      _
    $region98: #{tpu_custom_call.1} parent=1 // pred_check_branch
      %3967 = sbr.rel (0) target = $region100
    $region99: #{tpu_custom_call.1} parent=1 // pred_region
      %s3969 = ssub.s32 16, 16
      %3970 = vsyncadd [#allocation6], %s3969
      %3973 = dma.smem_to_hbm [#allocation18], 16, %s14, [#allocation6]
    $region100: #{tpu_custom_call.1} parent=1 // pred_fallthru
      _
    // Predicated region
    $region101: #{tpu_custom_call.1} parent=1 // pred_check
      _
    $region102: #{tpu_custom_call.1} parent=1 // pred_check_branch
      %3975 = sbr.rel (0) target = $region104
    $region103: #{tpu_custom_call.1} parent=1 // pred_region
      %s3977 = ssub.s32 16, 16
      %3978 = vsyncadd [#allocation20], %s3977
      %3981 = dma.smem_to_hbm [#allocation19], 16, %s15, [#allocation20]
    $region104: #{tpu_custom_call.1} parent=1 // pred_fallthru
      _
    // Predicated region
    $region105: #{tpu_custom_call.1} parent=1 // pred_check
      _
    $region106: #{tpu_custom_call.1} parent=1 // pred_check_branch
      %3983 = sbr.rel (0) target = $region108
    $region107: #{tpu_custom_call.1} parent=1 // pred_region
      %3984 = dma.done [#allocation6], 16
    $region108: #{tpu_custom_call.1} parent=1 // pred_fallthru
      _
    // Predicated region
    $region109: #{tpu_custom_call.1} parent=1 // pred_check
      _
    $region110: #{tpu_custom_call.1} parent=1 // pred_check_branch
      %3986 = sbr.rel (0) target = $region112
    $region111: #{tpu_custom_call.1} parent=1 // pred_region
      %3987 = dma.done [#allocation20], 16
    $region112: #{tpu_custom_call.1} parent=1 // pred_fallthru
      _
    %3988 = sfence
    %3989 = vsyncpa [#allocation5], 1
    %3990 = vsyncpa [#allocation8], 1
    %3991 = vsyncpa [#allocation11], 1
    %3992 = vsyncpa [#allocation14], 1
    %3993 = vsyncpa [#allocation17], 1
    %3994 = vsyncpa [#allocation6], 1
    %3995 = vsyncpa [#allocation20], 1

</llo_original>
